<compile_context>
chip_gen: v5e
topology: v5e:2x2
jax: 0.10.0
libtpu: 0.0.40
codegen_flags: <defaults>
</compile_context>

<pallas_src>
import functools

import jax
import jax.numpy as jnp
from jax import lax
from jax.experimental import pallas as pl
from jax.experimental.pallas import tpu as pltpu


# ----------------------------------- helpers -----------------------------------

def _round_up(x, m):
    return ((x + m - 1) // m) * m


def _choose_tile(dim, target, align):
    """Tile that is a multiple of `align`; caller zero-pads dim up to a multiple."""
    t = min(target, _round_up(dim, align))
    t = max(align, (t // align) * align)
    return t


def _pick_divisor_tile(dim, target, align):
    """Largest tile <= target that divides dim and is align-aligned, else dim."""
    if dim <= target:
        return dim
    t = (target // align) * align
    while t >= align:
        if dim % t == 0:
            return t
        t -= align
    # TODO(synk): pad the sequence / handle a ragged tail tile instead of a full-dim block.
    return dim


# ----------------------- tiled linear: y = x @ W + b (fp32 acc) -----------------------

def _matmul_bias_kernel_f32(x_ref, w_ref, b_ref, o_ref):
    # fp32 output: accumulate directly into the resident output block (no acc scratch).
    @pl.when(pl.program_id(2) == 0)
    def _():
        o_ref[...] = jnp.broadcast_to(b_ref[...].astype(jnp.float32), o_ref.shape)

    o_ref[...] += jnp.dot(x_ref[...], w_ref[...], preferred_element_type=jnp.float32)


def _matmul_bias_kernel_acc(x_ref, w_ref, b_ref, o_ref, acc_ref):
    @pl.when(pl.program_id(2) == 0)
    def _():
        acc_ref[...] = jnp.broadcast_to(b_ref[...].astype(jnp.float32), acc_ref.shape)

    acc_ref[...] += jnp.dot(x_ref[...], w_ref[...], preferred_element_type=jnp.float32)

    @pl.when(pl.program_id(2) == pl.num_programs(2) - 1)
    def _():
        o_ref[...] = acc_ref[...].astype(o_ref.dtype)


def linear(x, w, b, *, tm=512, tn=512, tk=512, vmem_limit_bytes=32 * 1024 * 1024):
    """x: (M, K), w: (K, N), b: (N,) -> (M, N). Tiled, pipelined, fp32 accumulation.

    Awkward dims are zero-padded to the tile grid (never a silent full-dim block).
    """
    M, K = x.shape
    K2, N = w.shape
    assert K == K2 and b.shape == (N,)

    tm = _choose_tile(M, tm, 8)
    tn = _choose_tile(N, tn, 128)
    tk = _choose_tile(K, tk, 128)
    Mp, Np, Kp = _round_up(M, tm), _round_up(N, tn), _round_up(K, tk)

    if Mp != M or Kp != K:
        x = jnp.pad(x, ((0, Mp - M), (0, Kp - K)))
    if Kp != K or Np != N:
        w = jnp.pad(w, ((0, Kp - K), (0, Np - N)))
    if Np != N:
        b = jnp.pad(b, (0, Np - N))
    b2 = b.reshape(1, Np)

    grid = (Mp // tm, Np // tn, Kp // tk)
    common = dict(
        out_shape=jax.ShapeDtypeStruct((Mp, Np), x.dtype),
        grid=grid,
        in_specs=[
            pl.BlockSpec((tm, tk), lambda i, j, k: (i, k)),
            pl.BlockSpec((tk, tn), lambda i, j, k: (k, j)),
            pl.BlockSpec((1, tn), lambda i, j, k: (0, j)),
        ],
        out_specs=pl.BlockSpec((tm, tn), lambda i, j, k: (i, j)),
        compiler_params=pltpu.CompilerParams(
            dimension_semantics=("parallel", "parallel", "arbitrary"),
            vmem_limit_bytes=vmem_limit_bytes),
    )
    if x.dtype == jnp.float32:
        out = pl.pallas_call(_matmul_bias_kernel_f32, **common)(x, w, b2)
    else:
        out = pl.pallas_call(_matmul_bias_kernel_acc,
                             scratch_shapes=[pltpu.VMEM((tm, tn), jnp.float32)],
                             **common)(x, w, b2)
    if Mp != M or Np != N:
        out = out[:M, :N]
    return out


# ----------------------- fused RoPE + GQA attention kernel -----------------------

def _attn_kernel(q_ref, k_ref, v_ref, mask_ref, cos_ref, sin_ref,
                 o_ref, p_ref, k_rot_ref, *, scaling, n_rep, head_dim, q_tile):
    """One grid step = (batch b, kv-group g, q-tile qi).

    q_ref    : (1, tq, (n_rep+2)*D)  this group's fused projection rows (Q heads first)
    k_ref    : (1, S, D)             this group's K (full sequence, lane-aligned slice)
    v_ref    : (1, S, D)             this group's V
    mask_ref : (1, 1, tq, S)         additive mask tile
    cos_ref  : (1, S, D)             rotary cos
    sin_ref  : (1, S, D)             rotary sin with the rotate-half sign pre-folded
    o_ref    : (1, tq, n_rep*D)      lane-dense output slab for this group's heads
    p_ref    : (1, n_rep, tq, S)     softmax probabilities for this group's heads
    k_rot_ref: (S, D) f32 scratch    RoPE'd K, computed once per (b, g)
    """
    D = head_dim
    half = D // 2
    qi = pl.program_id(2)

    # RoPE(K) once per (batch, kv-head); reused by every q-tile / every query head.
    @pl.when(qi == 0)
    def _():
        k = k_ref[0].astype(jnp.float32)                       # (S, D)
        cos = cos_ref[0].astype(jnp.float32)
        sin_r = sin_ref[0].astype(jnp.float32)                 # sign-folded sin
        k_rot_ref[...] = k * cos + pltpu.roll(k, shift=half, axis=1) * sin_r

    q_start = pl.multiple_of(qi * q_tile, 8)
    cos_q = cos_ref[0, pl.ds(q_start, q_tile), :].astype(jnp.float32)   # (tq, D)
    sin_q = sin_ref[0, pl.ds(q_start, q_tile), :].astype(jnp.float32)   # (tq, D)

    k_rot = k_rot_ref[...]                                     # (S, D) f32
    v = v_ref[0]                                               # (S, D)
    # Reference order is (q k^T + mask) * scaling; fold scaling into Q and the mask.
    mask = mask_ref[0, 0].astype(jnp.float32) * scaling        # (tq, S)

    # TODO(synk): batch the n_rep heads into a single (n_rep*tq, D) matmul.
    for r in range(n_rep):                                     # GQA group (small, unrolled)
        q = q_ref[0, :, pl.ds(r * D, D)].astype(jnp.float32)   # (tq, D) lane slice
        q = (q * cos_q + pltpu.roll(q, shift=half, axis=1) * sin_q) * scaling

        s = lax.dot_general(q, k_rot, (((1,), (1,)), ((), ())),
                            preferred_element_type=jnp.float32)          # (tq, S)
        s = s + mask
        s = s - jnp.max(s, axis=-1, keepdims=True)
        e = jnp.exp(s)
        denom = jnp.sum(e, axis=-1, keepdims=True)
        p = (e * pl.reciprocal(denom, approx=False)).astype(p_ref.dtype)  # (tq, S)

        o = jnp.dot(p.astype(v.dtype), v, preferred_element_type=jnp.float32)

        p_ref[0, r] = p
        o_ref[0, :, pl.ds(r * D, D)] = o.astype(o_ref.dtype)   # lane-dense, 128-aligned


def attention_core(qkv, mask, cos, sin_rot, *, n_heads, n_kv_heads, head_dim, scaling,
                   q_tile=128, weights_dtype=None,
                   vmem_limit_bytes=48 * 1024 * 1024):
    """qkv: (B, S, n_kv*(n_rep+2)*D) group-major fused projection; mask: (B,1,S,S);
    cos/sin_rot: (B, S, D)."""
    B, S, C = qkv.shape
    n_rep = n_heads // n_kv_heads
    D = head_dim
    stride = n_rep + 2
    W = stride * D
    assert C == n_kv_heads * W and mask.shape == (B, 1, S, S)

    tq = _pick_divisor_tile(S, q_tile, 8)
    n_q = S // tq
    if weights_dtype is None:
        weights_dtype = qkv.dtype        # module semantics: attn_weights in q.dtype
        # TODO(synk): emit bf16 (or skip) attn_weights in production to halve the
        #             dominant B*H*S^2 HBM writeback.

    kernel = functools.partial(_attn_kernel, scaling=scaling, n_rep=n_rep,
                               head_dim=D, q_tile=tq)
    out_shape = (
        jax.ShapeDtypeStruct((B, S, n_heads * D), qkv.dtype),
        jax.ShapeDtypeStruct((B, n_heads, S, S), weights_dtype),
    )
    return pl.pallas_call(
        kernel,
        out_shape=out_shape,
        grid=(B, n_kv_heads, n_q),
        in_specs=[
            # this group's q-tile rows (whole group width; Q columns sliced in-kernel)
            pl.BlockSpec((1, tq, W), lambda b, g, qi: (b, qi, g)),
            # this group's K / V columns, full sequence; block index constant in qi
            pl.BlockSpec((1, S, D), lambda b, g, qi: (b, 0, g * stride + n_rep)),
            pl.BlockSpec((1, S, D), lambda b, g, qi: (b, 0, g * stride + n_rep + 1)),
            pl.BlockSpec((1, 1, tq, S), lambda b, g, qi: (b, 0, qi, 0)),
            pl.BlockSpec((1, S, D), lambda b, g, qi: (b, 0, 0)),
            pl.BlockSpec((1, S, D), lambda b, g, qi: (b, 0, 0)),
        ],
        out_specs=(
            pl.BlockSpec((1, tq, n_rep * D), lambda b, g, qi: (b, qi, g)),
            pl.BlockSpec((1, n_rep, tq, S), lambda b, g, qi: (b, g, qi, 0)),
        ),
        scratch_shapes=[pltpu.VMEM((S, D), jnp.float32)],
        compiler_params=pltpu.CompilerParams(
            dimension_semantics=("parallel", "parallel", "arbitrary"),
            vmem_limit_bytes=vmem_limit_bytes),
    )(qkv, qkv, qkv, mask, cos, sin_rot)


# ------------------------------------- forward -------------------------------------

def verify_llama_attention_forward(params, hidden_states, cos, sin, attention_mask,
                                   *, n_heads, n_kv_heads, head_dim):
    B, S, H = hidden_states.shape
    scaling = head_dim ** -0.5
    n_rep = n_heads // n_kv_heads
    half = head_dim // 2

    x2 = hidden_states.reshape(B * S, H)

    # Fused QKV projection (group-major columns): x read from HBM once.
    qkv = linear(x2, params["wqkv"], params["bqkv"])            # (B*S, n_kv*(n_rep+2)*D)
    qkv = qkv.reshape(B, S, n_kv_heads * (n_rep + 2) * head_dim)  # free reshape

    # rotate_half(x)*sin == roll(x, half)*sin_rot  with the sign folded once here.
    sin_rot = jnp.concatenate([-sin[..., :half], sin[..., half:]], axis=-1)

    attn_out, attn_weights = attention_core(
        qkv, attention_mask, cos, sin_rot,
        n_heads=n_heads, n_kv_heads=n_kv_heads, head_dim=head_dim, scaling=scaling)

    # (B, S, n_heads*D) is already the (b, s, h*d) memory order -> free reshape.
    out = linear(attn_out.reshape(B * S, n_heads * head_dim), params["wo"], params["bo"])
    return out.reshape(B, S, -1), attn_weights


def fuse_qkv_group_major(wq, bq, wk, bk, wv, bv, n_heads, n_kv_heads, head_dim):
    """Fuse per-head weights into group-major columns: per kv-group [Q0..Q_{n_rep-1}, K, V]."""
    n_rep = n_heads // n_kv_heads
    D = head_dim
    w_cols, b_cols = [], []
    for g in range(n_kv_heads):
        w_cols += [wq[:, g * n_rep * D:(g + 1) * n_rep * D],
                   wk[:, g * D:(g + 1) * D],
                   wv[:, g * D:(g + 1) * D]]
        b_cols += [bq[g * n_rep * D:(g + 1) * n_rep * D],
                   bk[g * D:(g + 1) * D],
                   bv[g * D:(g + 1) * D]]
    return jnp.concatenate(w_cols, axis=1), jnp.concatenate(b_cols, axis=0)


# --------------------------- pure-JAX reference (for checking) ---------------------------

def _rotate_half(x):
    d = x.shape[-1] // 2
    return jnp.concatenate([-x[..., d:], x[..., :d]], axis=-1)


def _apply_rotary_pos_emb(q, k, cos, sin):
    cos = cos[:, None, :, :]
    sin = sin[:, None, :, :]
    return q * cos + _rotate_half(q) * sin, k * cos + _rotate_half(k) * sin


def _reference_forward(params, hidden_states, cos, sin, attention_mask,
                       *, n_heads, n_kv_heads, head_dim):
    HI = jax.lax.Precision.HIGHEST
    B, S, H = hidden_states.shape
    n_rep = n_heads // n_kv_heads
    scaling = head_dim ** -0.5
    x2 = hidden_states.reshape(B * S, H)
    q = (jnp.dot(x2, params["wq"], precision=HI) + params["bq"]).reshape(
        B, S, n_heads, head_dim).transpose(0, 2, 1, 3)
    k = (jnp.dot(x2, params["wk"], precision=HI) + params["bk"]).reshape(
        B, S, n_kv_heads, head_dim).transpose(0, 2, 1, 3)
    v = (jnp.dot(x2, params["wv"], precision=HI) + params["bv"]).reshape(
        B, S, n_kv_heads, head_dim).transpose(0, 2, 1, 3)
    q, k = _apply_rotary_pos_emb(q, k, cos, sin)
    k = jnp.repeat(k, n_rep, axis=1)
    v = jnp.repeat(v, n_rep, axis=1)
    s = jnp.einsum("bhqd,bhkd->bhqk", q, k, precision=HI)
    s = (s + attention_mask) * scaling
    p = jax.nn.softmax(s.astype(jnp.float32), axis=-1).astype(q.dtype)
    o = jnp.einsum("bhqk,bhkd->bhqd", p, v, precision=HI)
    o = o.transpose(0, 2, 1, 3).reshape(B * S, n_heads * head_dim)
    out = (jnp.dot(o, params["wo"], precision=HI) + params["bo"]).reshape(
        B, S, n_heads * head_dim)
    return out, p


# ------------------------------------- main -------------------------------------

if __name__ == "__main__":
    B, S = 2, 8
    n_heads, n_kv_heads, head_dim = 4, 2, 128   # head_dim=128 = the real Llama head size
    hidden = n_heads * head_dim                 # 512

    key = jax.random.PRNGKey(0)
    ks = jax.random.split(key, 10)

    def w_init(k, shape):
        return (jax.random.normal(k, shape, jnp.float32) * 0.05).astype(jnp.float32)

    wq = w_init(ks[0], (hidden, n_heads * head_dim))
    bq = w_init(ks[1], (n_heads * head_dim,))
    wk = w_init(ks[2], (hidden, n_kv_heads * head_dim))
    bk = w_init(ks[3], (n_kv_heads * head_dim,))
    wv = w_init(ks[4], (hidden, n_kv_heads * head_dim))
    bv = w_init(ks[5], (n_kv_heads * head_dim,))
    wo = w_init(ks[6], (n_heads * head_dim, hidden))
    bo = w_init(ks[7], (hidden,))

    # Pre-fuse QKV weights once outside the step (group-major columns, no per-call copies).
    wqkv, bqkv = fuse_qkv_group_major(wq, bq, wk, bk, wv, bv,
                                      n_heads, n_kv_heads, head_dim)
    params = {"wqkv": wqkv, "bqkv": bqkv, "wo": wo, "bo": bo}

    hidden_states = jax.random.normal(ks[8], (B, S, hidden), jnp.float32)

    # rotary embeddings (standard Llama rope), cos/sin: (B, S, head_dim)
    inv_freq = 1.0 / (10000.0 ** (jnp.arange(0, head_dim, 2, dtype=jnp.float32) / head_dim))
    pos = jnp.arange(S, dtype=jnp.float32)
    angles = pos[:, None] * inv_freq[None, :]               # (S, D/2)
    emb = jnp.concatenate([angles, angles], axis=-1)        # (S, D)
    cos = jnp.broadcast_to(jnp.cos(emb)[None], (B, S, head_dim))
    sin = jnp.broadcast_to(jnp.sin(emb)[None], (B, S, head_dim))

    # additive causal mask (B, 1, S, S)
    i = jnp.arange(S)[:, None]
    j = jnp.arange(S)[None, :]
    causal = jnp.where(j <= i, 0.0, -1e9).astype(jnp.float32)
    attention_mask = jnp.broadcast_to(causal[None, None], (B, 1, S, S))

    fwd = jax.jit(functools.partial(
        verify_llama_attention_forward,
        n_heads=n_heads, n_kv_heads=n_kv_heads, head_dim=head_dim))
    out, attn_weights = fwd(params, hidden_states, cos, sin, attention_mask)
    jax.block_until_ready((out, attn_weights))

    ref_params = {"wq": wq, "bq": bq, "wk": wk, "bk": bk, "wv": wv, "bv": bv,
                  "wo": wo, "bo": bo}
    ref_out, ref_p = _reference_forward(
        ref_params, hidden_states, cos, sin, attention_mask,
        n_heads=n_heads, n_kv_heads=n_kv_heads, head_dim=head_dim)

    assert out.shape == (B, S, hidden) and attn_weights.shape == (B, n_heads, S, S)
    # fp32 end-to-end; tolerance leaves headroom for MXU f32 passes and the folded
    # scaling / bias-first accumulation reassociation (typically agrees to ~1e-5).
    assert jnp.allclose(out, ref_out, atol=1e-3, rtol=1e-3)
    assert jnp.allclose(attn_weights, ref_p, atol=1e-3, rtol=1e-3)

    print("KERNEL_OK")
</pallas_src>

<mosaic_0001>
module attributes {stable_mosaic.version = 11 : i64} {
  func.func @_matmul_bias_kernel_f32(%arg0: i32, %arg1: i32, %arg2: i32, %arg3: memref<16x512xf32, #tpu.memory_space<vmem>>, %arg4: memref<512x512xf32, #tpu.memory_space<vmem>>, %arg5: memref<1x512xf32, #tpu.memory_space<vmem>>, %arg6: memref<16x512xf32, #tpu.memory_space<vmem>>) attributes {dimension_semantics = [#tpu.dimension_semantics<parallel>, #tpu.dimension_semantics<parallel>, #tpu.dimension_semantics<arbitrary>], iteration_bounds = array<i64: 1, 2, 1>, scalar_prefetch = 0 : i64, scratch_operands = 0 : i64, tpu.core_type = #tpu.core_type<tc>, window_params = [{transform_indices = @transform_0, window_bounds = array<i64: 16, 512>}, {transform_indices = @transform_1, window_bounds = array<i64: 512, 512>}, {transform_indices = @transform_2, window_bounds = array<i64: 1, 512>}, {transform_indices = @transform_3, window_bounds = array<i64: 16, 512>}]} {
    %c0_i32 = arith.constant 0 : i32
    %0 = arith.cmpi eq, %arg2, %c0_i32 : i32
    %1 = arith.extui %0 : i1 to i32
    %c0_i32_0 = arith.constant 0 : i32
    %2 = arith.cmpi ne, %1, %c0_i32_0 : i32
    scf.if %2 {
      %c0_8 = arith.constant 0 : index
      %c0_9 = arith.constant 0 : index
      %9 = vector.load %arg5[%c0_8, %c0_9] : memref<1x512xf32, #tpu.memory_space<vmem>>, vector<1x512xf32>
      %10 = vector.shape_cast %9 : vector<1x512xf32> to vector<1x512xf32>
      %11 = vector.broadcast %10 : vector<1x512xf32> to vector<16x512xf32>
      %c0_10 = arith.constant 0 : index
      %c0_11 = arith.constant 0 : index
      %12 = vector.load %arg6[%c0_10, %c0_11] : memref<16x512xf32, #tpu.memory_space<vmem>>, vector<16x512xf32>
      tpu.vector_store %arg6[%c0_10, %c0_11], %11 {strides = array<i32>} : memref<16x512xf32, #tpu.memory_space<vmem>>, vector<16x512xf32>,
    } else {
    }
    %c0 = arith.constant 0 : index
    %c0_1 = arith.constant 0 : index
    %3 = vector.load %arg6[%c0, %c0_1] : memref<16x512xf32, #tpu.memory_space<vmem>>, vector<16x512xf32>
    %c0_2 = arith.constant 0 : index
    %c0_3 = arith.constant 0 : index
    %4 = vector.load %arg3[%c0_2, %c0_3] : memref<16x512xf32, #tpu.memory_space<vmem>>, vector<16x512xf32>
    %c0_4 = arith.constant 0 : index
    %c0_5 = arith.constant 0 : index
    %5 = vector.load %arg4[%c0_4, %c0_5] : memref<512x512xf32, #tpu.memory_space<vmem>>, vector<512x512xf32>
    %cst = arith.constant dense<0.000000e+00> : vector<16x512xf32>
    %6 = tpu.matmul %4, %5, %cst {dimension_numbers = #tpu.dot_dimension_numbers<[1], [0], [0], [1], [0, 0, 1, 1], [], []>} : vector<16x512xf32>, vector<512x512xf32>, vector<16x512xf32> -> vector<16x512xf32>
    %7 = arith.addf %3, %6 : vector<16x512xf32>
    %c0_6 = arith.constant 0 : index
    %c0_7 = arith.constant 0 : index
    %8 = vector.load %arg6[%c0_6, %c0_7] : memref<16x512xf32, #tpu.memory_space<vmem>>, vector<16x512xf32>
    tpu.vector_store %arg6[%c0_6, %c0_7], %7 {strides = array<i32>} : memref<16x512xf32, #tpu.memory_space<vmem>>, vector<16x512xf32>,
    return
  }
  func.func @transform_0(%arg0: i32, %arg1: i32, %arg2: i32) -> (i32, i32) {
    %c0_i32 = arith.constant 0 : i32
    return %arg0, %arg2 : i32, i32
  }
  func.func @transform_1(%arg0: i32, %arg1: i32, %arg2: i32) -> (i32, i32) {
    %c0_i32 = arith.constant 0 : i32
    return %arg2, %arg1 : i32, i32
  }
  func.func @transform_2(%arg0: i32, %arg1: i32, %arg2: i32) -> (i32, i32) {
    %c0_i32 = arith.constant 0 : i32
    %c0_i32_0 = arith.constant 0 : i32
    return %c0_i32, %arg1 : i32, i32
  }
  func.func @transform_3(%arg0: i32, %arg1: i32, %arg2: i32) -> (i32, i32) {
    %c0_i32 = arith.constant 0 : i32
    return %arg0, %arg1 : i32, i32
  }
}

module attributes {stable_mosaic.version = 11 : i64} {
  func.func @_attn_kernel(%arg0: i32, %arg1: i32, %arg2: i32, %arg3: memref<1x8x512xf32, #tpu.memory_space<vmem>>, %arg4: memref<1x8x128xf32, #tpu.memory_space<vmem>>, %arg5: memref<1x8x128xf32, #tpu.memory_space<vmem>>, %arg6: memref<1x1x8x8xf32, #tpu.memory_space<vmem>>, %arg7: memref<1x8x128xf32, #tpu.memory_space<vmem>>, %arg8: memref<1x8x128xf32, #tpu.memory_space<vmem>>, %arg9: memref<1x8x256xf32, #tpu.memory_space<vmem>>, %arg10: memref<1x2x8x8xf32, #tpu.memory_space<vmem>>, %arg11: memref<8x128xf32, #tpu.memory_space<vmem>>) attributes {dimension_semantics = [#tpu.dimension_semantics<parallel>, #tpu.dimension_semantics<parallel>, #tpu.dimension_semantics<arbitrary>], iteration_bounds = array<i64: 2, 2, 1>, scalar_prefetch = 0 : i64, scratch_operands = 1 : i64, tpu.core_type = #tpu.core_type<tc>, window_params = [{transform_indices = @transform_0, window_bounds = array<i64: 1, 8, 512>}, {transform_indices = @transform_1, window_bounds = array<i64: 1, 8, 128>}, {transform_indices = @transform_2, window_bounds = array<i64: 1, 8, 128>}, {transform_indices = @transform_3, window_bounds = array<i64: 1, 1, 8, 8>}, {transform_indices = @transform_4, window_bounds = array<i64: 1, 8, 128>}, {transform_indices = @transform_5, window_bounds = array<i64: 1, 8, 128>}, {transform_indices = @transform_6, window_bounds = array<i64: 1, 8, 256>}, {transform_indices = @transform_7, window_bounds = array<i64: 1, 2, 8, 8>}]} {
    %c0_i32 = arith.constant 0 : i32
    %0 = arith.cmpi eq, %arg2, %c0_i32 : i32
    %1 = arith.extui %0 : i1 to i32
    %c0_i32_0 = arith.constant 0 : i32
    %2 = arith.cmpi ne, %1, %c0_i32_0 : i32
    scf.if %2 {
      %c0_42 = arith.constant 0 : index
      %c0_43 = arith.constant 0 : index
      %c0_44 = arith.constant 0 : index
      %72 = vector.load %arg4[%c0_42, %c0_43, %c0_44] : memref<1x8x128xf32, #tpu.memory_space<vmem>>, vector<1x8x128xf32>
      %73 = vector.shape_cast %72 : vector<1x8x128xf32> to vector<8x128xf32>
      %c0_45 = arith.constant 0 : index
      %c0_46 = arith.constant 0 : index
      %c0_47 = arith.constant 0 : index
      %74 = vector.load %arg7[%c0_45, %c0_46, %c0_47] : memref<1x8x128xf32, #tpu.memory_space<vmem>>, vector<1x8x128xf32>
      %75 = vector.shape_cast %74 : vector<1x8x128xf32> to vector<8x128xf32>
      %c0_48 = arith.constant 0 : index
      %c0_49 = arith.constant 0 : index
      %c0_50 = arith.constant 0 : index
      %76 = vector.load %arg8[%c0_48, %c0_49, %c0_50] : memref<1x8x128xf32, #tpu.memory_space<vmem>>, vector<1x8x128xf32>
      %77 = vector.shape_cast %76 : vector<1x8x128xf32> to vector<8x128xf32>
      %78 = arith.mulf %73, %75 : vector<8x128xf32>
      %c64_i32_51 = arith.constant 64 : i32
      %79 = tpu.dynamic_rotate %73 by %c64_i32_51 dim 1 : vector<8x128xf32>, i32 -> vector<8x128xf32>
      %80 = arith.mulf %79, %77 : vector<8x128xf32>
      %81 = arith.addf %78, %80 : vector<8x128xf32>
      %c0_52 = arith.constant 0 : index
      %c0_53 = arith.constant 0 : index
      %82 = vector.load %arg11[%c0_52, %c0_53] : memref<8x128xf32, #tpu.memory_space<vmem>>, vector<8x128xf32>
      tpu.vector_store %arg11[%c0_52, %c0_53], %81 {strides = array<i32>} : memref<8x128xf32, #tpu.memory_space<vmem>>, vector<8x128xf32>,
    } else {
    }
    %c8_i32 = arith.constant 8 : i32
    %3 = arith.muli %arg2, %c8_i32 : i32
    %4 = tpu.assume_multiple %3, 8 : i32
    %c0 = arith.constant 0 : index
    %5 = arith.index_cast %4 : i32 to index
    %c0_1 = arith.constant 0 : index
    %6 = vector.load %arg7[%c0, %5, %c0_1] : memref<1x8x128xf32, #tpu.memory_space<vmem>>, vector<1x8x128xf32>
    %7 = vector.shape_cast %6 : vector<1x8x128xf32> to vector<8x128xf32>
    %c0_2 = arith.constant 0 : index
    %8 = arith.index_cast %4 : i32 to index
    %c0_3 = arith.constant 0 : index
    %9 = vector.load %arg8[%c0_2, %8, %c0_3] : memref<1x8x128xf32, #tpu.memory_space<vmem>>, vector<1x8x128xf32>
    %10 = vector.shape_cast %9 : vector<1x8x128xf32> to vector<8x128xf32>
    %c0_4 = arith.constant 0 : index
    %c0_5 = arith.constant 0 : index
    %11 = vector.load %arg11[%c0_4, %c0_5] : memref<8x128xf32, #tpu.memory_space<vmem>>, vector<8x128xf32>
    %c0_6 = arith.constant 0 : index
    %c0_7 = arith.constant 0 : index
    %c0_8 = arith.constant 0 : index
    %12 = vector.load %arg5[%c0_6, %c0_7, %c0_8] : memref<1x8x128xf32, #tpu.memory_space<vmem>>, vector<1x8x128xf32>
    %13 = vector.shape_cast %12 : vector<1x8x128xf32> to vector<8x128xf32>
    %c0_9 = arith.constant 0 : index
    %c0_10 = arith.constant 0 : index
    %c0_11 = arith.constant 0 : index
    %c0_12 = arith.constant 0 : index
    %14 = vector.load %arg6[%c0_9, %c0_10, %c0_11, %c0_12] : memref<1x1x8x8xf32, #tpu.memory_space<vmem>>, vector<1x1x8x8xf32>
    %15 = vector.shape_cast %14 : vector<1x1x8x8xf32> to vector<8x8xf32>
    %cst = arith.constant 0.0883883461 : f32
    %16 = vector.broadcast %cst : f32 to vector<8x8xf32>
    %17 = arith.mulf %15, %16 : vector<8x8xf32>
    %c0_13 = arith.constant 0 : index
    %c0_14 = arith.constant 0 : index
    %c0_15 = arith.constant 0 : index
    %18 = vector.load %arg3[%c0_13, %c0_14, %c0_15] : memref<1x8x512xf32, #tpu.memory_space<vmem>>, vector<1x8x128xf32>
    %19 = vector.shape_cast %18 : vector<1x8x128xf32> to vector<8x128xf32>
    %20 = arith.mulf %19, %7 : vector<8x128xf32>
    %c64_i32 = arith.constant 64 : i32
    %21 = tpu.dynamic_rotate %19 by %c64_i32 dim 1 : vector<8x128xf32>, i32 -> vector<8x128xf32>
    %22 = arith.mulf %21, %10 : vector<8x128xf32>
    %23 = arith.addf %20, %22 : vector<8x128xf32>
    %cst_16 = arith.constant 0.0883883461 : f32
    %24 = vector.broadcast %cst_16 : f32 to vector<8x128xf32>
    %25 = arith.mulf %23, %24 : vector<8x128xf32>
    %cst_17 = arith.constant dense<0.000000e+00> : vector<8x8xf32>
    %26 = tpu.matmul %25, %11, %cst_17 {dimension_numbers = #tpu.dot_dimension_numbers<[1], [1], [0], [0], [0, 0, 1, 0], [], []>} : vector<8x128xf32>, vector<8x128xf32>, vector<8x8xf32> -> vector<8x8xf32>
    %27 = arith.addf %26, %17 : vector<8x8xf32>
    %cst_18 = arith.constant dense<0xFF800000> : vector<8xf32>
    %28 = vector.multi_reduction <maximumf>, %27, %cst_18 [1] : vector<8x8xf32> to vector<8xf32>
    %29 = vector.shape_cast %28 : vector<8xf32> to vector<8x1xf32>
    %30 = vector.broadcast %29 : vector<8x1xf32> to vector<8x8xf32>
    %31 = arith.subf %27, %30 : vector<8x8xf32>
    %32 = math.exp %31 : vector<8x8xf32>
    %cst_19 = arith.constant dense<0.000000e+00> : vector<8xf32>
    %33 = vector.multi_reduction <add>, %32, %cst_19 [1] : vector<8x8xf32> to vector<8xf32>
    %34 = vector.shape_cast %33 : vector<8xf32> to vector<8x1xf32>
    %35 = tpu.reciprocal %34 : vector<8x1xf32> -> vector<8x1xf32>
    %36 = vector.broadcast %35 : vector<8x1xf32> to vector<8x8xf32>
    %37 = arith.mulf %32, %36 : vector<8x8xf32>
    %cst_20 = arith.constant dense<0.000000e+00> : vector<8x128xf32>
    %38 = tpu.matmul %37, %13, %cst_20 {dimension_numbers = #tpu.dot_dimension_numbers<[1], [0], [0], [1], [0, 0, 1, 1], [], []>} : vector<8x8xf32>, vector<8x128xf32>, vector<8x128xf32> -> vector<8x128xf32>
    %c0_21 = arith.constant 0 : index
    %c0_22 = arith.constant 0 : index
    %c0_23 = arith.constant 0 : index
    %c0_24 = arith.constant 0 : index
    %39 = vector.load %arg10[%c0_21, %c0_22, %c0_23, %c0_24] : memref<1x2x8x8xf32, #tpu.memory_space<vmem>>, vector<1x1x8x8xf32>
    %40 = vector.shape_cast %39 : vector<1x1x8x8xf32> to vector<8x8xf32>
    %41 = vector.shape_cast %37 : vector<8x8xf32> to vector<1x1x8x8xf32>
    tpu.vector_store %arg10[%c0_21, %c0_22, %c0_23, %c0_24], %41 {strides = array<i32>} : memref<1x2x8x8xf32, #tpu.memory_space<vmem>>, vector<1x1x8x8xf32>,
    %c0_25 = arith.constant 0 : index
    %c0_26 = arith.constant 0 : index
    %c0_27 = arith.constant 0 : index
    %42 = vector.load %arg9[%c0_25, %c0_26, %c0_27] : memref<1x8x256xf32, #tpu.memory_space<vmem>>, vector<1x8x128xf32>
    %43 = vector.shape_cast %42 : vector<1x8x128xf32> to vector<8x128xf32>
    %44 = vector.shape_cast %38 : vector<8x128xf32> to vector<1x8x128xf32>
    tpu.vector_store %arg9[%c0_25, %c0_26, %c0_27], %44 {strides = array<i32>} : memref<1x8x256xf32, #tpu.memory_space<vmem>>, vector<1x8x128xf32>,
    %c0_28 = arith.constant 0 : index
    %c0_29 = arith.constant 0 : index
    %c128 = arith.constant 128 : index
    %45 = vector.load %arg3[%c0_28, %c0_29, %c128] : memref<1x8x512xf32, #tpu.memory_space<vmem>>, vector<1x8x128xf32>
    %46 = vector.shape_cast %45 : vector<1x8x128xf32> to vector<8x128xf32>
    %47 = arith.mulf %46, %7 : vector<8x128xf32>
    %c64_i32_30 = arith.constant 64 : i32
    %48 = tpu.dynamic_rotate %46 by %c64_i32_30 dim 1 : vector<8x128xf32>, i32 -> vector<8x128xf32>
    %49 = arith.mulf %48, %10 : vector<8x128xf32>
    %50 = arith.addf %47, %49 : vector<8x128xf32>
    %cst_31 = arith.constant 0.0883883461 : f32
    %51 = vector.broadcast %cst_31 : f32 to vector<8x128xf32>
    %52 = arith.mulf %50, %51 : vector<8x128xf32>
    %cst_32 = arith.constant dense<0.000000e+00> : vector<8x8xf32>
    %53 = tpu.matmul %52, %11, %cst_32 {dimension_numbers = #tpu.dot_dimension_numbers<[1], [1], [0], [0], [0, 0, 1, 0], [], []>} : vector<8x128xf32>, vector<8x128xf32>, vector<8x8xf32> -> vector<8x8xf32>
    %54 = arith.addf %53, %17 : vector<8x8xf32>
    %cst_33 = arith.constant dense<0xFF800000> : vector<8xf32>
    %55 = vector.multi_reduction <maximumf>, %54, %cst_33 [1] : vector<8x8xf32> to vector<8xf32>
    %56 = vector.shape_cast %55 : vector<8xf32> to vector<8x1xf32>
    %57 = vector.broadcast %56 : vector<8x1xf32> to vector<8x8xf32>
    %58 = arith.subf %54, %57 : vector<8x8xf32>
    %59 = math.exp %58 : vector<8x8xf32>
    %cst_34 = arith.constant dense<0.000000e+00> : vector<8xf32>
    %60 = vector.multi_reduction <add>, %59, %cst_34 [1] : vector<8x8xf32> to vector<8xf32>
    %61 = vector.shape_cast %60 : vector<8xf32> to vector<8x1xf32>
    %62 = tpu.reciprocal %61 : vector<8x1xf32> -> vector<8x1xf32>
    %63 = vector.broadcast %62 : vector<8x1xf32> to vector<8x8xf32>
    %64 = arith.mulf %59, %63 : vector<8x8xf32>
    %cst_35 = arith.constant dense<0.000000e+00> : vector<8x128xf32>
    %65 = tpu.matmul %64, %13, %cst_35 {dimension_numbers = #tpu.dot_dimension_numbers<[1], [0], [0], [1], [0, 0, 1, 1], [], []>} : vector<8x8xf32>, vector<8x128xf32>, vector<8x128xf32> -> vector<8x128xf32>
    %c0_36 = arith.constant 0 : index
    %c1 = arith.constant 1 : index
    %c0_37 = arith.constant 0 : index
    %c0_38 = arith.constant 0 : index
    %66 = vector.load %arg10[%c0_36, %c1, %c0_37, %c0_38] : memref<1x2x8x8xf32, #tpu.memory_space<vmem>>, vector<1x1x8x8xf32>
    %67 = vector.shape_cast %66 : vector<1x1x8x8xf32> to vector<8x8xf32>
    %68 = vector.shape_cast %64 : vector<8x8xf32> to vector<1x1x8x8xf32>
    tpu.vector_store %arg10[%c0_36, %c1, %c0_37, %c0_38], %68 {strides = array<i32>} : memref<1x2x8x8xf32, #tpu.memory_space<vmem>>, vector<1x1x8x8xf32>,
    %c0_39 = arith.constant 0 : index
    %c0_40 = arith.constant 0 : index
    %c128_41 = arith.constant 128 : index
    %69 = vector.load %arg9[%c0_39, %c0_40, %c128_41] : memref<1x8x256xf32, #tpu.memory_space<vmem>>, vector<1x8x128xf32>
    %70 = vector.shape_cast %69 : vector<1x8x128xf32> to vector<8x128xf32>
    %71 = vector.shape_cast %65 : vector<8x128xf32> to vector<1x8x128xf32>
    tpu.vector_store %arg9[%c0_39, %c0_40, %c128_41], %71 {strides = array<i32>} : memref<1x8x256xf32, #tpu.memory_space<vmem>>, vector<1x8x128xf32>,
    return
  }
  func.func @transform_0(%arg0: i32, %arg1: i32, %arg2: i32) -> (i32, i32, i32) {
    %c0_i32 = arith.constant 0 : i32
    return %arg0, %arg2, %arg1 : i32, i32, i32
  }
  func.func @transform_1(%arg0: i32, %arg1: i32, %arg2: i32) -> (i32, i32, i32) {
    %c4_i32 = arith.constant 4 : i32
    %0 = arith.muli %arg1, %c4_i32 : i32
    %c2_i32 = arith.constant 2 : i32
    %1 = arith.addi %0, %c2_i32 : i32
    %c0_i32 = arith.constant 0 : i32
    %c0_i32_0 = arith.constant 0 : i32
    return %arg0, %c0_i32, %1 : i32, i32, i32
  }
  func.func @transform_2(%arg0: i32, %arg1: i32, %arg2: i32) -> (i32, i32, i32) {
    %c4_i32 = arith.constant 4 : i32
    %0 = arith.muli %arg1, %c4_i32 : i32
    %c2_i32 = arith.constant 2 : i32
    %1 = arith.addi %0, %c2_i32 : i32
    %c1_i32 = arith.constant 1 : i32
    %2 = arith.addi %1, %c1_i32 : i32
    %c0_i32 = arith.constant 0 : i32
    %c0_i32_0 = arith.constant 0 : i32
    return %arg0, %c0_i32, %2 : i32, i32, i32
  }
  func.func @transform_3(%arg0: i32, %arg1: i32, %arg2: i32) -> (i32, i32, i32, i32) {
    %c0_i32 = arith.constant 0 : i32
    %c0_i32_0 = arith.constant 0 : i32
    %c0_i32_1 = arith.constant 0 : i32
    return %arg0, %c0_i32, %arg2, %c0_i32_0 : i32, i32, i32, i32
  }
  func.func @transform_4(%arg0: i32, %arg1: i32, %arg2: i32) -> (i32, i32, i32) {
    %c0_i32 = arith.constant 0 : i32
    %c0_i32_0 = arith.constant 0 : i32
    %c0_i32_1 = arith.constant 0 : i32
    return %arg0, %c0_i32, %c0_i32_0 : i32, i32, i32
  }
  func.func @transform_5(%arg0: i32, %arg1: i32, %arg2: i32) -> (i32, i32, i32) {
    %c0_i32 = arith.constant 0 : i32
    %c0_i32_0 = arith.constant 0 : i32
    %c0_i32_1 = arith.constant 0 : i32
    return %arg0, %c0_i32, %c0_i32_0 : i32, i32, i32
  }
  func.func @transform_6(%arg0: i32, %arg1: i32, %arg2: i32) -> (i32, i32, i32) {
    %c0_i32 = arith.constant 0 : i32
    return %arg0, %arg2, %arg1 : i32, i32, i32
  }
  func.func @transform_7(%arg0: i32, %arg1: i32, %arg2: i32) -> (i32, i32, i32, i32) {
    %c0_i32 = arith.constant 0 : i32
    %c0_i32_0 = arith.constant 0 : i32
    return %arg0, %arg1, %arg2, %c0_i32 : i32, i32, i32, i32
  }
}

module attributes {stable_mosaic.version = 11 : i64} {
  func.func @_matmul_bias_kernel_f32(%arg0: i32, %arg1: i32, %arg2: i32, %arg3: memref<16x512xf32, #tpu.memory_space<vmem>>, %arg4: memref<512x512xf32, #tpu.memory_space<vmem>>, %arg5: memref<1x512xf32, #tpu.memory_space<vmem>>, %arg6: memref<16x512xf32, #tpu.memory_space<vmem>>) attributes {dimension_semantics = [#tpu.dimension_semantics<parallel>, #tpu.dimension_semantics<parallel>, #tpu.dimension_semantics<arbitrary>], iteration_bounds = array<i64: 1, 1, 1>, scalar_prefetch = 0 : i64, scratch_operands = 0 : i64, tpu.core_type = #tpu.core_type<tc>, window_params = [{transform_indices = @transform_0, window_bounds = array<i64: 16, 512>}, {transform_indices = @transform_1, window_bounds = array<i64: 512, 512>}, {transform_indices = @transform_2, window_bounds = array<i64: 1, 512>}, {transform_indices = @transform_3, window_bounds = array<i64: 16, 512>}]} {
    %c0_i32 = arith.constant 0 : i32
    %0 = arith.cmpi eq, %arg2, %c0_i32 : i32
    %1 = arith.extui %0 : i1 to i32
    %c0_i32_0 = arith.constant 0 : i32
    %2 = arith.cmpi ne, %1, %c0_i32_0 : i32
    scf.if %2 {
      %c0_8 = arith.constant 0 : index
      %c0_9 = arith.constant 0 : index
      %9 = vector.load %arg5[%c0_8, %c0_9] : memref<1x512xf32, #tpu.memory_space<vmem>>, vector<1x512xf32>
      %10 = vector.shape_cast %9 : vector<1x512xf32> to vector<1x512xf32>
      %11 = vector.broadcast %10 : vector<1x512xf32> to vector<16x512xf32>
      %c0_10 = arith.constant 0 : index
      %c0_11 = arith.constant 0 : index
      %12 = vector.load %arg6[%c0_10, %c0_11] : memref<16x512xf32, #tpu.memory_space<vmem>>, vector<16x512xf32>
      tpu.vector_store %arg6[%c0_10, %c0_11], %11 {strides = array<i32>} : memref<16x512xf32, #tpu.memory_space<vmem>>, vector<16x512xf32>,
    } else {
    }
    %c0 = arith.constant 0 : index
    %c0_1 = arith.constant 0 : index
    %3 = vector.load %arg6[%c0, %c0_1] : memref<16x512xf32, #tpu.memory_space<vmem>>, vector<16x512xf32>
    %c0_2 = arith.constant 0 : index
    %c0_3 = arith.constant 0 : index
    %4 = vector.load %arg3[%c0_2, %c0_3] : memref<16x512xf32, #tpu.memory_space<vmem>>, vector<16x512xf32>
    %c0_4 = arith.constant 0 : index
    %c0_5 = arith.constant 0 : index
    %5 = vector.load %arg4[%c0_4, %c0_5] : memref<512x512xf32, #tpu.memory_space<vmem>>, vector<512x512xf32>
    %cst = arith.constant dense<0.000000e+00> : vector<16x512xf32>
    %6 = tpu.matmul %4, %5, %cst {dimension_numbers = #tpu.dot_dimension_numbers<[1], [0], [0], [1], [0, 0, 1, 1], [], []>} : vector<16x512xf32>, vector<512x512xf32>, vector<16x512xf32> -> vector<16x512xf32>
    %7 = arith.addf %3, %6 : vector<16x512xf32>
    %c0_6 = arith.constant 0 : index
    %c0_7 = arith.constant 0 : index
    %8 = vector.load %arg6[%c0_6, %c0_7] : memref<16x512xf32, #tpu.memory_space<vmem>>, vector<16x512xf32>
    tpu.vector_store %arg6[%c0_6, %c0_7], %7 {strides = array<i32>} : memref<16x512xf32, #tpu.memory_space<vmem>>, vector<16x512xf32>,
    return
  }
  func.func @transform_0(%arg0: i32, %arg1: i32, %arg2: i32) -> (i32, i32) {
    %c0_i32 = arith.constant 0 : i32
    return %arg0, %arg2 : i32, i32
  }
  func.func @transform_1(%arg0: i32, %arg1: i32, %arg2: i32) -> (i32, i32) {
    %c0_i32 = arith.constant 0 : i32
    return %arg2, %arg1 : i32, i32
  }
  func.func @transform_2(%arg0: i32, %arg1: i32, %arg2: i32) -> (i32, i32) {
    %c0_i32 = arith.constant 0 : i32
    %c0_i32_0 = arith.constant 0 : i32
    return %c0_i32, %arg1 : i32, i32
  }
  func.func @transform_3(%arg0: i32, %arg1: i32, %arg2: i32) -> (i32, i32) {
    %c0_i32 = arith.constant 0 : i32
    return %arg0, %arg1 : i32, i32
  }
}

</mosaic_0001>

<llo_original>
// kernel: verify_llama_attention_forward.4
$region0: #{verify_llama_attention_forward.4}
  #allocation0 [shape = 'u32[]', space=smem, size = 0x4, offset = 0x4, fixed_abs, tag = 'smem constant byte address 0x4 - core index']
  #allocation1 [shape = 'u32[72,128]{1,0:T(1,128)}', space=vmem, size = 0x9000, scoped, tag = 'internal scratch']
  #allocation2 [shape = 'f32[8,128]{1,0:T(8,128)}', space=vmem, size = 0x1000, scoped, tag = 'scratch operand']
  %s0 = inlined_call_operand.vmem [shape: f32[2,8,1024], index: 0, kind: input, shape index: {}, may-alias: {0,1,2}]
  %s1 = inlined_call_operand.vmem [shape: f32[2,8,1024], index: 1, kind: input, shape index: {}, may-alias: {0,1,2}]
  %s2 = inlined_call_operand.vmem [shape: f32[2,8,1024], index: 2, kind: input, shape index: {}, may-alias: {0,1,2}]
  %s3 = inlined_call_operand.hbm [shape: f32[2,1,8,8], index: 3, kind: input, shape index: {}]
  %s4 = inlined_call_operand.hbm [shape: f32[2,8,128], index: 4, kind: input, shape index: {}]
  %s5 = inlined_call_operand.vmem [shape: f32[2,8,128], index: 5, kind: input, shape index: {}]
  %s6 = inlined_call_operand.vmem [shape: f32[2,8,512], index: 6, kind: output, shape index: {0}]
  %s7 = inlined_call_operand.hbm [shape: f32[2,4,8,8], index: 7, kind: output, shape index: {1}]
  %8 = xla_tuple %s6, %s7
  %s9 = sld [smem:[#allocation0]]
  $region77: #{verify_llama_attention_forward.4} parent=0
    _
  %s11 = ssub.s32 1, %s9
  %s12 = scalar_select 0, %s11, %s9
  $region1: #{verify_llama_attention_forward.4} parent=0
    #allocation3 [shape = 'u8[8192]{0}', space=vmem, size = 0x2000, scoped, tag = 'input window, operand 3']
    #allocation4 [shape = 's32[2]{0}', space=sflag, size = 0x8, scoped, tag = 'scoped memory for verify_llama_attention_forward.4']
    #allocation5 [shape = 's32[2]{0}', space=sflag, size = 0x8, scoped, tag = 'scoped memory for verify_llama_attention_forward.4']
    #allocation6 [shape = 'u8[8192]{0}', space=vmem, size = 0x2000, scoped, tag = 'input window, operand 4']
    #allocation7 [shape = 's32[2]{0}', space=sflag, size = 0x8, scoped, tag = 'scoped memory for verify_llama_attention_forward.4']
    #allocation8 [shape = 'u8[16384]{0}', space=vmem, size = 0x4000, scoped, tag = 'output window, operand 1']
    %13 = vsyncpa [#allocation4], 0
    %s14 = scalar_lea.sflag [#allocation4], 1
    %15 = vsyncpa %s14, 0
    %16 = vsyncpa [#allocation7], 0
    %s17 = scalar_lea.sflag [#allocation7], 1
    %18 = vsyncpa %s17, 0
    %19 = vsyncpa [#allocation5], 0
    %s20 = scalar_lea.sflag [#allocation5], 1
    %21 = vsyncpa %s20, 0
    loop: start=0, step=1, limit=6
    $region2: #{verify_llama_attention_forward.4} parent=1 // loop_pre_header
      _
    $region3: #{verify_llama_attention_forward.4} parent=1 // loop_header
      %s23 = sphi 0, %s27
      %p24 = scmp.ge.s32.totalorder %s23, 6
      %s30 = sphi 0, %s49
      %s31 = sphi 0, %s45
      %s32 = sphi 0, %s41
      %s33 = sphi 0, %s30
      %s34 = sphi 0, %s31
      %s35 = sphi 0, %s32
      %s36 = sphi 0, %s33
      %s37 = sphi 0, %s34
      %s38 = sphi 0, %s35
      %s56 = sphi 0, %s58
      %s59 = sphi 0, %s56
      %s60 = sphi 0, %s59
      %s76 = sphi 0, %s60
      %s88 = sphi 0, %s90
      %s91 = sphi 0, %s88
      %s92 = sphi 0, %s91
      %s108 = sphi 0, %s92
      %s120 = sphi 0, %s122
      %s123 = sphi 0, %s120
      %s124 = sphi 0, %s123
      %s140 = sphi 0, %s124
      %s148 = sphi 0, %s150
      %s151 = sphi 0, %s148
      %s152 = sphi 0, %s151
      %s168 = sphi 0, %s152
      %s174 = sphi 0, %s176
      %s177 = sphi 0, %s174
      %s178 = sphi 0, %s177
      %s194 = sphi 0, %s178
      %s200 = sphi 0, %s202
      %s203 = sphi 0, %s200
      %s204 = sphi 0, %s203
      %s220 = sphi 0, %s204
      %s230 = sphi 0, %s232
      %s233 = sphi 0, %s230
      %s234 = sphi 0, %s233
      %s250 = sphi 0, %s234
      %s260 = sphi 0, %s262
      %s263 = sphi 0, %s260
      %s264 = sphi 0, %s263
      %s280 = sphi 0, %s264
    $region4: #{verify_llama_attention_forward.4} parent=1 // loop_header_branch
      %26 = sbr.rel (%p24) target = $region8
    $region5: #{verify_llama_attention_forward.4} parent=1 // loop_body
      %s28 = ssub.s32 %s23, 1
      %s29 = ssub.s32 %s23, 2
      %s39 = sadd.s32 1, %s32
      %p40 = scmp.ge.s32.totalorder %s39, 1
      %s41 = scalar_select %p40, 0, %s39
      %s42 = sadd.s32 1, %s31
      %s43 = scalar_select %p40, %s42, %s31
      %p44 = scmp.ge.s32.totalorder %s43, 2
      %s45 = scalar_select %p44, 0, %s43
      %s46 = sadd.s32 1, %s30
      %s47 = scalar_select %p44, %s46, %s30
      %p48 = scmp.ge.s32.totalorder %s47, 2
      %s49 = scalar_select %p48, 0, %s47
      %s50 = ssub.s32 %s30, %s49
      %s51 = ssub.s32 %s32, %s41
      %s52 = sor.u32 %s50, %s51
      %s53 = ssub.s32 %s31, %s45
      %s54 = sor.u32 %s52, %s53
      %p55 = scmp.eq.s32.totalorder %s54, 0
      %s57 = sadd.s32 %s56, 1
      %s58 = scalar_select %p55, %s56, %s57
      %p61 = pneg %p55
      %p62 = scmp.eq.s32.totalorder %s23, 3
      %p63 = por %p61, %p62
      %p64 = scmp.ne.s32.totalorder %s56, %s59
      %p65 = scmp.eq.s32.totalorder %s23, 0
      %p66 = por %p64, %p65
      %p67 = scmp.ne.s32.totalorder %s56, %s59
      %p68 = scmp.eq.s32.totalorder %s28, 3
      %p69 = por %p67, %p68
      %p70 = scmp.ne.s32.totalorder %s59, %s60
      %p71 = scmp.eq.s32.totalorder %s28, 0
      %p72 = por %p70, %p71
      %p73 = scmp.ne.s32.totalorder %s59, %s60
      %p74 = scmp.eq.s32.totalorder %s29, 3
      %p75 = por %p73, %p74
      %p77 = scmp.ne.s32.totalorder %s60, %s76
      %p78 = scmp.eq.s32.totalorder %s29, 0
      %p79 = por %p77, %p78
      %s80 = smul.u32 %s31, 4
      %s81 = sadd.s32 %s80, 2
      %s82 = smul.u32 %s45, 4
      %s83 = sadd.s32 %s82, 2
      %s84 = ssub.s32 %s30, %s49
      %s85 = ssub.s32 %s81, %s83
      %s86 = sor.u32 %s84, %s85
      %p87 = scmp.eq.s32.totalorder %s86, 0
      %s89 = sadd.s32 %s88, 1
      %s90 = scalar_select %p87, %s88, %s89
      %p93 = pneg %p87
      %p94 = scmp.eq.s32.totalorder %s23, 3
      %p95 = por %p93, %p94
      %p96 = scmp.ne.s32.totalorder %s88, %s91
      %p97 = scmp.eq.s32.totalorder %s23, 0
      %p98 = por %p96, %p97
      %p99 = scmp.ne.s32.totalorder %s88, %s91
      %p100 = scmp.eq.s32.totalorder %s28, 3
      %p101 = por %p99, %p100
      %p102 = scmp.ne.s32.totalorder %s91, %s92
      %p103 = scmp.eq.s32.totalorder %s28, 0
      %p104 = por %p102, %p103
      %p105 = scmp.ne.s32.totalorder %s91, %s92
      %p106 = scmp.eq.s32.totalorder %s29, 3
      %p107 = por %p105, %p106
      %p109 = scmp.ne.s32.totalorder %s92, %s108
      %p110 = scmp.eq.s32.totalorder %s29, 0
      %p111 = por %p109, %p110
      %s112 = smul.u32 %s31, 4
      %s113 = sadd.s32 %s112, 3
      %s114 = smul.u32 %s45, 4
      %s115 = sadd.s32 %s114, 3
      %s116 = ssub.s32 %s30, %s49
      %s117 = ssub.s32 %s113, %s115
      %s118 = sor.u32 %s116, %s117
      %p119 = scmp.eq.s32.totalorder %s118, 0
      %s121 = sadd.s32 %s120, 1
      %s122 = scalar_select %p119, %s120, %s121
      %p125 = pneg %p119
      %p126 = scmp.eq.s32.totalorder %s23, 3
      %p127 = por %p125, %p126
      %p128 = scmp.ne.s32.totalorder %s120, %s123
      %p129 = scmp.eq.s32.totalorder %s23, 0
      %p130 = por %p128, %p129
      %p131 = scmp.ne.s32.totalorder %s120, %s123
      %p132 = scmp.eq.s32.totalorder %s28, 3
      %p133 = por %p131, %p132
      %p134 = scmp.ne.s32.totalorder %s123, %s124
      %p135 = scmp.eq.s32.totalorder %s28, 0
      %p136 = por %p134, %p135
      %p137 = scmp.ne.s32.totalorder %s123, %s124
      %p138 = scmp.eq.s32.totalorder %s29, 3
      %p139 = por %p137, %p138
      %p141 = scmp.ne.s32.totalorder %s124, %s140
      %p142 = scmp.eq.s32.totalorder %s29, 0
      %p143 = por %p141, %p142
      %s144 = ssub.s32 %s30, %s49
      %s145 = ssub.s32 %s32, %s41
      %s146 = sor.u32 %s144, %s145
      %p147 = scmp.eq.s32.totalorder %s146, 0
      %s149 = sadd.s32 %s148, 1
      %s150 = scalar_select %p147, %s148, %s149
      %p153 = pneg %p147
      %p154 = scmp.eq.s32.totalorder %s23, 3
      %p155 = por %p153, %p154
      %p156 = scmp.ne.s32.totalorder %s148, %s151
      %p157 = scmp.eq.s32.totalorder %s23, 0
      %p158 = por %p156, %p157
      %p159 = scmp.ne.s32.totalorder %s148, %s151
      %p160 = scmp.eq.s32.totalorder %s28, 3
      %p161 = por %p159, %p160
      %p162 = scmp.ne.s32.totalorder %s151, %s152
      %p163 = scmp.eq.s32.totalorder %s28, 0
      %p164 = por %p162, %p163
      %p165 = scmp.ne.s32.totalorder %s151, %s152
      %p166 = scmp.eq.s32.totalorder %s29, 3
      %p167 = por %p165, %p166
      %p169 = scmp.ne.s32.totalorder %s152, %s168
      %p170 = scmp.eq.s32.totalorder %s29, 0
      %p171 = por %p169, %p170
      %s172 = ssub.s32 %s30, %s49
      %p173 = scmp.eq.s32.totalorder %s172, 0
      %s175 = sadd.s32 %s174, 1
      %s176 = scalar_select %p173, %s174, %s175
      %p179 = pneg %p173
      %p180 = scmp.eq.s32.totalorder %s23, 3
      %p181 = por %p179, %p180
      %p182 = scmp.ne.s32.totalorder %s174, %s177
      %p183 = scmp.eq.s32.totalorder %s23, 0
      %p184 = por %p182, %p183
      %p185 = scmp.ne.s32.totalorder %s174, %s177
      %p186 = scmp.eq.s32.totalorder %s28, 3
      %p187 = por %p185, %p186
      %p188 = scmp.ne.s32.totalorder %s177, %s178
      %p189 = scmp.eq.s32.totalorder %s28, 0
      %p190 = por %p188, %p189
      %p191 = scmp.ne.s32.totalorder %s177, %s178
      %p192 = scmp.eq.s32.totalorder %s29, 3
      %p193 = por %p191, %p192
      %p195 = scmp.ne.s32.totalorder %s178, %s194
      %p196 = scmp.eq.s32.totalorder %s29, 0
      %p197 = por %p195, %p196
      %s198 = ssub.s32 %s30, %s49
      %p199 = scmp.eq.s32.totalorder %s198, 0
      %s201 = sadd.s32 %s200, 1
      %s202 = scalar_select %p199, %s200, %s201
      %p205 = pneg %p199
      %p206 = scmp.eq.s32.totalorder %s23, 3
      %p207 = por %p205, %p206
      %p208 = scmp.ne.s32.totalorder %s200, %s203
      %p209 = scmp.eq.s32.totalorder %s23, 0
      %p210 = por %p208, %p209
      %p211 = scmp.ne.s32.totalorder %s200, %s203
      %p212 = scmp.eq.s32.totalorder %s28, 3
      %p213 = por %p211, %p212
      %p214 = scmp.ne.s32.totalorder %s203, %s204
      %p215 = scmp.eq.s32.totalorder %s28, 0
      %p216 = por %p214, %p215
      %p217 = scmp.ne.s32.totalorder %s203, %s204
      %p218 = scmp.eq.s32.totalorder %s29, 3
      %p219 = por %p217, %p218
      %p221 = scmp.ne.s32.totalorder %s204, %s220
      %p222 = scmp.eq.s32.totalorder %s29, 0
      %p223 = por %p221, %p222
      %s224 = ssub.s32 %s30, %s49
      %s225 = ssub.s32 %s32, %s41
      %s226 = sor.u32 %s224, %s225
      %s227 = ssub.s32 %s31, %s45
      %s228 = sor.u32 %s226, %s227
      %p229 = scmp.eq.s32.totalorder %s228, 0
      %s231 = sadd.s32 %s230, 1
      %s232 = scalar_select %p229, %s230, %s231
      %p235 = pneg %p229
      %p236 = scmp.eq.s32.totalorder %s23, 3
      %p237 = por %p235, %p236
      %p238 = scmp.ne.s32.totalorder %s230, %s233
      %p239 = scmp.eq.s32.totalorder %s23, 0
      %p240 = por %p238, %p239
      %p241 = scmp.ne.s32.totalorder %s230, %s233
      %p242 = scmp.eq.s32.totalorder %s28, 3
      %p243 = por %p241, %p242
      %p244 = scmp.ne.s32.totalorder %s233, %s234
      %p245 = scmp.eq.s32.totalorder %s28, 0
      %p246 = por %p244, %p245
      %p247 = scmp.ne.s32.totalorder %s233, %s234
      %p248 = scmp.eq.s32.totalorder %s29, 3
      %p249 = por %p247, %p248
      %p251 = scmp.ne.s32.totalorder %s234, %s250
      %p252 = scmp.eq.s32.totalorder %s29, 0
      %p253 = por %p251, %p252
      %s254 = ssub.s32 %s30, %s49
      %s255 = ssub.s32 %s31, %s45
      %s256 = sor.u32 %s254, %s255
      %s257 = ssub.s32 %s32, %s41
      %s258 = sor.u32 %s256, %s257
      %p259 = scmp.eq.s32.totalorder %s258, 0
      %s261 = sadd.s32 %s260, 1
      %s262 = scalar_select %p259, %s260, %s261
      %p265 = pneg %p259
      %p266 = scmp.eq.s32.totalorder %s23, 3
      %p267 = por %p265, %p266
      %p268 = scmp.ne.s32.totalorder %s260, %s263
      %p269 = scmp.eq.s32.totalorder %s23, 0
      %p270 = por %p268, %p269
      %p271 = scmp.ne.s32.totalorder %s260, %s263
      %p272 = scmp.eq.s32.totalorder %s28, 3
      %p273 = por %p271, %p272
      %p274 = scmp.ne.s32.totalorder %s263, %s264
      %p275 = scmp.eq.s32.totalorder %s28, 0
      %p276 = por %p274, %p275
      %p277 = scmp.ne.s32.totalorder %s263, %s264
      %p278 = scmp.eq.s32.totalorder %s29, 3
      %p279 = por %p277, %p278
      %p281 = scmp.ne.s32.totalorder %s264, %s280
      %p282 = scmp.eq.s32.totalorder %s29, 0
      %p283 = por %p281, %p282
      %p284 = scmp.le.s32.totalorder 1, %s23
      %p285 = scmp.lt.s32.totalorder %s23, 5
      %p286 = pnand %p284, %p285
      %p287 = pneg %p286
      // Predicated region
      $region9: #{verify_llama_attention_forward.4} parent=5 // pred_check
        _
      $region10: #{verify_llama_attention_forward.4} parent=5 // pred_check_branch
        %289 = sbr.rel (%p286) target = $region12
      $region11: #{verify_llama_attention_forward.4} parent=5 // pred_region
        %s290 = ssub.s32 %s23, 1
      $region12: #{verify_llama_attention_forward.4} parent=5 // pred_fallthru
        _
      %p291 = scmp.lt.s32.totalorder %s23, 4
      // Predicated region
      $region13: #{verify_llama_attention_forward.4} parent=5 // pred_check
        %p292 = pneg %p291
      $region14: #{verify_llama_attention_forward.4} parent=5 // pred_check_branch
        %294 = sbr.rel (%p292) target = $region16
      $region15: #{verify_llama_attention_forward.4} parent=5 // pred_region
        // Predicated region
        $region17: #{verify_llama_attention_forward.4} parent=15 // pred_check
          %p295 = pneg %p66
        $region18: #{verify_llama_attention_forward.4} parent=15 // pred_check_branch
          %297 = sbr.rel (%p295) target = $region20
        $region19: #{verify_llama_attention_forward.4} parent=15 // pred_region
          %s298 = smul.u32 4, %s31
          %p299 = scmp.lt.s32.totalorder %s30, 1
          %s300 = scalar_select %p299, %s30, 1
          %p301 = scmp.lt.s32.totalorder %s32, 0
          %s302 = scalar_select %p301, %s32, 0
          %p303 = scmp.lt.s32.totalorder %s298, 7
          %s304 = scalar_select %p303, %s298, 7
          %s305 = smul.addr %s302, 8
          %s306 = sadd.s32 %s304, %s305
          %s307 = smul.addr %s300, 8
          %s308 = sadd.s32 %s306, %s307
          %s309 = smul.addr %s308, 8
          %s310 = scalar_lea.vmem %s0, %s309
          %s311 = smul.u32 4, %s31
        $region20: #{verify_llama_attention_forward.4} parent=15 // pred_fallthru
          _
        // Predicated region
        $region21: #{verify_llama_attention_forward.4} parent=15 // pred_check
          %p312 = pneg %p98
        $region22: #{verify_llama_attention_forward.4} parent=15 // pred_check_branch
          %314 = sbr.rel (%p312) target = $region24
        $region23: #{verify_llama_attention_forward.4} parent=15 // pred_region
          %s315 = smul.u32 %s31, 4
          %s316 = sadd.s32 %s315, 2
          %p317 = scmp.lt.s32.totalorder %s30, 1
          %s318 = scalar_select %p317, %s30, 1
          %p319 = scmp.lt.s32.totalorder %s316, 7
          %s320 = scalar_select %p319, %s316, 7
          %s321 = smul.addr %s318, 8
          %s322 = sadd.s32 %s320, %s321
          %s323 = smul.addr %s322, 8
          %s324 = scalar_lea.vmem %s1, %s323
          %s325 = smul.u32 %s31, 4
          %s326 = sadd.s32 %s325, 2
        $region24: #{verify_llama_attention_forward.4} parent=15 // pred_fallthru
          _
        // Predicated region
        $region25: #{verify_llama_attention_forward.4} parent=15 // pred_check
          %p327 = pneg %p130
        $region26: #{verify_llama_attention_forward.4} parent=15 // pred_check_branch
          %329 = sbr.rel (%p327) target = $region28
        $region27: #{verify_llama_attention_forward.4} parent=15 // pred_region
          %s330 = smul.u32 %s31, 4
          %s331 = sadd.s32 %s330, 3
          %p332 = scmp.lt.s32.totalorder %s30, 1
          %s333 = scalar_select %p332, %s30, 1
          %p334 = scmp.lt.s32.totalorder %s331, 7
          %s335 = scalar_select %p334, %s331, 7
          %s336 = smul.addr %s333, 8
          %s337 = sadd.s32 %s335, %s336
          %s338 = smul.addr %s337, 8
          %s339 = scalar_lea.vmem %s2, %s338
          %s340 = smul.u32 %s31, 4
          %s341 = sadd.s32 %s340, 3
        $region28: #{verify_llama_attention_forward.4} parent=15 // pred_fallthru
          _
        // Predicated region
        $region29: #{verify_llama_attention_forward.4} parent=15 // pred_check
          %p342 = pneg %p158
        $region30: #{verify_llama_attention_forward.4} parent=15 // pred_check_branch
          %344 = sbr.rel (%p342) target = $region32
        $region31: #{verify_llama_attention_forward.4} parent=15 // pred_region
          %s345 = sand.u32 %s148, 1
          %s346 = scalar_lea.sflag [#allocation4], %s345
          %s347 = sand.u32 %s148, 1
          %s348 = smul.addr %s347, 8
          %s349 = scalar_lea.vmem [#allocation3], %s348
          %351 = vsyncadd %s346, 0
          %s352 = sadd.s32 %s32, %s30
          %s353 = smul.addr %s352, 8
          %s354 = scalar_lea.hbm %s3, %s353
          %s356 = sshll.u32 %s354, 4
          %s357 = int_to_ptr.hbm [resolvable:$true] %s356
          %s358 = sshll.u32 %s349, 4
          %s359 = int_to_ptr.vmem [resolvable:$true] %s358
          %361 = dma.hbm_to_vmem [thread:$0]  %s357, 128, %s359, %s346
        $region32: #{verify_llama_attention_forward.4} parent=15 // pred_fallthru
          _
        // Predicated region
        $region33: #{verify_llama_attention_forward.4} parent=15 // pred_check
          %p362 = pneg %p184
        $region34: #{verify_llama_attention_forward.4} parent=15 // pred_check_branch
          %364 = sbr.rel (%p362) target = $region36
        $region35: #{verify_llama_attention_forward.4} parent=15 // pred_region
          %s365 = sand.u32 %s174, 1
          %s366 = scalar_lea.sflag [#allocation7], %s365
          %s367 = sand.u32 %s174, 1
          %s368 = smul.addr %s367, 8
          %s369 = scalar_lea.vmem [#allocation6], %s368
          %371 = vsyncadd %s366, 0
          %s372 = smul.addr %s30, 8
          %s373 = scalar_lea.hbm %s4, %s372
          %s375 = sshll.u32 %s373, 4
          %s376 = int_to_ptr.hbm [resolvable:$true] %s375
          %s377 = sshll.u32 %s369, 4
          %s378 = int_to_ptr.vmem [resolvable:$true] %s377
          %380 = dma.hbm_to_vmem [thread:$0]  %s376, 128, %s378, %s366
        $region36: #{verify_llama_attention_forward.4} parent=15 // pred_fallthru
          _
        // Predicated region
        $region37: #{verify_llama_attention_forward.4} parent=15 // pred_check
          %p381 = pneg %p210
        $region38: #{verify_llama_attention_forward.4} parent=15 // pred_check_branch
          %383 = sbr.rel (%p381) target = $region40
        $region39: #{verify_llama_attention_forward.4} parent=15 // pred_region
          %p384 = scmp.lt.s32.totalorder %s30, 1
          %s385 = scalar_select %p384, %s30, 1
          %s386 = smul.addr %s385, 8
          %s387 = scalar_lea.vmem %s5, %s386
        $region40: #{verify_llama_attention_forward.4} parent=15 // pred_fallthru
          _
      $region16: #{verify_llama_attention_forward.4} parent=5 // pred_fallthru
        _
      %p388 = scmp.le.s32.totalorder 1, %s23
      %p389 = scmp.lt.s32.totalorder %s23, 5
      %p390 = pnand %p388, %p389
      %p391 = pneg %p390
      // Predicated region
      $region41: #{verify_llama_attention_forward.4} parent=5 // pred_check
        _
      $region42: #{verify_llama_attention_forward.4} parent=5 // pred_check_branch
        %393 = sbr.rel (%p390) target = $region44
      $region43: #{verify_llama_attention_forward.4} parent=5 // pred_region
        %s394 = ssub.s32 %s23, 1
        %s395 = sand.u32 %s151, 1
        %s396 = scalar_lea.sflag [#allocation4], %s395
        %s397 = sand.u32 %s151, 1
        %s398 = smul.addr %s397, 8
        %s399 = scalar_lea.vmem [#allocation3], %s398
        // Predicated region
        $region45: #{verify_llama_attention_forward.4} parent=43 // pred_check
          %p400 = pneg %p164
        $region46: #{verify_llama_attention_forward.4} parent=43 // pred_check_branch
          %402 = sbr.rel (%p400) target = $region48
        $region47: #{verify_llama_attention_forward.4} parent=43 // pred_region
          %404 = dma.done %s396, 128
        $region48: #{verify_llama_attention_forward.4} parent=43 // pred_fallthru
          _
        %s405 = sand.u32 %s177, 1
        %s406 = scalar_lea.sflag [#allocation7], %s405
        %s407 = sand.u32 %s177, 1
        %s408 = smul.addr %s407, 8
        %s409 = scalar_lea.vmem [#allocation6], %s408
        // Predicated region
        $region49: #{verify_llama_attention_forward.4} parent=43 // pred_check
          %p410 = pneg %p190
        $region50: #{verify_llama_attention_forward.4} parent=43 // pred_check_branch
          %412 = sbr.rel (%p410) target = $region52
        $region51: #{verify_llama_attention_forward.4} parent=43 // pred_region
          %414 = dma.done %s406, 128
        $region52: #{verify_llama_attention_forward.4} parent=43 // pred_fallthru
          _
        %s415 = smul.u32 4, %s34
        %p416 = scmp.lt.s32.totalorder %s33, 1
        %s417 = scalar_select %p416, %s33, 1
        %p418 = scmp.lt.s32.totalorder %s35, 0
        %s419 = scalar_select %p418, %s35, 0
        %p420 = scmp.lt.s32.totalorder %s415, 7
        %s421 = scalar_select %p420, %s415, 7
        %s422 = smul.addr %s419, 8
        %s423 = sadd.s32 %s421, %s422
        %s424 = smul.addr %s417, 8
        %s425 = sadd.s32 %s423, %s424
        %s426 = smul.addr %s425, 8
        %s427 = scalar_lea.vmem %s0, %s426
        %p428 = pneg %p72
        %p429 = pneg %p69
        %s430 = smul.u32 %s34, 4
        %s431 = sadd.s32 %s430, 2
        %p432 = scmp.lt.s32.totalorder %s33, 1
        %s433 = scalar_select %p432, %s33, 1
        %p434 = scmp.lt.s32.totalorder %s431, 7
        %s435 = scalar_select %p434, %s431, 7
        %s436 = smul.addr %s433, 8
        %s437 = sadd.s32 %s435, %s436
        %s438 = smul.addr %s437, 8
        %s439 = scalar_lea.vmem %s1, %s438
        %p440 = pneg %p104
        %p441 = pneg %p101
        %s442 = smul.u32 %s34, 4
        %s443 = sadd.s32 %s442, 3
        %p444 = scmp.lt.s32.totalorder %s33, 1
        %s445 = scalar_select %p444, %s33, 1
        %p446 = scmp.lt.s32.totalorder %s443, 7
        %s447 = scalar_select %p446, %s443, 7
        %s448 = smul.addr %s445, 8
        %s449 = sadd.s32 %s447, %s448
        %s450 = smul.addr %s449, 8
        %s451 = scalar_lea.vmem %s2, %s450
        %p452 = pneg %p136
        %p453 = pneg %p133
        %s454 = sand.u32 %s151, 1
        %s455 = scalar_lea.sflag [#allocation4], %s454
        %s456 = sand.u32 %s151, 1
        %s457 = smul.addr %s456, 8
        %s458 = scalar_lea.vmem [#allocation3], %s457
        %p459 = pneg %p164
        %p460 = pneg %p161
        %s461 = sand.u32 %s177, 1
        %s462 = scalar_lea.sflag [#allocation7], %s461
        %s463 = sand.u32 %s177, 1
        %s464 = smul.addr %s463, 8
        %s465 = scalar_lea.vmem [#allocation6], %s464
        %p466 = pneg %p190
        %p467 = pneg %p187
        %p468 = scmp.lt.s32.totalorder %s33, 1
        %s469 = scalar_select %p468, %s33, 1
        %s470 = smul.addr %s469, 8
        %s471 = scalar_lea.vmem %s5, %s470
        %p472 = pneg %p216
        %p473 = pneg %p213
        %p474 = pneg %p246
        %p475 = pneg %p243
        %s476 = smul.u32 2, %s34
        %p477 = scmp.lt.s32.totalorder %s33, 1
        %s478 = scalar_select %p477, %s33, 1
        %p479 = scmp.lt.s32.totalorder %s35, 0
        %s480 = scalar_select %p479, %s35, 0
        %p481 = scmp.lt.s32.totalorder %s476, 3
        %s482 = scalar_select %p481, %s476, 3
        %s483 = smul.addr %s480, 4
        %s484 = sadd.s32 %s482, %s483
        %s485 = smul.addr %s478, 4
        %s486 = sadd.s32 %s484, %s485
        %s487 = smul.addr %s486, 8
        %s488 = scalar_lea.vmem %s6, %s487
        %p489 = pneg %p276
        %p490 = pneg %p273
        %s491 = sand.u32 %s263, 1
        %s492 = scalar_lea.sflag [#allocation5], %s491
        %s493 = sand.u32 %s263, 1
        %s494 = smul.addr %s493, 16
        %s495 = scalar_lea.vmem [#allocation8], %s494
        %s496 = smul.u32 4, %s34
        %p497 = scmp.lt.s32.totalorder %s33, 1
        %s498 = scalar_select %p497, %s33, 1
        %p499 = scmp.lt.s32.totalorder %s35, 0
        %s500 = scalar_select %p499, %s35, 0
        %p501 = scmp.lt.s32.totalorder %s496, 7
        %s502 = scalar_select %p501, %s496, 7
        %s503 = smul.addr %s500, 8
        %s504 = sadd.s32 %s502, %s503
        %s505 = smul.addr %s498, 8
        %s506 = sadd.s32 %s504, %s505
        %s507 = smul.addr %s506, 8
        %s508 = scalar_lea.vmem %s0, %s507
        %s509 = smul.u32 4, %s34
        %s510 = smul.u32 %s34, 4
        %s511 = sadd.s32 %s510, 2
        %p512 = scmp.lt.s32.totalorder %s33, 1
        %s513 = scalar_select %p512, %s33, 1
        %p514 = scmp.lt.s32.totalorder %s511, 7
        %s515 = scalar_select %p514, %s511, 7
        %s516 = smul.addr %s513, 8
        %s517 = sadd.s32 %s515, %s516
        %s518 = smul.addr %s517, 8
        %s519 = scalar_lea.vmem %s1, %s518
        %s520 = smul.u32 %s34, 4
        %s521 = sadd.s32 %s520, 2
        %s522 = smul.u32 %s34, 4
        %s523 = sadd.s32 %s522, 3
        %p524 = scmp.lt.s32.totalorder %s33, 1
        %s525 = scalar_select %p524, %s33, 1
        %p526 = scmp.lt.s32.totalorder %s523, 7
        %s527 = scalar_select %p526, %s523, 7
        %s528 = smul.addr %s525, 8
        %s529 = sadd.s32 %s527, %s528
        %s530 = smul.addr %s529, 8
        %s531 = scalar_lea.vmem %s2, %s530
        %s532 = smul.u32 %s34, 4
        %s533 = sadd.s32 %s532, 3
        %p534 = scmp.lt.s32.totalorder %s33, 1
        %s535 = scalar_select %p534, %s33, 1
        %s536 = smul.addr %s535, 8
        %s537 = scalar_lea.vmem %s5, %s536
        %s538 = smul.u32 2, %s34
        %p539 = scmp.lt.s32.totalorder %s33, 1
        %s540 = scalar_select %p539, %s33, 1
        %p541 = scmp.lt.s32.totalorder %s35, 0
        %s542 = scalar_select %p541, %s35, 0
        %p543 = scmp.lt.s32.totalorder %s538, 3
        %s544 = scalar_select %p543, %s538, 3
        %s545 = smul.addr %s542, 4
        %s546 = sadd.s32 %s544, %s545
        %s547 = smul.addr %s540, 4
        %s548 = sadd.s32 %s546, %s547
        %s549 = smul.addr %s548, 8
        %s550 = scalar_lea.vmem %s6, %s549
        %s551 = smul.u32 2, %s34
        %s552 = smul.u32 2, %s34
        %p553 = scmp.eq.s32.totalorder %s35, 0
        // Predicated region
        $region53: #{verify_llama_attention_forward.4} parent=43 // pred_check
          %p554 = pneg %p553
        $region54: #{verify_llama_attention_forward.4} parent=43 // pred_check_branch
          %556 = sbr.rel (%p554) target = $region56
        $region55: #{verify_llama_attention_forward.4} parent=43 // pred_region
          %v557 = vld [vmem:[%s519] sm:$0xff]
          %v558 = vld [vmem:[%s409] sm:$0xff]
          %v559 = vld [vmem:[%s537] sm:$0xff]
          %v560 = vmul.f32 %v557, %v558
          %561 = vrot.lane.b32.xlu0 %v557, 64
          %v562 = vpop.permute.xlu0 %561
          %v563 = vmul.f32 %v562, %v559
          %v564 = vadd.f32 %v560, %v563
          %565 = vst [vmem:[#allocation2] sm:$0xff] %v564
        $region56: #{verify_llama_attention_forward.4} parent=43 // pred_fallthru
          _
        %s566 = smul.u32 %s35, 8
        %s567 = scalar_lea.vmem %s409, %s566 [#allocation6]
        %v568 = vld [vmem:[%s567] sm:$0xff]
        %s569 = scalar_lea.vmem %s537, %s566
        %v570 = vld [vmem:[%s569] sm:$0xff]
        %v571 = vld [vmem:[#allocation2] sm:$0xff]
        %v572 = vld [vmem:[%s531] sm:$0xff]
        %v573 = vld [vmem:[%s399] sm:$0xff]
        %v574 = vmul.f32 %v573, 0.088388346
        %v575 = vld [vmem:[%s508] sm:$0xff]
        %v576 = vmul.f32 %v575, %v568
        %577 = vrot.lane.b32.xlu0 %v575, 64
        %v578 = vpop.permute.xlu0 %577
        %v579 = vmul.f32 %v578, %v570
        %v580 = vadd.f32 %v576, %v579
        %v581 = vmul.f32 %v580, 0.088388346
        %582 = vmatpush.xpose.msra.mxu0 0.0
        %583 = vmatpush.xpose.msra.mxu0 0.0
        %584 = vmatpush.xpose.msra.mxu0 0.0
        %585 = vmatpush.xpose.msra.mxu0 0.0
        %586 = vmatpush.xpose.msra.mxu0 0.0
        %587 = vmatpush.xpose.msra.mxu0 0.0
        %588 = vmatpush.xpose.msra.mxu0 0.0
        %589 = vmatpush.xpose.msra.mxu0 0.0
        %590 = vmatpush.xpose.msra.mxu0 0.0
        %591 = vmatpush.xpose.msra.mxu0 0.0
        %592 = vmatpush.xpose.msra.mxu0 0.0
        %593 = vmatpush.xpose.msra.mxu0 0.0
        %594 = vmatpush.xpose.msra.mxu0 0.0
        %595 = vmatpush.xpose.msra.mxu0 0.0
        %596 = vmatpush.xpose.msra.mxu0 0.0
        %597 = vmatpush.xpose.msra.mxu0 %v571
        %598 = vmatmul.f32.gmra.mxu0 %v581
        %v599 = vpop.f32.mrf.mxu0
        %v600 = vadd.f32 %v574, %v599
        %601 = vdwg.mxu0
        %vm602 = vcmask 64512
        %v603 = vsel %vm602, %v600, -inf
        %604 = vmax.xlane.f32.xlu0 %v603
        %v605 = vpop.xlane.xlu0 %604
        %v606 = vsub.f32 %v600, %v605
        %v607 = vmul.f32 %v606, 1.442695
        %v608 = vpow.pop %v607
        %v609 = vsel %vm602, %v608, 0.0
        %610 = vadd.xlane.f32.xlu0 %v609
        %v611 = vpop.xlane.xlu0 %610
        %v612 = vrcp.pop %v611
        %v613 = vmul.f32 %v611, %v612
        %v614 = vsub.f32 1.0, %v613
        %v615 = vmul.f32 %v612, %v614
        %v616 = vadd.f32 %v612, %v615
        %vm617 = vweird.f32 %v611
        %vm618 = vweird.f32 %v612
        %vm619 = vmor %vm617, %vm618
        %v620 = vsel %vm619, %v612, %v616
        %v621 = vand.u32 2147483647, %v611
        %vm622 = vcmp.eq.f32.partialorder %v621, 8.507059e+37
        %v623 = vand.u32 %v611, 2147483648
        %v624 = vor.u32 1.1754944e-38, %v623
        %v625 = vsel %vm622, %v624, %v620
        %v626 = vmul.f32 %v608, %v625
        %v628 = vsel %vm602, %v626, 0
        %630 = vmatpush.msra.mxu0 0.0
        %631 = vmatpush.msra.mxu0 0.0
        %632 = vmatpush.msra.mxu0 0.0
        %633 = vmatpush.msra.mxu0 0.0
        %634 = vmatpush.msra.mxu0 0.0
        %635 = vmatpush.msra.mxu0 0.0
        %636 = vmatpush.msra.mxu0 0.0
        %637 = vmatpush.msra.mxu0 0.0
        %638 = vmatpush.msra.mxu0 0.0
        %639 = vmatpush.msra.mxu0 0.0
        %640 = vmatpush.msra.mxu0 0.0
        %641 = vmatpush.msra.mxu0 0.0
        %642 = vmatpush.msra.mxu0 0.0
        %643 = vmatpush.msra.mxu0 0.0
        %644 = vmatpush.msra.mxu0 0.0
        %645 = vmatpush.msra.mxu0 %v572
        %646 = vmatmul.f32.gmra.mxu0 %v628
        %v647 = vpop.f32.mrf.mxu0
        %v648 = vadd.f32 0.0, %v647
        %649 = vdwg.mxu0
        %650 = vst.msk [vmem:[%s495] sm:$0xff] %vm602, %v626
        %651 = vst [vmem:[%s550] sm:$0xff] %v648
        %v652 = vld [vmem:[%s508 + $0x8] sm:$0xff]
        %v653 = vmul.f32 %v652, %v568
        %654 = vrot.lane.b32.xlu0 %v652, 64
        %v655 = vpop.permute.xlu0 %654
        %v656 = vmul.f32 %v655, %v570
        %v657 = vadd.f32 %v653, %v656
        %v658 = vmul.f32 %v657, 0.088388346
        %659 = vmatpush.xpose.msra.mxu0 0.0
        %660 = vmatpush.xpose.msra.mxu0 0.0
        %661 = vmatpush.xpose.msra.mxu0 0.0
        %662 = vmatpush.xpose.msra.mxu0 0.0
        %663 = vmatpush.xpose.msra.mxu0 0.0
        %664 = vmatpush.xpose.msra.mxu0 0.0
        %665 = vmatpush.xpose.msra.mxu0 0.0
        %666 = vmatpush.xpose.msra.mxu0 0.0
        %667 = vmatpush.xpose.msra.mxu0 0.0
        %668 = vmatpush.xpose.msra.mxu0 0.0
        %669 = vmatpush.xpose.msra.mxu0 0.0
        %670 = vmatpush.xpose.msra.mxu0 0.0
        %671 = vmatpush.xpose.msra.mxu0 0.0
        %672 = vmatpush.xpose.msra.mxu0 0.0
        %673 = vmatpush.xpose.msra.mxu0 0.0
        %674 = vmatpush.xpose.msra.mxu0 %v571
        %675 = vmatmul.f32.gmra.mxu0 %v658
        %v676 = vpop.f32.mrf.mxu0
        %v677 = vadd.f32 %v574, %v676
        %678 = vdwg.mxu0
        %v679 = vsel %vm602, %v677, -inf
        %680 = vmax.xlane.f32.xlu0 %v679
        %v681 = vpop.xlane.xlu0 %680
        %v682 = vsub.f32 %v677, %v681
        %v683 = vmul.f32 %v682, 1.442695
        %v684 = vpow.pop %v683
        %v685 = vsel %vm602, %v684, 0.0
        %686 = vadd.xlane.f32.xlu0 %v685
        %v687 = vpop.xlane.xlu0 %686
        %v688 = vrcp.pop %v687
        %v689 = vmul.f32 %v687, %v688
        %v690 = vsub.f32 1.0, %v689
        %v691 = vmul.f32 %v688, %v690
        %v692 = vadd.f32 %v688, %v691
        %vm693 = vweird.f32 %v687
        %vm694 = vweird.f32 %v688
        %vm695 = vmor %vm693, %vm694
        %v696 = vsel %vm695, %v688, %v692
        %v697 = vand.u32 2147483647, %v687
        %vm698 = vcmp.eq.f32.partialorder %v697, 8.507059e+37
        %v699 = vand.u32 %v687, 2147483648
        %v700 = vor.u32 1.1754944e-38, %v699
        %v701 = vsel %vm698, %v700, %v696
        %v702 = vmul.f32 %v684, %v701
        %v704 = vsel %vm602, %v702, 0
        %706 = vmatpush.msra.mxu0 0.0
        %707 = vmatpush.msra.mxu0 0.0
        %708 = vmatpush.msra.mxu0 0.0
        %709 = vmatpush.msra.mxu0 0.0
        %710 = vmatpush.msra.mxu0 0.0
        %711 = vmatpush.msra.mxu0 0.0
        %712 = vmatpush.msra.mxu0 0.0
        %713 = vmatpush.msra.mxu0 0.0
        %714 = vmatpush.msra.mxu0 0.0
        %715 = vmatpush.msra.mxu0 0.0
        %716 = vmatpush.msra.mxu0 0.0
        %717 = vmatpush.msra.mxu0 0.0
        %718 = vmatpush.msra.mxu0 0.0
        %719 = vmatpush.msra.mxu0 0.0
        %720 = vmatpush.msra.mxu0 0.0
        %721 = vmatpush.msra.mxu0 %v572
        %722 = vmatmul.f32.gmra.mxu0 %v704
        %v723 = vpop.f32.mrf.mxu0
        %v724 = vadd.f32 0.0, %v723
        %725 = vdwg.mxu0
        %s726 = scalar_lea.vmem %s495, 8 [#allocation8]
        %727 = vst.msk [vmem:[%s726] sm:$0xff] %vm602, %v702
        %728 = vst [vmem:[%s550 + $0x8] sm:$0xff] %v724
        %s729 = smul.u32 2, %s34
        %p730 = scmp.lt.s32.totalorder %s33, 1
        %s731 = scalar_select %p730, %s33, 1
        %p732 = scmp.lt.s32.totalorder %s35, 0
        %s733 = scalar_select %p732, %s35, 0
        %p734 = scmp.lt.s32.totalorder %s729, 3
        %s735 = scalar_select %p734, %s729, 3
        %s736 = smul.addr %s733, 4
        %s737 = sadd.s32 %s735, %s736
        %s738 = smul.addr %s731, 4
        %s739 = sadd.s32 %s737, %s738
        %s740 = smul.addr %s739, 8
        %s741 = scalar_lea.vmem %s6, %s740
        %s742 = sand.u32 %s263, 1
        %s743 = scalar_lea.sflag [#allocation5], %s742
        %s744 = sand.u32 %s263, 1
        %s745 = smul.addr %s744, 16
        %s746 = scalar_lea.vmem [#allocation8], %s745
        // Predicated region
        $region57: #{verify_llama_attention_forward.4} parent=43 // pred_check
          %p747 = pneg %p243
        $region58: #{verify_llama_attention_forward.4} parent=43 // pred_check_branch
          %749 = sbr.rel (%p747) target = $region60
        $region59: #{verify_llama_attention_forward.4} parent=43 // pred_region
          %s750 = smul.u32 2, %s34
        $region60: #{verify_llama_attention_forward.4} parent=43 // pred_fallthru
          _
        // Predicated region
        $region61: #{verify_llama_attention_forward.4} parent=43 // pred_check
          %p751 = pneg %p273
        $region62: #{verify_llama_attention_forward.4} parent=43 // pred_check_branch
          %753 = sbr.rel (%p751) target = $region64
        $region63: #{verify_llama_attention_forward.4} parent=43 // pred_region
          %s754 = smul.u32 2, %s34
          %756 = vsyncadd %s743, 0
          %s757 = sadd.s32 %s35, %s754
          %s758 = smul.addr %s33, 4
          %s759 = sadd.s32 %s757, %s758
          %s760 = smul.addr %s759, 8
          %s761 = scalar_lea.hbm %s7, %s760
          %s762 = sshll.u32 %s746, 4
          %s763 = int_to_ptr.vmem [resolvable:$true] %s762
          %s764 = sshll.u32 %s761, 4
          %s765 = int_to_ptr.hbm [resolvable:$true] %s764
          %770 = dma.vmem_to_hbm [thread:$0]  %s763, 256, %s765, %s743, 128, 128, 8
        $region64: #{verify_llama_attention_forward.4} parent=43 // pred_fallthru
          _
      $region44: #{verify_llama_attention_forward.4} parent=5 // pred_fallthru
        _
      %p771 = scmp.le.s32.totalorder 2, %s23
      // Predicated region
      $region65: #{verify_llama_attention_forward.4} parent=5 // pred_check
        %p772 = pneg %p771
      $region66: #{verify_llama_attention_forward.4} parent=5 // pred_check_branch
        %774 = sbr.rel (%p772) target = $region68
      $region67: #{verify_llama_attention_forward.4} parent=5 // pred_region
        %s775 = ssub.s32 %s23, 2
        // Predicated region
        $region69: #{verify_llama_attention_forward.4} parent=67 // pred_check
          %p776 = pneg %p249
        $region70: #{verify_llama_attention_forward.4} parent=67 // pred_check_branch
          %778 = sbr.rel (%p776) target = $region72
        $region71: #{verify_llama_attention_forward.4} parent=67 // pred_region
          %s779 = smul.u32 2, %s37
          %p780 = scmp.lt.s32.totalorder %s36, 1
          %s781 = scalar_select %p780, %s36, 1
          %p782 = scmp.lt.s32.totalorder %s38, 0
          %s783 = scalar_select %p782, %s38, 0
          %p784 = scmp.lt.s32.totalorder %s779, 3
          %s785 = scalar_select %p784, %s779, 3
          %s786 = smul.addr %s783, 4
          %s787 = sadd.s32 %s785, %s786
          %s788 = smul.addr %s781, 4
          %s789 = sadd.s32 %s787, %s788
          %s790 = smul.addr %s789, 8
          %s791 = scalar_lea.vmem %s6, %s790
        $region72: #{verify_llama_attention_forward.4} parent=67 // pred_fallthru
          _
        // Predicated region
        $region73: #{verify_llama_attention_forward.4} parent=67 // pred_check
          %p792 = pneg %p279
        $region74: #{verify_llama_attention_forward.4} parent=67 // pred_check_branch
          %794 = sbr.rel (%p792) target = $region76
        $region75: #{verify_llama_attention_forward.4} parent=67 // pred_region
          %s795 = sand.u32 %s264, 1
          %s796 = scalar_lea.sflag [#allocation5], %s795
          %s797 = sand.u32 %s264, 1
          %s798 = smul.addr %s797, 16
          %s799 = scalar_lea.vmem [#allocation8], %s798
          %801 = dma.done %s796, 256
        $region76: #{verify_llama_attention_forward.4} parent=67 // pred_fallthru
          _
      $region68: #{verify_llama_attention_forward.4} parent=5 // pred_fallthru
        _
    $region6: #{verify_llama_attention_forward.4} parent=1 // loop_footer
      %s27 = sadd.s32 1, %s23
    $region7: #{verify_llama_attention_forward.4} parent=1 // loop_footer_branch
      %22 = sbr.rel target = $region3
    $region8: #{verify_llama_attention_forward.4} parent=1 // loop_exit
      _
    %802 = vsyncpa [#allocation4], 1
    %s803 = scalar_lea.sflag [#allocation4], 1
    %804 = vsyncpa %s803, 1
    %805 = vsyncpa [#allocation7], 1
    %s806 = scalar_lea.sflag [#allocation7], 1
    %807 = vsyncpa %s806, 1
    %808 = vsyncpa [#allocation5], 1
    %s809 = scalar_lea.sflag [#allocation5], 1
    %810 = vsyncpa %s809, 1

// kernel: verify_llama_attention_forward.3
$region0: #{verify_llama_attention_forward.3}
  #allocation0 [shape = 'u32[]', space=smem, size = 0x4, offset = 0x4, fixed_abs, tag = 'smem constant byte address 0x4 - core index']
  #allocation1 [shape = 'u32[72,128]{1,0:T(1,128)}', space=vmem, size = 0x9000, scoped, tag = 'internal scratch']
  %s0 = inlined_call_operand.hbm [shape: f32[16,512], index: 0, kind: input, shape index: {}]
  %s1 = inlined_call_operand.hbm [shape: f32[512,1024], index: 1, kind: input, shape index: {}]
  %s2 = inlined_call_operand.hbm [shape: f32[1,1024], index: 2, kind: input, shape index: {}]
  %s3 = inlined_call_operand.vmem [shape: f32[16,1024], index: 3, kind: output, shape index: {}]
  %s4 = sld [smem:[#allocation0]]
  $region80: #{verify_llama_attention_forward.3} parent=0
    _
  %s6 = ssub.s32 1, %s4
  %s7 = scalar_select 0, %s6, %s4
  $region1: #{verify_llama_attention_forward.3} parent=0
    #allocation2 [shape = 'u8[32768]{0}', space=vmem, size = 0x8000, scoped, tag = 'input window, operand 0, single buffered']
    #allocation3 [shape = 's32[2]{0}', space=sflag, size = 0x8, scoped, tag = 'scoped memory for verify_llama_attention_forward.3']
    #allocation4 [shape = 'u8[2097152]{0}', space=vmem, size = 0x200000, scoped, tag = 'input window, operand 1']
    #allocation5 [shape = 's32[2]{0}', space=sflag, size = 0x8, scoped, tag = 'scoped memory for verify_llama_attention_forward.3']
    #allocation6 [shape = 'u8[4096]{0}', space=vmem, size = 0x1000, scoped, tag = 'input window, operand 2']
    #allocation7 [shape = 'u8[65536]{0}', space=vmem, size = 0x10000, scoped, tag = 'output window, operand 0']
    %8 = vsyncpa [#allocation3], 0
    %9 = vsyncpa [#allocation5], 0
    %s10 = scalar_lea.sflag [#allocation5], 1
    %11 = vsyncpa %s10, 0
    loop: start=0, step=1, limit=4
    $region2: #{verify_llama_attention_forward.3} parent=1 // loop_pre_header
      _
    $region3: #{verify_llama_attention_forward.3} parent=1 // loop_header
      %s13 = sphi 0, %s17
      %p14 = scmp.ge.s32.totalorder %s13, 4
      %s20 = sphi 0, %s39
      %s21 = sphi 0, %s35
      %s22 = sphi 0, %s31
      %s23 = sphi 0, %s20
      %s24 = sphi 0, %s21
      %s25 = sphi 0, %s22
      %s26 = sphi 0, %s23
      %s27 = sphi 0, %s24
      %s28 = sphi 0, %s25
      %s44 = sphi 0, %s46
      %s47 = sphi 0, %s44
      %s48 = sphi 0, %s47
      %s64 = sphi 0, %s48
      %s72 = sphi 0, %s74
      %s75 = sphi 0, %s72
      %s76 = sphi 0, %s75
      %s92 = sphi 0, %s76
      %s98 = sphi 0, %s100
      %s101 = sphi 0, %s98
      %s102 = sphi 0, %s101
      %s118 = sphi 0, %s102
      %s126 = sphi 0, %s128
      %s129 = sphi 0, %s126
      %s130 = sphi 0, %s129
      %s146 = sphi 0, %s130
    $region4: #{verify_llama_attention_forward.3} parent=1 // loop_header_branch
      %16 = sbr.rel (%p14) target = $region8
    $region5: #{verify_llama_attention_forward.3} parent=1 // loop_body
      %s18 = ssub.s32 %s13, 1
      %s19 = ssub.s32 %s13, 2
      %s29 = sadd.s32 1, %s22
      %p30 = scmp.ge.s32.totalorder %s29, 1
      %s31 = scalar_select %p30, 0, %s29
      %s32 = sadd.s32 1, %s21
      %s33 = scalar_select %p30, %s32, %s21
      %p34 = scmp.ge.s32.totalorder %s33, 2
      %s35 = scalar_select %p34, 0, %s33
      %s36 = sadd.s32 1, %s20
      %s37 = scalar_select %p34, %s36, %s20
      %p38 = scmp.ge.s32.totalorder %s37, 1
      %s39 = scalar_select %p38, 0, %s37
      %s40 = ssub.s32 %s20, %s39
      %s41 = ssub.s32 %s22, %s31
      %s42 = sor.u32 %s40, %s41
      %p43 = scmp.eq.s32.totalorder %s42, 0
      %s45 = sadd.s32 %s44, 1
      %s46 = scalar_select %p43, %s44, %s45
      %p49 = pneg %p43
      %p50 = scmp.eq.s32.totalorder %s13, 1
      %p51 = por %p49, %p50
      %p52 = scmp.ne.s32.totalorder %s44, %s47
      %p53 = scmp.eq.s32.totalorder %s13, 0
      %p54 = por %p52, %p53
      %p55 = scmp.ne.s32.totalorder %s44, %s47
      %p56 = scmp.eq.s32.totalorder %s18, 1
      %p57 = por %p55, %p56
      %p58 = scmp.ne.s32.totalorder %s47, %s48
      %p59 = scmp.eq.s32.totalorder %s18, 0
      %p60 = por %p58, %p59
      %p61 = scmp.ne.s32.totalorder %s47, %s48
      %p62 = scmp.eq.s32.totalorder %s19, 1
      %p63 = por %p61, %p62
      %p65 = scmp.ne.s32.totalorder %s48, %s64
      %p66 = scmp.eq.s32.totalorder %s19, 0
      %p67 = por %p65, %p66
      %s68 = ssub.s32 %s22, %s31
      %s69 = ssub.s32 %s21, %s35
      %s70 = sor.u32 %s68, %s69
      %p71 = scmp.eq.s32.totalorder %s70, 0
      %s73 = sadd.s32 %s72, 1
      %s74 = scalar_select %p71, %s72, %s73
      %p77 = pneg %p71
      %p78 = scmp.eq.s32.totalorder %s13, 1
      %p79 = por %p77, %p78
      %p80 = scmp.ne.s32.totalorder %s72, %s75
      %p81 = scmp.eq.s32.totalorder %s13, 0
      %p82 = por %p80, %p81
      %p83 = scmp.ne.s32.totalorder %s72, %s75
      %p84 = scmp.eq.s32.totalorder %s18, 1
      %p85 = por %p83, %p84
      %p86 = scmp.ne.s32.totalorder %s75, %s76
      %p87 = scmp.eq.s32.totalorder %s18, 0
      %p88 = por %p86, %p87
      %p89 = scmp.ne.s32.totalorder %s75, %s76
      %p90 = scmp.eq.s32.totalorder %s19, 1
      %p91 = por %p89, %p90
      %p93 = scmp.ne.s32.totalorder %s76, %s92
      %p94 = scmp.eq.s32.totalorder %s19, 0
      %p95 = por %p93, %p94
      %s96 = ssub.s32 %s21, %s35
      %p97 = scmp.eq.s32.totalorder %s96, 0
      %s99 = sadd.s32 %s98, 1
      %s100 = scalar_select %p97, %s98, %s99
      %p103 = pneg %p97
      %p104 = scmp.eq.s32.totalorder %s13, 1
      %p105 = por %p103, %p104
      %p106 = scmp.ne.s32.totalorder %s98, %s101
      %p107 = scmp.eq.s32.totalorder %s13, 0
      %p108 = por %p106, %p107
      %p109 = scmp.ne.s32.totalorder %s98, %s101
      %p110 = scmp.eq.s32.totalorder %s18, 1
      %p111 = por %p109, %p110
      %p112 = scmp.ne.s32.totalorder %s101, %s102
      %p113 = scmp.eq.s32.totalorder %s18, 0
      %p114 = por %p112, %p113
      %p115 = scmp.ne.s32.totalorder %s101, %s102
      %p116 = scmp.eq.s32.totalorder %s19, 1
      %p117 = por %p115, %p116
      %p119 = scmp.ne.s32.totalorder %s102, %s118
      %p120 = scmp.eq.s32.totalorder %s19, 0
      %p121 = por %p119, %p120
      %s122 = ssub.s32 %s20, %s39
      %s123 = ssub.s32 %s21, %s35
      %s124 = sor.u32 %s122, %s123
      %p125 = scmp.eq.s32.totalorder %s124, 0
      %s127 = sadd.s32 %s126, 1
      %s128 = scalar_select %p125, %s126, %s127
      %p131 = pneg %p125
      %p132 = scmp.eq.s32.totalorder %s13, 1
      %p133 = por %p131, %p132
      %p134 = scmp.ne.s32.totalorder %s126, %s129
      %p135 = scmp.eq.s32.totalorder %s13, 0
      %p136 = por %p134, %p135
      %p137 = scmp.ne.s32.totalorder %s126, %s129
      %p138 = scmp.eq.s32.totalorder %s18, 1
      %p139 = por %p137, %p138
      %p140 = scmp.ne.s32.totalorder %s129, %s130
      %p141 = scmp.eq.s32.totalorder %s18, 0
      %p142 = por %p140, %p141
      %p143 = scmp.ne.s32.totalorder %s129, %s130
      %p144 = scmp.eq.s32.totalorder %s19, 1
      %p145 = por %p143, %p144
      %p147 = scmp.ne.s32.totalorder %s130, %s146
      %p148 = scmp.eq.s32.totalorder %s19, 0
      %p149 = por %p147, %p148
      %p150 = scmp.le.s32.totalorder 1, %s13
      %p151 = scmp.lt.s32.totalorder %s13, 3
      %p152 = pnand %p150, %p151
      %p153 = pneg %p152
      // Predicated region
      $region9: #{verify_llama_attention_forward.3} parent=5 // pred_check
        _
      $region10: #{verify_llama_attention_forward.3} parent=5 // pred_check_branch
        %155 = sbr.rel (%p152) target = $region12
      $region11: #{verify_llama_attention_forward.3} parent=5 // pred_region
        %s156 = ssub.s32 %s13, 1
        // Predicated region
        $region13: #{verify_llama_attention_forward.3} parent=11 // pred_check
          %p157 = pneg %p60
        $region14: #{verify_llama_attention_forward.3} parent=11 // pred_check_branch
          %159 = sbr.rel (%p157) target = $region16
        $region15: #{verify_llama_attention_forward.3} parent=11 // pred_region
          %s160 = smul.u32 2, %s23
          %s161 = smul.u32 4, %s25
          %163 = vsyncadd [#allocation3], 0
          %s164 = smul.addr %s160, 4
          %s165 = sadd.s32 %s161, %s164
          %s166 = smul.addr %s165, 8
          %s167 = scalar_lea.hbm %s0, %s166
          %s168 = sshll.u32 %s167, 4
          %s169 = int_to_ptr.hbm [resolvable:$true] %s168
          %s170 = sshll.u32 [#allocation2], 4
          %s171 = int_to_ptr.vmem [resolvable:$true] %s170
          %176 = dma.hbm_to_vmem [thread:$0]  %s169, 1024, %s171, [#allocation3], 512, 512, 32
        $region16: #{verify_llama_attention_forward.3} parent=11 // pred_fallthru
          _
      $region12: #{verify_llama_attention_forward.3} parent=5 // pred_fallthru
        _
      %p177 = scmp.lt.s32.totalorder %s13, 2
      // Predicated region
      $region17: #{verify_llama_attention_forward.3} parent=5 // pred_check
        %p178 = pneg %p177
      $region18: #{verify_llama_attention_forward.3} parent=5 // pred_check_branch
        %180 = sbr.rel (%p178) target = $region20
      $region19: #{verify_llama_attention_forward.3} parent=5 // pred_region
        // Predicated region
        $region21: #{verify_llama_attention_forward.3} parent=19 // pred_check
          %p181 = pneg %p82
        $region22: #{verify_llama_attention_forward.3} parent=19 // pred_check_branch
          %183 = sbr.rel (%p181) target = $region24
        $region23: #{verify_llama_attention_forward.3} parent=19 // pred_region
          %s184 = sand.u32 %s13, 1
          %s185 = scalar_lea.sflag [#allocation5], %s184
          %s186 = sand.u32 %s72, 1
          %s187 = smul.addr %s186, 2048
          %s188 = scalar_lea.vmem [#allocation4], %s187
          %s189 = smul.u32 64, %s22
          %s190 = smul.u32 4, %s21
          %192 = vsyncadd %s185, 0
          %s193 = smul.addr %s189, 8
          %s194 = sadd.s32 %s190, %s193
          %s195 = smul.addr %s194, 8
          %s196 = scalar_lea.hbm %s1, %s195
          %s197 = sshll.u32 %s196, 4
          %s198 = int_to_ptr.hbm [resolvable:$true] %s197
          %s199 = sshll.u32 %s188, 4
          %s200 = int_to_ptr.vmem [resolvable:$true] %s199
          %205 = dma.hbm_to_vmem [thread:$0]  %s198, 32768, %s200, %s185, 1024, 512, 32
        $region24: #{verify_llama_attention_forward.3} parent=19 // pred_fallthru
          _
        // Predicated region
        $region25: #{verify_llama_attention_forward.3} parent=19 // pred_check
          %p206 = pneg %p108
        $region26: #{verify_llama_attention_forward.3} parent=19 // pred_check_branch
          %208 = sbr.rel (%p206) target = $region28
        $region27: #{verify_llama_attention_forward.3} parent=19 // pred_region
          %s209 = sand.u32 %s13, 1
          %s210 = scalar_lea.sflag [#allocation5], %s209
          %s211 = sand.u32 %s98, 1
          %s212 = smul.addr %s211, 4
          %s213 = scalar_lea.vmem [#allocation6], %s212
          %s214 = smul.u32 4, %s21
          %216 = vsyncadd %s210, 0
          %s217 = scalar_lea.hbm %s2, %s214
          %s219 = sshll.u32 %s217, 4
          %s220 = int_to_ptr.hbm [resolvable:$true] %s219
          %s221 = sshll.u32 %s213, 4
          %s222 = int_to_ptr.vmem [resolvable:$true] %s221
          %224 = dma.hbm_to_vmem [thread:$0]  %s220, 64, %s222, %s210
        $region28: #{verify_llama_attention_forward.3} parent=19 // pred_fallthru
          _
      $region20: #{verify_llama_attention_forward.3} parent=5 // pred_fallthru
        _
      %p225 = scmp.le.s32.totalorder 1, %s13
      %p226 = scmp.lt.s32.totalorder %s13, 3
      %p227 = pnand %p225, %p226
      %p228 = pneg %p227
      // Predicated region
      $region29: #{verify_llama_attention_forward.3} parent=5 // pred_check
        _
      $region30: #{verify_llama_attention_forward.3} parent=5 // pred_check_branch
        %230 = sbr.rel (%p227) target = $region32
      $region31: #{verify_llama_attention_forward.3} parent=5 // pred_region
        %s231 = ssub.s32 %s13, 1
        // Predicated region
        $region33: #{verify_llama_attention_forward.3} parent=31 // pred_check
          %p232 = pneg %p60
        $region34: #{verify_llama_attention_forward.3} parent=31 // pred_check_branch
          %234 = sbr.rel (%p232) target = $region36
        $region35: #{verify_llama_attention_forward.3} parent=31 // pred_region
          %236 = dma.done [#allocation3], 1024
        $region36: #{verify_llama_attention_forward.3} parent=31 // pred_fallthru
          _
        %s237 = sand.u32 %s18, 1
        %s238 = scalar_lea.sflag [#allocation5], %s237
        %s239 = sand.u32 %s75, 1
        %s240 = smul.addr %s239, 2048
        %s241 = scalar_lea.vmem [#allocation4], %s240
        // Predicated region
        $region37: #{verify_llama_attention_forward.3} parent=31 // pred_check
          %p242 = pneg %p88
        $region38: #{verify_llama_attention_forward.3} parent=31 // pred_check_branch
          %244 = sbr.rel (%p242) target = $region40
        $region39: #{verify_llama_attention_forward.3} parent=31 // pred_region
          %246 = dma.done %s238, 32768
        $region40: #{verify_llama_attention_forward.3} parent=31 // pred_fallthru
          _
        %s247 = sand.u32 %s18, 1
        %s248 = scalar_lea.sflag [#allocation5], %s247
        %s249 = sand.u32 %s101, 1
        %s250 = smul.addr %s249, 4
        %s251 = scalar_lea.vmem [#allocation6], %s250
        // Predicated region
        $region41: #{verify_llama_attention_forward.3} parent=31 // pred_check
          %p252 = pneg %p114
        $region42: #{verify_llama_attention_forward.3} parent=31 // pred_check_branch
          %254 = sbr.rel (%p252) target = $region44
        $region43: #{verify_llama_attention_forward.3} parent=31 // pred_region
          %256 = dma.done %s248, 64
        $region44: #{verify_llama_attention_forward.3} parent=31 // pred_fallthru
          _
        %p257 = pneg %p60
        %p258 = pneg %p57
        %s259 = sand.u32 %s18, 1
        %s260 = scalar_lea.sflag [#allocation5], %s259
        %s261 = sand.u32 %s75, 1
        %s262 = smul.addr %s261, 2048
        %s263 = scalar_lea.vmem [#allocation4], %s262
        %p264 = pneg %p88
        %p265 = pneg %p85
        %s266 = sand.u32 %s18, 1
        %s267 = scalar_lea.sflag [#allocation5], %s266
        %s268 = sand.u32 %s101, 1
        %s269 = smul.addr %s268, 4
        %s270 = scalar_lea.vmem [#allocation6], %s269
        %p271 = pneg %p114
        %p272 = pneg %p111
        %p273 = pneg %p142
        %p274 = pneg %p139
        %s275 = sand.u32 %s129, 1
        %s276 = sand.u32 %s129, 1
        %s277 = smul.addr %s276, 64
        %s278 = scalar_lea.vmem [#allocation7], %s277
        %s279 = smul.u32 2, %s23
        %s280 = smul.u32 4, %s25
        %s281 = smul.u32 64, %s25
        %s282 = smul.u32 4, %s24
        %s283 = smul.u32 4, %s24
        %s284 = smul.u32 2, %s23
        %s285 = smul.u32 4, %s24
        %p286 = scmp.eq.s32.totalorder %s25, 0
        // Predicated region
        $region45: #{verify_llama_attention_forward.3} parent=31 // pred_check
          %p287 = pneg %p286
        $region46: #{verify_llama_attention_forward.3} parent=31 // pred_check_branch
          %289 = sbr.rel (%p287) target = $region48
        $region47: #{verify_llama_attention_forward.3} parent=31 // pred_region
          %v290 = vld [vmem:[%s251] sm:$0xf]
          %v292 = vperm.slane %v290, 0
          %v293 = vperm.slane %v290, 1
          %v294 = vperm.slane %v290, 2
          %v295 = vperm.slane %v290, 3
          %300 = vst [vmem:[%s278] sm:$0xff] %v292
          %301 = vst [vmem:[%s278 + $0x8] sm:$0xff] %v293
          %302 = vst [vmem:[%s278 + $0x10] sm:$0xff] %v294
          %303 = vst [vmem:[%s278 + $0x18] sm:$0xff] %v295
          %304 = vst [vmem:[%s278 + $0x20] sm:$0xff] %v292
          %305 = vst [vmem:[%s278 + $0x28] sm:$0xff] %v293
          %306 = vst [vmem:[%s278 + $0x30] sm:$0xff] %v294
          %307 = vst [vmem:[%s278 + $0x38] sm:$0xff] %v295
        $region48: #{verify_llama_attention_forward.3} parent=31 // pred_fallthru
          _
        %v308 = vld [vmem:[%s278] sm:$0xff]
        %v309 = vld [vmem:[%s278 + $0x8] sm:$0xff]
        %v310 = vld [vmem:[%s278 + $0x10] sm:$0xff]
        %v311 = vld [vmem:[%s278 + $0x18] sm:$0xff]
        %v312 = vld [vmem:[%s278 + $0x20] sm:$0xff]
        %v313 = vld [vmem:[%s278 + $0x28] sm:$0xff]
        %v314 = vld [vmem:[%s278 + $0x30] sm:$0xff]
        %v315 = vld [vmem:[%s278 + $0x38] sm:$0xff]
        %v316 = vld [vmem:[#allocation2] sm:$0xff]
        %v317 = vld [vmem:[#allocation2 + $0x8] sm:$0xff]
        %v318 = vld [vmem:[#allocation2 + $0x10] sm:$0xff]
        %v319 = vld [vmem:[#allocation2 + $0x18] sm:$0xff]
        %v320 = vld [vmem:[#allocation2 + $0x20] sm:$0xff]
        %v321 = vld [vmem:[#allocation2 + $0x28] sm:$0xff]
        %v322 = vld [vmem:[#allocation2 + $0x30] sm:$0xff]
        %v323 = vld [vmem:[#allocation2 + $0x38] sm:$0xff]
        %v324 = vld [vmem:[%s241] sm:$0xff]
        %v325 = vld [vmem:[%s241 + $0x8] sm:$0xff]
        %v326 = vld [vmem:[%s241 + $0x10] sm:$0xff]
        %v327 = vld [vmem:[%s241 + $0x18] sm:$0xff]
        %v328 = vld [vmem:[%s241 + $0x20] sm:$0xff]
        %v329 = vld [vmem:[%s241 + $0x28] sm:$0xff]
        %v330 = vld [vmem:[%s241 + $0x30] sm:$0xff]
        %v331 = vld [vmem:[%s241 + $0x38] sm:$0xff]
        %v332 = vld [vmem:[%s241 + $0x40] sm:$0xff]
        %v333 = vld [vmem:[%s241 + $0x48] sm:$0xff]
        %v334 = vld [vmem:[%s241 + $0x50] sm:$0xff]
        %v335 = vld [vmem:[%s241 + $0x58] sm:$0xff]
        %v336 = vld [vmem:[%s241 + $0x60] sm:$0xff]
        %v337 = vld [vmem:[%s241 + $0x68] sm:$0xff]
        %v338 = vld [vmem:[%s241 + $0x70] sm:$0xff]
        %v339 = vld [vmem:[%s241 + $0x78] sm:$0xff]
        %v340 = vld [vmem:[%s241 + $0x80] sm:$0xff]
        %v341 = vld [vmem:[%s241 + $0x88] sm:$0xff]
        %v342 = vld [vmem:[%s241 + $0x90] sm:$0xff]
        %v343 = vld [vmem:[%s241 + $0x98] sm:$0xff]
        %v344 = vld [vmem:[%s241 + $0xa0] sm:$0xff]
        %v345 = vld [vmem:[%s241 + $0xa8] sm:$0xff]
        %v346 = vld [vmem:[%s241 + $0xb0] sm:$0xff]
        %v347 = vld [vmem:[%s241 + $0xb8] sm:$0xff]
        %v348 = vld [vmem:[%s241 + $0xc0] sm:$0xff]
        %v349 = vld [vmem:[%s241 + $0xc8] sm:$0xff]
        %v350 = vld [vmem:[%s241 + $0xd0] sm:$0xff]
        %v351 = vld [vmem:[%s241 + $0xd8] sm:$0xff]
        %v352 = vld [vmem:[%s241 + $0xe0] sm:$0xff]
        %v353 = vld [vmem:[%s241 + $0xe8] sm:$0xff]
        %v354 = vld [vmem:[%s241 + $0xf0] sm:$0xff]
        %v355 = vld [vmem:[%s241 + $0xf8] sm:$0xff]
        %v356 = vld [vmem:[%s241 + $0x100] sm:$0xff]
        %v357 = vld [vmem:[%s241 + $0x108] sm:$0xff]
        %v358 = vld [vmem:[%s241 + $0x110] sm:$0xff]
        %v359 = vld [vmem:[%s241 + $0x118] sm:$0xff]
        %v360 = vld [vmem:[%s241 + $0x120] sm:$0xff]
        %v361 = vld [vmem:[%s241 + $0x128] sm:$0xff]
        %v362 = vld [vmem:[%s241 + $0x130] sm:$0xff]
        %v363 = vld [vmem:[%s241 + $0x138] sm:$0xff]
        %v364 = vld [vmem:[%s241 + $0x140] sm:$0xff]
        %v365 = vld [vmem:[%s241 + $0x148] sm:$0xff]
        %v366 = vld [vmem:[%s241 + $0x150] sm:$0xff]
        %v367 = vld [vmem:[%s241 + $0x158] sm:$0xff]
        %v368 = vld [vmem:[%s241 + $0x160] sm:$0xff]
        %v369 = vld [vmem:[%s241 + $0x168] sm:$0xff]
        %v370 = vld [vmem:[%s241 + $0x170] sm:$0xff]
        %v371 = vld [vmem:[%s241 + $0x178] sm:$0xff]
        %v372 = vld [vmem:[%s241 + $0x180] sm:$0xff]
        %v373 = vld [vmem:[%s241 + $0x188] sm:$0xff]
        %v374 = vld [vmem:[%s241 + $0x190] sm:$0xff]
        %v375 = vld [vmem:[%s241 + $0x198] sm:$0xff]
        %v376 = vld [vmem:[%s241 + $0x1a0] sm:$0xff]
        %v377 = vld [vmem:[%s241 + $0x1a8] sm:$0xff]
        %v378 = vld [vmem:[%s241 + $0x1b0] sm:$0xff]
        %v379 = vld [vmem:[%s241 + $0x1b8] sm:$0xff]
        %v380 = vld [vmem:[%s241 + $0x1c0] sm:$0xff]
        %v381 = vld [vmem:[%s241 + $0x1c8] sm:$0xff]
        %v382 = vld [vmem:[%s241 + $0x1d0] sm:$0xff]
        %v383 = vld [vmem:[%s241 + $0x1d8] sm:$0xff]
        %v384 = vld [vmem:[%s241 + $0x1e0] sm:$0xff]
        %v385 = vld [vmem:[%s241 + $0x1e8] sm:$0xff]
        %v386 = vld [vmem:[%s241 + $0x1f0] sm:$0xff]
        %v387 = vld [vmem:[%s241 + $0x1f8] sm:$0xff]
        %v388 = vld [vmem:[%s241 + $0x200] sm:$0xff]
        %v389 = vld [vmem:[%s241 + $0x208] sm:$0xff]
        %v390 = vld [vmem:[%s241 + $0x210] sm:$0xff]
        %v391 = vld [vmem:[%s241 + $0x218] sm:$0xff]
        %v392 = vld [vmem:[%s241 + $0x220] sm:$0xff]
        %v393 = vld [vmem:[%s241 + $0x228] sm:$0xff]
        %v394 = vld [vmem:[%s241 + $0x230] sm:$0xff]
        %v395 = vld [vmem:[%s241 + $0x238] sm:$0xff]
        %v396 = vld [vmem:[%s241 + $0x240] sm:$0xff]
        %v397 = vld [vmem:[%s241 + $0x248] sm:$0xff]
        %v398 = vld [vmem:[%s241 + $0x250] sm:$0xff]
        %v399 = vld [vmem:[%s241 + $0x258] sm:$0xff]
        %v400 = vld [vmem:[%s241 + $0x260] sm:$0xff]
        %v401 = vld [vmem:[%s241 + $0x268] sm:$0xff]
        %v402 = vld [vmem:[%s241 + $0x270] sm:$0xff]
        %v403 = vld [vmem:[%s241 + $0x278] sm:$0xff]
        %v404 = vld [vmem:[%s241 + $0x280] sm:$0xff]
        %v405 = vld [vmem:[%s241 + $0x288] sm:$0xff]
        %v406 = vld [vmem:[%s241 + $0x290] sm:$0xff]
        %v407 = vld [vmem:[%s241 + $0x298] sm:$0xff]
        %v408 = vld [vmem:[%s241 + $0x2a0] sm:$0xff]
        %v409 = vld [vmem:[%s241 + $0x2a8] sm:$0xff]
        %v410 = vld [vmem:[%s241 + $0x2b0] sm:$0xff]
        %v411 = vld [vmem:[%s241 + $0x2b8] sm:$0xff]
        %v412 = vld [vmem:[%s241 + $0x2c0] sm:$0xff]
        %v413 = vld [vmem:[%s241 + $0x2c8] sm:$0xff]
        %v414 = vld [vmem:[%s241 + $0x2d0] sm:$0xff]
        %v415 = vld [vmem:[%s241 + $0x2d8] sm:$0xff]
        %v416 = vld [vmem:[%s241 + $0x2e0] sm:$0xff]
        %v417 = vld [vmem:[%s241 + $0x2e8] sm:$0xff]
        %v418 = vld [vmem:[%s241 + $0x2f0] sm:$0xff]
        %v419 = vld [vmem:[%s241 + $0x2f8] sm:$0xff]
        %v420 = vld [vmem:[%s241 + $0x300] sm:$0xff]
        %v421 = vld [vmem:[%s241 + $0x308] sm:$0xff]
        %v422 = vld [vmem:[%s241 + $0x310] sm:$0xff]
        %v423 = vld [vmem:[%s241 + $0x318] sm:$0xff]
        %v424 = vld [vmem:[%s241 + $0x320] sm:$0xff]
        %v425 = vld [vmem:[%s241 + $0x328] sm:$0xff]
        %v426 = vld [vmem:[%s241 + $0x330] sm:$0xff]
        %v427 = vld [vmem:[%s241 + $0x338] sm:$0xff]
        %v428 = vld [vmem:[%s241 + $0x340] sm:$0xff]
        %v429 = vld [vmem:[%s241 + $0x348] sm:$0xff]
        %v430 = vld [vmem:[%s241 + $0x350] sm:$0xff]
        %v431 = vld [vmem:[%s241 + $0x358] sm:$0xff]
        %v432 = vld [vmem:[%s241 + $0x360] sm:$0xff]
        %v433 = vld [vmem:[%s241 + $0x368] sm:$0xff]
        %v434 = vld [vmem:[%s241 + $0x370] sm:$0xff]
        %v435 = vld [vmem:[%s241 + $0x378] sm:$0xff]
        %v436 = vld [vmem:[%s241 + $0x380] sm:$0xff]
        %v437 = vld [vmem:[%s241 + $0x388] sm:$0xff]
        %v438 = vld [vmem:[%s241 + $0x390] sm:$0xff]
        %v439 = vld [vmem:[%s241 + $0x398] sm:$0xff]
        %v440 = vld [vmem:[%s241 + $0x3a0] sm:$0xff]
        %v441 = vld [vmem:[%s241 + $0x3a8] sm:$0xff]
        %v442 = vld [vmem:[%s241 + $0x3b0] sm:$0xff]
        %v443 = vld [vmem:[%s241 + $0x3b8] sm:$0xff]
        %v444 = vld [vmem:[%s241 + $0x3c0] sm:$0xff]
        %v445 = vld [vmem:[%s241 + $0x3c8] sm:$0xff]
        %v446 = vld [vmem:[%s241 + $0x3d0] sm:$0xff]
        %v447 = vld [vmem:[%s241 + $0x3d8] sm:$0xff]
        %v448 = vld [vmem:[%s241 + $0x3e0] sm:$0xff]
        %v449 = vld [vmem:[%s241 + $0x3e8] sm:$0xff]
        %v450 = vld [vmem:[%s241 + $0x3f0] sm:$0xff]
        %v451 = vld [vmem:[%s241 + $0x3f8] sm:$0xff]
        %v452 = vld [vmem:[%s241 + $0x400] sm:$0xff]
        %v453 = vld [vmem:[%s241 + $0x408] sm:$0xff]
        %v454 = vld [vmem:[%s241 + $0x410] sm:$0xff]
        %v455 = vld [vmem:[%s241 + $0x418] sm:$0xff]
        %v456 = vld [vmem:[%s241 + $0x420] sm:$0xff]
        %v457 = vld [vmem:[%s241 + $0x428] sm:$0xff]
        %v458 = vld [vmem:[%s241 + $0x430] sm:$0xff]
        %v459 = vld [vmem:[%s241 + $0x438] sm:$0xff]
        %v460 = vld [vmem:[%s241 + $0x440] sm:$0xff]
        %v461 = vld [vmem:[%s241 + $0x448] sm:$0xff]
        %v462 = vld [vmem:[%s241 + $0x450] sm:$0xff]
        %v463 = vld [vmem:[%s241 + $0x458] sm:$0xff]
        %v464 = vld [vmem:[%s241 + $0x460] sm:$0xff]
        %v465 = vld [vmem:[%s241 + $0x468] sm:$0xff]
        %v466 = vld [vmem:[%s241 + $0x470] sm:$0xff]
        %v467 = vld [vmem:[%s241 + $0x478] sm:$0xff]
        %v468 = vld [vmem:[%s241 + $0x480] sm:$0xff]
        %v469 = vld [vmem:[%s241 + $0x488] sm:$0xff]
        %v470 = vld [vmem:[%s241 + $0x490] sm:$0xff]
        %v471 = vld [vmem:[%s241 + $0x498] sm:$0xff]
        %v472 = vld [vmem:[%s241 + $0x4a0] sm:$0xff]
        %v473 = vld [vmem:[%s241 + $0x4a8] sm:$0xff]
        %v474 = vld [vmem:[%s241 + $0x4b0] sm:$0xff]
        %v475 = vld [vmem:[%s241 + $0x4b8] sm:$0xff]
        %v476 = vld [vmem:[%s241 + $0x4c0] sm:$0xff]
        %v477 = vld [vmem:[%s241 + $0x4c8] sm:$0xff]
        %v478 = vld [vmem:[%s241 + $0x4d0] sm:$0xff]
        %v479 = vld [vmem:[%s241 + $0x4d8] sm:$0xff]
        %v480 = vld [vmem:[%s241 + $0x4e0] sm:$0xff]
        %v481 = vld [vmem:[%s241 + $0x4e8] sm:$0xff]
        %v482 = vld [vmem:[%s241 + $0x4f0] sm:$0xff]
        %v483 = vld [vmem:[%s241 + $0x4f8] sm:$0xff]
        %v484 = vld [vmem:[%s241 + $0x500] sm:$0xff]
        %v485 = vld [vmem:[%s241 + $0x508] sm:$0xff]
        %v486 = vld [vmem:[%s241 + $0x510] sm:$0xff]
        %v487 = vld [vmem:[%s241 + $0x518] sm:$0xff]
        %v488 = vld [vmem:[%s241 + $0x520] sm:$0xff]
        %v489 = vld [vmem:[%s241 + $0x528] sm:$0xff]
        %v490 = vld [vmem:[%s241 + $0x530] sm:$0xff]
        %v491 = vld [vmem:[%s241 + $0x538] sm:$0xff]
        %v492 = vld [vmem:[%s241 + $0x540] sm:$0xff]
        %v493 = vld [vmem:[%s241 + $0x548] sm:$0xff]
        %v494 = vld [vmem:[%s241 + $0x550] sm:$0xff]
        %v495 = vld [vmem:[%s241 + $0x558] sm:$0xff]
        %v496 = vld [vmem:[%s241 + $0x560] sm:$0xff]
        %v497 = vld [vmem:[%s241 + $0x568] sm:$0xff]
        %v498 = vld [vmem:[%s241 + $0x570] sm:$0xff]
        %v499 = vld [vmem:[%s241 + $0x578] sm:$0xff]
        %v500 = vld [vmem:[%s241 + $0x580] sm:$0xff]
        %v501 = vld [vmem:[%s241 + $0x588] sm:$0xff]
        %v502 = vld [vmem:[%s241 + $0x590] sm:$0xff]
        %v503 = vld [vmem:[%s241 + $0x598] sm:$0xff]
        %v504 = vld [vmem:[%s241 + $0x5a0] sm:$0xff]
        %v505 = vld [vmem:[%s241 + $0x5a8] sm:$0xff]
        %v506 = vld [vmem:[%s241 + $0x5b0] sm:$0xff]
        %v507 = vld [vmem:[%s241 + $0x5b8] sm:$0xff]
        %v508 = vld [vmem:[%s241 + $0x5c0] sm:$0xff]
        %v509 = vld [vmem:[%s241 + $0x5c8] sm:$0xff]
        %v510 = vld [vmem:[%s241 + $0x5d0] sm:$0xff]
        %v511 = vld [vmem:[%s241 + $0x5d8] sm:$0xff]
        %v512 = vld [vmem:[%s241 + $0x5e0] sm:$0xff]
        %v513 = vld [vmem:[%s241 + $0x5e8] sm:$0xff]
        %v514 = vld [vmem:[%s241 + $0x5f0] sm:$0xff]
        %v515 = vld [vmem:[%s241 + $0x5f8] sm:$0xff]
        %v516 = vld [vmem:[%s241 + $0x600] sm:$0xff]
        %v517 = vld [vmem:[%s241 + $0x608] sm:$0xff]
        %v518 = vld [vmem:[%s241 + $0x610] sm:$0xff]
        %v519 = vld [vmem:[%s241 + $0x618] sm:$0xff]
        %v520 = vld [vmem:[%s241 + $0x620] sm:$0xff]
        %v521 = vld [vmem:[%s241 + $0x628] sm:$0xff]
        %v522 = vld [vmem:[%s241 + $0x630] sm:$0xff]
        %v523 = vld [vmem:[%s241 + $0x638] sm:$0xff]
        %v524 = vld [vmem:[%s241 + $0x640] sm:$0xff]
        %v525 = vld [vmem:[%s241 + $0x648] sm:$0xff]
        %v526 = vld [vmem:[%s241 + $0x650] sm:$0xff]
        %v527 = vld [vmem:[%s241 + $0x658] sm:$0xff]
        %v528 = vld [vmem:[%s241 + $0x660] sm:$0xff]
        %v529 = vld [vmem:[%s241 + $0x668] sm:$0xff]
        %v530 = vld [vmem:[%s241 + $0x670] sm:$0xff]
        %v531 = vld [vmem:[%s241 + $0x678] sm:$0xff]
        %v532 = vld [vmem:[%s241 + $0x680] sm:$0xff]
        %v533 = vld [vmem:[%s241 + $0x688] sm:$0xff]
        %v534 = vld [vmem:[%s241 + $0x690] sm:$0xff]
        %v535 = vld [vmem:[%s241 + $0x698] sm:$0xff]
        %v536 = vld [vmem:[%s241 + $0x6a0] sm:$0xff]
        %v537 = vld [vmem:[%s241 + $0x6a8] sm:$0xff]
        %v538 = vld [vmem:[%s241 + $0x6b0] sm:$0xff]
        %v539 = vld [vmem:[%s241 + $0x6b8] sm:$0xff]
        %v540 = vld [vmem:[%s241 + $0x6c0] sm:$0xff]
        %v541 = vld [vmem:[%s241 + $0x6c8] sm:$0xff]
        %v542 = vld [vmem:[%s241 + $0x6d0] sm:$0xff]
        %v543 = vld [vmem:[%s241 + $0x6d8] sm:$0xff]
        %v544 = vld [vmem:[%s241 + $0x6e0] sm:$0xff]
        %v545 = vld [vmem:[%s241 + $0x6e8] sm:$0xff]
        %v546 = vld [vmem:[%s241 + $0x6f0] sm:$0xff]
        %v547 = vld [vmem:[%s241 + $0x6f8] sm:$0xff]
        %v548 = vld [vmem:[%s241 + $0x700] sm:$0xff]
        %v549 = vld [vmem:[%s241 + $0x708] sm:$0xff]
        %v550 = vld [vmem:[%s241 + $0x710] sm:$0xff]
        %v551 = vld [vmem:[%s241 + $0x718] sm:$0xff]
        %v552 = vld [vmem:[%s241 + $0x720] sm:$0xff]
        %v553 = vld [vmem:[%s241 + $0x728] sm:$0xff]
        %v554 = vld [vmem:[%s241 + $0x730] sm:$0xff]
        %v555 = vld [vmem:[%s241 + $0x738] sm:$0xff]
        %v556 = vld [vmem:[%s241 + $0x740] sm:$0xff]
        %v557 = vld [vmem:[%s241 + $0x748] sm:$0xff]
        %v558 = vld [vmem:[%s241 + $0x750] sm:$0xff]
        %v559 = vld [vmem:[%s241 + $0x758] sm:$0xff]
        %v560 = vld [vmem:[%s241 + $0x760] sm:$0xff]
        %v561 = vld [vmem:[%s241 + $0x768] sm:$0xff]
        %v562 = vld [vmem:[%s241 + $0x770] sm:$0xff]
        %v563 = vld [vmem:[%s241 + $0x778] sm:$0xff]
        %v564 = vld [vmem:[%s241 + $0x780] sm:$0xff]
        %v565 = vld [vmem:[%s241 + $0x788] sm:$0xff]
        %v566 = vld [vmem:[%s241 + $0x790] sm:$0xff]
        %v567 = vld [vmem:[%s241 + $0x798] sm:$0xff]
        %v568 = vld [vmem:[%s241 + $0x7a0] sm:$0xff]
        %v569 = vld [vmem:[%s241 + $0x7a8] sm:$0xff]
        %v570 = vld [vmem:[%s241 + $0x7b0] sm:$0xff]
        %v571 = vld [vmem:[%s241 + $0x7b8] sm:$0xff]
        %v572 = vld [vmem:[%s241 + $0x7c0] sm:$0xff]
        %v573 = vld [vmem:[%s241 + $0x7c8] sm:$0xff]
        %v574 = vld [vmem:[%s241 + $0x7d0] sm:$0xff]
        %v575 = vld [vmem:[%s241 + $0x7d8] sm:$0xff]
        %v576 = vld [vmem:[%s241 + $0x7e0] sm:$0xff]
        %v577 = vld [vmem:[%s241 + $0x7e8] sm:$0xff]
        %v578 = vld [vmem:[%s241 + $0x7f0] sm:$0xff]
        %v579 = vld [vmem:[%s241 + $0x7f8] sm:$0xff]
        %580 = vmatpush.msra.mxu0 %v384
        %581 = vmatpush.msra.mxu0 %v380
        %582 = vmatpush.msra.mxu0 %v376
        %583 = vmatpush.msra.mxu0 %v372
        %584 = vmatpush.msra.mxu0 %v368
        %585 = vmatpush.msra.mxu0 %v364
        %586 = vmatpush.msra.mxu0 %v360
        %587 = vmatpush.msra.mxu0 %v356
        %588 = vmatpush.msra.mxu0 %v352
        %589 = vmatpush.msra.mxu0 %v348
        %590 = vmatpush.msra.mxu0 %v344
        %591 = vmatpush.msra.mxu0 %v340
        %592 = vmatpush.msra.mxu0 %v336
        %593 = vmatpush.msra.mxu0 %v332
        %594 = vmatpush.msra.mxu0 %v328
        %595 = vmatpush.msra.mxu0 %v324
        %596 = vmatmul.f32.gmra.mxu0 %v316
        %v597 = vpop.f32.mrf.mxu0
        %v598 = vadd.f32 0.0, %v597
        %599 = vmatmul.f32.gmra.mxu0 %v320
        %v600 = vpop.f32.mrf.mxu0
        %v601 = vadd.f32 0.0, %v600
        %602 = vdwg.mxu0
        %603 = vmatpush.msra.mxu0 %v448
        %604 = vmatpush.msra.mxu0 %v444
        %605 = vmatpush.msra.mxu0 %v440
        %606 = vmatpush.msra.mxu0 %v436
        %607 = vmatpush.msra.mxu0 %v432
        %608 = vmatpush.msra.mxu0 %v428
        %609 = vmatpush.msra.mxu0 %v424
        %610 = vmatpush.msra.mxu0 %v420
        %611 = vmatpush.msra.mxu0 %v416
        %612 = vmatpush.msra.mxu0 %v412
        %613 = vmatpush.msra.mxu0 %v408
        %614 = vmatpush.msra.mxu0 %v404
        %615 = vmatpush.msra.mxu0 %v400
        %616 = vmatpush.msra.mxu0 %v396
        %617 = vmatpush.msra.mxu0 %v392
        %618 = vmatpush.msra.mxu0 %v388
        %619 = vmatmul.f32.gmra.mxu0 %v317
        %v620 = vpop.f32.mrf.mxu0
        %v621 = vadd.f32 %v598, %v620
        %622 = vmatmul.f32.gmra.mxu0 %v321
        %v623 = vpop.f32.mrf.mxu0
        %v624 = vadd.f32 %v601, %v623
        %625 = vdwg.mxu0
        %626 = vmatpush.msra.mxu0 %v512
        %627 = vmatpush.msra.mxu0 %v508
        %628 = vmatpush.msra.mxu0 %v504
        %629 = vmatpush.msra.mxu0 %v500
        %630 = vmatpush.msra.mxu0 %v496
        %631 = vmatpush.msra.mxu0 %v492
        %632 = vmatpush.msra.mxu0 %v488
        %633 = vmatpush.msra.mxu0 %v484
        %634 = vmatpush.msra.mxu0 %v480
        %635 = vmatpush.msra.mxu0 %v476
        %636 = vmatpush.msra.mxu0 %v472
        %637 = vmatpush.msra.mxu0 %v468
        %638 = vmatpush.msra.mxu0 %v464
        %639 = vmatpush.msra.mxu0 %v460
        %640 = vmatpush.msra.mxu0 %v456
        %641 = vmatpush.msra.mxu0 %v452
        %642 = vmatmul.f32.gmra.mxu0 %v318
        %v643 = vpop.f32.mrf.mxu0
        %v644 = vadd.f32 %v621, %v643
        %645 = vmatmul.f32.gmra.mxu0 %v322
        %v646 = vpop.f32.mrf.mxu0
        %v647 = vadd.f32 %v624, %v646
        %648 = vdwg.mxu0
        %649 = vmatpush.msra.mxu0 %v576
        %650 = vmatpush.msra.mxu0 %v572
        %651 = vmatpush.msra.mxu0 %v568
        %652 = vmatpush.msra.mxu0 %v564
        %653 = vmatpush.msra.mxu0 %v560
        %654 = vmatpush.msra.mxu0 %v556
        %655 = vmatpush.msra.mxu0 %v552
        %656 = vmatpush.msra.mxu0 %v548
        %657 = vmatpush.msra.mxu0 %v544
        %658 = vmatpush.msra.mxu0 %v540
        %659 = vmatpush.msra.mxu0 %v536
        %660 = vmatpush.msra.mxu0 %v532
        %661 = vmatpush.msra.mxu0 %v528
        %662 = vmatpush.msra.mxu0 %v524
        %663 = vmatpush.msra.mxu0 %v520
        %664 = vmatpush.msra.mxu0 %v516
        %665 = vmatmul.f32.gmra.mxu0 %v319
        %v666 = vpop.f32.mrf.mxu0
        %v667 = vadd.f32 %v644, %v666
        %668 = vmatmul.f32.gmra.mxu0 %v323
        %v669 = vpop.f32.mrf.mxu0
        %v670 = vadd.f32 %v647, %v669
        %671 = vdwg.mxu0
        %672 = vmatpush.msra.mxu0 %v385
        %673 = vmatpush.msra.mxu0 %v381
        %674 = vmatpush.msra.mxu0 %v377
        %675 = vmatpush.msra.mxu0 %v373
        %676 = vmatpush.msra.mxu0 %v369
        %677 = vmatpush.msra.mxu0 %v365
        %678 = vmatpush.msra.mxu0 %v361
        %679 = vmatpush.msra.mxu0 %v357
        %680 = vmatpush.msra.mxu0 %v353
        %681 = vmatpush.msra.mxu0 %v349
        %682 = vmatpush.msra.mxu0 %v345
        %683 = vmatpush.msra.mxu0 %v341
        %684 = vmatpush.msra.mxu0 %v337
        %685 = vmatpush.msra.mxu0 %v333
        %686 = vmatpush.msra.mxu0 %v329
        %687 = vmatpush.msra.mxu0 %v325
        %688 = vmatmul.f32.gmra.mxu0 %v316
        %v689 = vpop.f32.mrf.mxu0
        %v690 = vadd.f32 0.0, %v689
        %691 = vmatmul.f32.gmra.mxu0 %v320
        %v692 = vpop.f32.mrf.mxu0
        %v693 = vadd.f32 0.0, %v692
        %694 = vdwg.mxu0
        %695 = vmatpush.msra.mxu0 %v449
        %696 = vmatpush.msra.mxu0 %v445
        %697 = vmatpush.msra.mxu0 %v441
        %698 = vmatpush.msra.mxu0 %v437
        %699 = vmatpush.msra.mxu0 %v433
        %700 = vmatpush.msra.mxu0 %v429
        %701 = vmatpush.msra.mxu0 %v425
        %702 = vmatpush.msra.mxu0 %v421
        %703 = vmatpush.msra.mxu0 %v417
        %704 = vmatpush.msra.mxu0 %v413
        %705 = vmatpush.msra.mxu0 %v409
        %706 = vmatpush.msra.mxu0 %v405
        %707 = vmatpush.msra.mxu0 %v401
        %708 = vmatpush.msra.mxu0 %v397
        %709 = vmatpush.msra.mxu0 %v393
        %710 = vmatpush.msra.mxu0 %v389
        %711 = vmatmul.f32.gmra.mxu0 %v317
        %v712 = vpop.f32.mrf.mxu0
        %v713 = vadd.f32 %v690, %v712
        %714 = vmatmul.f32.gmra.mxu0 %v321
        %v715 = vpop.f32.mrf.mxu0
        %v716 = vadd.f32 %v693, %v715
        %717 = vdwg.mxu0
        %718 = vmatpush.msra.mxu0 %v513
        %719 = vmatpush.msra.mxu0 %v509
        %720 = vmatpush.msra.mxu0 %v505
        %721 = vmatpush.msra.mxu0 %v501
        %722 = vmatpush.msra.mxu0 %v497
        %723 = vmatpush.msra.mxu0 %v493
        %724 = vmatpush.msra.mxu0 %v489
        %725 = vmatpush.msra.mxu0 %v485
        %726 = vmatpush.msra.mxu0 %v481
        %727 = vmatpush.msra.mxu0 %v477
        %728 = vmatpush.msra.mxu0 %v473
        %729 = vmatpush.msra.mxu0 %v469
        %730 = vmatpush.msra.mxu0 %v465
        %731 = vmatpush.msra.mxu0 %v461
        %732 = vmatpush.msra.mxu0 %v457
        %733 = vmatpush.msra.mxu0 %v453
        %734 = vmatmul.f32.gmra.mxu0 %v318
        %v735 = vpop.f32.mrf.mxu0
        %v736 = vadd.f32 %v713, %v735
        %737 = vmatmul.f32.gmra.mxu0 %v322
        %v738 = vpop.f32.mrf.mxu0
        %v739 = vadd.f32 %v716, %v738
        %740 = vdwg.mxu0
        %741 = vmatpush.msra.mxu0 %v577
        %742 = vmatpush.msra.mxu0 %v573
        %743 = vmatpush.msra.mxu0 %v569
        %744 = vmatpush.msra.mxu0 %v565
        %745 = vmatpush.msra.mxu0 %v561
        %746 = vmatpush.msra.mxu0 %v557
        %747 = vmatpush.msra.mxu0 %v553
        %748 = vmatpush.msra.mxu0 %v549
        %749 = vmatpush.msra.mxu0 %v545
        %750 = vmatpush.msra.mxu0 %v541
        %751 = vmatpush.msra.mxu0 %v537
        %752 = vmatpush.msra.mxu0 %v533
        %753 = vmatpush.msra.mxu0 %v529
        %754 = vmatpush.msra.mxu0 %v525
        %755 = vmatpush.msra.mxu0 %v521
        %756 = vmatpush.msra.mxu0 %v517
        %757 = vmatmul.f32.gmra.mxu0 %v319
        %v758 = vpop.f32.mrf.mxu0
        %v759 = vadd.f32 %v736, %v758
        %760 = vmatmul.f32.gmra.mxu0 %v323
        %v761 = vpop.f32.mrf.mxu0
        %v762 = vadd.f32 %v739, %v761
        %763 = vdwg.mxu0
        %764 = vmatpush.msra.mxu0 %v386
        %765 = vmatpush.msra.mxu0 %v382
        %766 = vmatpush.msra.mxu0 %v378
        %767 = vmatpush.msra.mxu0 %v374
        %768 = vmatpush.msra.mxu0 %v370
        %769 = vmatpush.msra.mxu0 %v366
        %770 = vmatpush.msra.mxu0 %v362
        %771 = vmatpush.msra.mxu0 %v358
        %772 = vmatpush.msra.mxu0 %v354
        %773 = vmatpush.msra.mxu0 %v350
        %774 = vmatpush.msra.mxu0 %v346
        %775 = vmatpush.msra.mxu0 %v342
        %776 = vmatpush.msra.mxu0 %v338
        %777 = vmatpush.msra.mxu0 %v334
        %778 = vmatpush.msra.mxu0 %v330
        %779 = vmatpush.msra.mxu0 %v326
        %780 = vmatmul.f32.gmra.mxu0 %v316
        %v781 = vpop.f32.mrf.mxu0
        %v782 = vadd.f32 0.0, %v781
        %783 = vmatmul.f32.gmra.mxu0 %v320
        %v784 = vpop.f32.mrf.mxu0
        %v785 = vadd.f32 0.0, %v784
        %786 = vdwg.mxu0
        %787 = vmatpush.msra.mxu0 %v450
        %788 = vmatpush.msra.mxu0 %v446
        %789 = vmatpush.msra.mxu0 %v442
        %790 = vmatpush.msra.mxu0 %v438
        %791 = vmatpush.msra.mxu0 %v434
        %792 = vmatpush.msra.mxu0 %v430
        %793 = vmatpush.msra.mxu0 %v426
        %794 = vmatpush.msra.mxu0 %v422
        %795 = vmatpush.msra.mxu0 %v418
        %796 = vmatpush.msra.mxu0 %v414
        %797 = vmatpush.msra.mxu0 %v410
        %798 = vmatpush.msra.mxu0 %v406
        %799 = vmatpush.msra.mxu0 %v402
        %800 = vmatpush.msra.mxu0 %v398
        %801 = vmatpush.msra.mxu0 %v394
        %802 = vmatpush.msra.mxu0 %v390
        %803 = vmatmul.f32.gmra.mxu0 %v317
        %v804 = vpop.f32.mrf.mxu0
        %v805 = vadd.f32 %v782, %v804
        %806 = vmatmul.f32.gmra.mxu0 %v321
        %v807 = vpop.f32.mrf.mxu0
        %v808 = vadd.f32 %v785, %v807
        %809 = vdwg.mxu0
        %810 = vmatpush.msra.mxu0 %v514
        %811 = vmatpush.msra.mxu0 %v510
        %812 = vmatpush.msra.mxu0 %v506
        %813 = vmatpush.msra.mxu0 %v502
        %814 = vmatpush.msra.mxu0 %v498
        %815 = vmatpush.msra.mxu0 %v494
        %816 = vmatpush.msra.mxu0 %v490
        %817 = vmatpush.msra.mxu0 %v486
        %818 = vmatpush.msra.mxu0 %v482
        %819 = vmatpush.msra.mxu0 %v478
        %820 = vmatpush.msra.mxu0 %v474
        %821 = vmatpush.msra.mxu0 %v470
        %822 = vmatpush.msra.mxu0 %v466
        %823 = vmatpush.msra.mxu0 %v462
        %824 = vmatpush.msra.mxu0 %v458
        %825 = vmatpush.msra.mxu0 %v454
        %826 = vmatmul.f32.gmra.mxu0 %v318
        %v827 = vpop.f32.mrf.mxu0
        %v828 = vadd.f32 %v805, %v827
        %829 = vmatmul.f32.gmra.mxu0 %v322
        %v830 = vpop.f32.mrf.mxu0
        %v831 = vadd.f32 %v808, %v830
        %832 = vdwg.mxu0
        %833 = vmatpush.msra.mxu0 %v578
        %834 = vmatpush.msra.mxu0 %v574
        %835 = vmatpush.msra.mxu0 %v570
        %836 = vmatpush.msra.mxu0 %v566
        %837 = vmatpush.msra.mxu0 %v562
        %838 = vmatpush.msra.mxu0 %v558
        %839 = vmatpush.msra.mxu0 %v554
        %840 = vmatpush.msra.mxu0 %v550
        %841 = vmatpush.msra.mxu0 %v546
        %842 = vmatpush.msra.mxu0 %v542
        %843 = vmatpush.msra.mxu0 %v538
        %844 = vmatpush.msra.mxu0 %v534
        %845 = vmatpush.msra.mxu0 %v530
        %846 = vmatpush.msra.mxu0 %v526
        %847 = vmatpush.msra.mxu0 %v522
        %848 = vmatpush.msra.mxu0 %v518
        %849 = vmatmul.f32.gmra.mxu0 %v319
        %v850 = vpop.f32.mrf.mxu0
        %v851 = vadd.f32 %v828, %v850
        %852 = vmatmul.f32.gmra.mxu0 %v323
        %v853 = vpop.f32.mrf.mxu0
        %v854 = vadd.f32 %v831, %v853
        %855 = vdwg.mxu0
        %856 = vmatpush.msra.mxu0 %v387
        %857 = vmatpush.msra.mxu0 %v383
        %858 = vmatpush.msra.mxu0 %v379
        %859 = vmatpush.msra.mxu0 %v375
        %860 = vmatpush.msra.mxu0 %v371
        %861 = vmatpush.msra.mxu0 %v367
        %862 = vmatpush.msra.mxu0 %v363
        %863 = vmatpush.msra.mxu0 %v359
        %864 = vmatpush.msra.mxu0 %v355
        %865 = vmatpush.msra.mxu0 %v351
        %866 = vmatpush.msra.mxu0 %v347
        %867 = vmatpush.msra.mxu0 %v343
        %868 = vmatpush.msra.mxu0 %v339
        %869 = vmatpush.msra.mxu0 %v335
        %870 = vmatpush.msra.mxu0 %v331
        %871 = vmatpush.msra.mxu0 %v327
        %872 = vmatmul.f32.gmra.mxu0 %v316
        %v873 = vpop.f32.mrf.mxu0
        %v874 = vadd.f32 0.0, %v873
        %875 = vmatmul.f32.gmra.mxu0 %v320
        %v876 = vpop.f32.mrf.mxu0
        %v877 = vadd.f32 0.0, %v876
        %878 = vdwg.mxu0
        %879 = vmatpush.msra.mxu0 %v451
        %880 = vmatpush.msra.mxu0 %v447
        %881 = vmatpush.msra.mxu0 %v443
        %882 = vmatpush.msra.mxu0 %v439
        %883 = vmatpush.msra.mxu0 %v435
        %884 = vmatpush.msra.mxu0 %v431
        %885 = vmatpush.msra.mxu0 %v427
        %886 = vmatpush.msra.mxu0 %v423
        %887 = vmatpush.msra.mxu0 %v419
        %888 = vmatpush.msra.mxu0 %v415
        %889 = vmatpush.msra.mxu0 %v411
        %890 = vmatpush.msra.mxu0 %v407
        %891 = vmatpush.msra.mxu0 %v403
        %892 = vmatpush.msra.mxu0 %v399
        %893 = vmatpush.msra.mxu0 %v395
        %894 = vmatpush.msra.mxu0 %v391
        %895 = vmatmul.f32.gmra.mxu0 %v317
        %v896 = vpop.f32.mrf.mxu0
        %v897 = vadd.f32 %v874, %v896
        %898 = vmatmul.f32.gmra.mxu0 %v321
        %v899 = vpop.f32.mrf.mxu0
        %v900 = vadd.f32 %v877, %v899
        %901 = vdwg.mxu0
        %902 = vmatpush.msra.mxu0 %v515
        %903 = vmatpush.msra.mxu0 %v511
        %904 = vmatpush.msra.mxu0 %v507
        %905 = vmatpush.msra.mxu0 %v503
        %906 = vmatpush.msra.mxu0 %v499
        %907 = vmatpush.msra.mxu0 %v495
        %908 = vmatpush.msra.mxu0 %v491
        %909 = vmatpush.msra.mxu0 %v487
        %910 = vmatpush.msra.mxu0 %v483
        %911 = vmatpush.msra.mxu0 %v479
        %912 = vmatpush.msra.mxu0 %v475
        %913 = vmatpush.msra.mxu0 %v471
        %914 = vmatpush.msra.mxu0 %v467
        %915 = vmatpush.msra.mxu0 %v463
        %916 = vmatpush.msra.mxu0 %v459
        %917 = vmatpush.msra.mxu0 %v455
        %918 = vmatmul.f32.gmra.mxu0 %v318
        %v919 = vpop.f32.mrf.mxu0
        %v920 = vadd.f32 %v897, %v919
        %921 = vmatmul.f32.gmra.mxu0 %v322
        %v922 = vpop.f32.mrf.mxu0
        %v923 = vadd.f32 %v900, %v922
        %924 = vdwg.mxu0
        %925 = vmatpush.msra.mxu0 %v579
        %926 = vmatpush.msra.mxu0 %v575
        %927 = vmatpush.msra.mxu0 %v571
        %928 = vmatpush.msra.mxu0 %v567
        %929 = vmatpush.msra.mxu0 %v563
        %930 = vmatpush.msra.mxu0 %v559
        %931 = vmatpush.msra.mxu0 %v555
        %932 = vmatpush.msra.mxu0 %v551
        %933 = vmatpush.msra.mxu0 %v547
        %934 = vmatpush.msra.mxu0 %v543
        %935 = vmatpush.msra.mxu0 %v539
        %936 = vmatpush.msra.mxu0 %v535
        %937 = vmatpush.msra.mxu0 %v531
        %938 = vmatpush.msra.mxu0 %v527
        %939 = vmatpush.msra.mxu0 %v523
        %940 = vmatpush.msra.mxu0 %v519
        %941 = vmatmul.f32.gmra.mxu0 %v319
        %v942 = vpop.f32.mrf.mxu0
        %v943 = vadd.f32 %v920, %v942
        %944 = vmatmul.f32.gmra.mxu0 %v323
        %v945 = vpop.f32.mrf.mxu0
        %v946 = vadd.f32 %v923, %v945
        %947 = vdwg.mxu0
        %v948 = vadd.f32 %v308, %v667
        %v949 = vadd.f32 %v309, %v759
        %v950 = vadd.f32 %v310, %v851
        %v951 = vadd.f32 %v311, %v943
        %v952 = vadd.f32 %v312, %v670
        %v953 = vadd.f32 %v313, %v762
        %v954 = vadd.f32 %v314, %v854
        %v955 = vadd.f32 %v315, %v946
        %956 = vst [vmem:[%s278] sm:$0xff] %v948
        %957 = vst [vmem:[%s278 + $0x8] sm:$0xff] %v949
        %958 = vst [vmem:[%s278 + $0x10] sm:$0xff] %v950
        %959 = vst [vmem:[%s278 + $0x18] sm:$0xff] %v951
        %960 = vst [vmem:[%s278 + $0x20] sm:$0xff] %v952
        %961 = vst [vmem:[%s278 + $0x28] sm:$0xff] %v953
        %962 = vst [vmem:[%s278 + $0x30] sm:$0xff] %v954
        %963 = vst [vmem:[%s278 + $0x38] sm:$0xff] %v955
        %s964 = sand.u32 %s129, 1
        %s965 = sand.u32 %s129, 1
        %s966 = smul.addr %s965, 64
        %s967 = scalar_lea.vmem [#allocation7], %s966
        // Predicated region
        $region49: #{verify_llama_attention_forward.3} parent=31 // pred_check
          %p968 = pneg %p139
        $region50: #{verify_llama_attention_forward.3} parent=31 // pred_check_branch
          %970 = sbr.rel (%p968) target = $region52
        $region51: #{verify_llama_attention_forward.3} parent=31 // pred_region
          %s971 = smul.u32 2, %s23
          %s972 = smul.u32 4, %s24
          %s973 = smul.addr %s971, 8
          %s974 = sadd.s32 %s972, %s973
          %s975 = smul.addr %s974, 8
          %s976 = scalar_lea.vmem %s3, %s975
          // Predicated region
          $region53: #{verify_llama_attention_forward.3} parent=51 // pred_check
            _
          $region54: #{verify_llama_attention_forward.3} parent=51 // pred_check_branch
            %978 = sbr.rel (0) target = $region56
          $region55: #{verify_llama_attention_forward.3} parent=51 // pred_region
            // Predicated region
            $region57: #{verify_llama_attention_forward.3} parent=55 // pred_check
              _
            $region58: #{verify_llama_attention_forward.3} parent=55 // pred_check_branch
              %980 = sbr.rel (0) target = $region60
            $region59: #{verify_llama_attention_forward.3} parent=55 // pred_region
              loop: start=0, step=1, limit=1
              $region61: #{verify_llama_attention_forward.3} parent=59 // loop_pre_header
                _
              $region62: #{verify_llama_attention_forward.3} parent=59 // loop_header
                %s982 = sphi 0, %s986
                %p983 = scmp.ge.s32.totalorder %s982, 1
                %s987 = sphi %s967, %s967
                %s988 = sphi %s976, %s976
              $region63: #{verify_llama_attention_forward.3} parent=59 // loop_header_branch
                %985 = sbr.rel (%p983) target = $region67
              $region64: #{verify_llama_attention_forward.3} parent=59 // loop_body
                %v989 = vld [vmem:[%s987] sm:$0xff]
                %990 = vst [vmem:[%s988] sm:$0xff] %v989
                %v991 = vld [vmem:[%s987 + $0x8] sm:$0xff]
                %992 = vst [vmem:[%s988 + $0x8] sm:$0xff] %v991
                %v993 = vld [vmem:[%s987 + $0x10] sm:$0xff]
                %994 = vst [vmem:[%s988 + $0x10] sm:$0xff] %v993
                %v995 = vld [vmem:[%s987 + $0x18] sm:$0xff]
                %996 = vst [vmem:[%s988 + $0x18] sm:$0xff] %v995
                %v997 = vld [vmem:[%s987 + $0x20] sm:$0xff]
                %998 = vst [vmem:[%s988 + $0x40] sm:$0xff] %v997
                %v999 = vld [vmem:[%s987 + $0x28] sm:$0xff]
                %1000 = vst [vmem:[%s988 + $0x48] sm:$0xff] %v999
                %v1001 = vld [vmem:[%s987 + $0x30] sm:$0xff]
                %1002 = vst [vmem:[%s988 + $0x50] sm:$0xff] %v1001
                %v1003 = vld [vmem:[%s987 + $0x38] sm:$0xff]
                %1004 = vst [vmem:[%s988 + $0x58] sm:$0xff] %v1003
              $region65: #{verify_llama_attention_forward.3} parent=59 // loop_footer
                %s986 = sadd.s32 1, %s982
              $region66: #{verify_llama_attention_forward.3} parent=59 // loop_footer_branch
                %981 = sbr.rel target = $region62
              $region67: #{verify_llama_attention_forward.3} parent=59 // loop_exit
                _
            $region60: #{verify_llama_attention_forward.3} parent=55 // pred_fallthru
              _
            // Predicated region
            $region68: #{verify_llama_attention_forward.3} parent=55 // pred_check
              _
            $region69: #{verify_llama_attention_forward.3} parent=55 // pred_check_branch
              %1006 = sbr.rel target = $region71
            $region70: #{verify_llama_attention_forward.3} parent=55 // pred_region
              _
            $region71: #{verify_llama_attention_forward.3} parent=55 // pred_fallthru
              _
          $region56: #{verify_llama_attention_forward.3} parent=51 // pred_fallthru
            _
          %1007 = vnop
        $region52: #{verify_llama_attention_forward.3} parent=31 // pred_fallthru
          _
      $region32: #{verify_llama_attention_forward.3} parent=5 // pred_fallthru
        _
      %p1008 = scmp.le.s32.totalorder 2, %s13
      // Predicated region
      $region72: #{verify_llama_attention_forward.3} parent=5 // pred_check
        %p1009 = pneg %p1008
      $region73: #{verify_llama_attention_forward.3} parent=5 // pred_check_branch
        %1011 = sbr.rel (%p1009) target = $region75
      $region74: #{verify_llama_attention_forward.3} parent=5 // pred_region
        %s1012 = ssub.s32 %s13, 2
        // Predicated region
        $region76: #{verify_llama_attention_forward.3} parent=74 // pred_check
          %p1013 = pneg %p145
        $region77: #{verify_llama_attention_forward.3} parent=74 // pred_check_branch
          %1015 = sbr.rel (%p1013) target = $region79
        $region78: #{verify_llama_attention_forward.3} parent=74 // pred_region
          %s1016 = sand.u32 %s130, 1
          %s1017 = sand.u32 %s130, 1
          %s1018 = smul.addr %s1017, 64
          %s1019 = scalar_lea.vmem [#allocation7], %s1018
        $region79: #{verify_llama_attention_forward.3} parent=74 // pred_fallthru
          _
      $region75: #{verify_llama_attention_forward.3} parent=5 // pred_fallthru
        _
    $region6: #{verify_llama_attention_forward.3} parent=1 // loop_footer
      %s17 = sadd.s32 1, %s13
    $region7: #{verify_llama_attention_forward.3} parent=1 // loop_footer_branch
      %12 = sbr.rel target = $region3
    $region8: #{verify_llama_attention_forward.3} parent=1 // loop_exit
      _
    %1020 = vsyncpa [#allocation3], 1
    %s1021 = scalar_lea.sflag [#allocation3], 1
    %1022 = vsyncpa %s1021, 1
    %1023 = vsyncpa [#allocation5], 1
    %s1024 = scalar_lea.sflag [#allocation5], 1
    %1025 = vsyncpa %s1024, 1

// kernel: verify_llama_attention_forward.5
$region0: #{verify_llama_attention_forward.5}
  #allocation0 [shape = 'u32[]', space=smem, size = 0x4, offset = 0x4, fixed_abs, tag = 'smem constant byte address 0x4 - core index']
  #allocation1 [shape = 'u32[72,128]{1,0:T(1,128)}', space=vmem, size = 0x9000, scoped, tag = 'internal scratch']
  %s0 = inlined_call_operand.vmem [shape: f32[16,512], index: 0, kind: input, shape index: {}]
  %s1 = inlined_call_operand.hbm [shape: f32[512,512], index: 1, kind: input, shape index: {}]
  %s2 = inlined_call_operand.hbm [shape: f32[1,512], index: 2, kind: input, shape index: {}]
  %s3 = inlined_call_operand.hbm [shape: f32[16,512], index: 3, kind: output, shape index: {}]
  %s4 = sld [smem:[#allocation0]]
  $region34: #{verify_llama_attention_forward.5} parent=0
    _
  %s6 = ssub.s32 1, %s4
  %s7 = scalar_select 0, %s6, %s4
  $region1: #{verify_llama_attention_forward.5} parent=0
    #allocation2 [shape = 'u8[1048576]{0}', space=vmem, size = 0x100000, scoped, tag = 'input window, operand 1, single buffered']
    #allocation3 [shape = 's32[1]{0}', space=sflag, size = 0x4, scoped, tag = 'scoped memory for verify_llama_attention_forward.5']
    #allocation4 [shape = 's32[1]{0}', space=sflag, size = 0x4, scoped, tag = 'scoped memory for verify_llama_attention_forward.5']
    #allocation5 [shape = 'u8[2048]{0}', space=vmem, size = 0x800, scoped, tag = 'input window, operand 2, single buffered']
    #allocation6 [shape = 's32[1]{0}', space=sflag, size = 0x4, scoped, tag = 'scoped memory for verify_llama_attention_forward.5']
    #allocation7 [shape = 'u8[32768]{0}', space=vmem, size = 0x8000, scoped, tag = 'output window, operand 0, single buffered']
    %8 = vsyncpa [#allocation3], 0
    %9 = vsyncpa [#allocation6], 0
    %10 = vsyncpa [#allocation4], 0
    // Predicated region
    $region2: #{verify_llama_attention_forward.5} parent=1 // pred_check
      _
    $region3: #{verify_llama_attention_forward.5} parent=1 // pred_check_branch
      %12 = sbr.rel (0) target = $region5
    $region4: #{verify_llama_attention_forward.5} parent=1 // pred_region
      _
    $region5: #{verify_llama_attention_forward.5} parent=1 // pred_fallthru
      _
    // Predicated region
    $region6: #{verify_llama_attention_forward.5} parent=1 // pred_check
      _
    $region7: #{verify_llama_attention_forward.5} parent=1 // pred_check_branch
      %14 = sbr.rel (0) target = $region9
    $region8: #{verify_llama_attention_forward.5} parent=1 // pred_region
      %16 = vsyncadd [#allocation3], 0
      %s17 = sshll.u32 %s1, 4
      %s18 = int_to_ptr.hbm [resolvable:$true] %s17
      %s19 = sshll.u32 [#allocation2], 4
      %s20 = int_to_ptr.vmem [resolvable:$true] %s19
      %25 = dma.hbm_to_vmem [thread:$0]  %s18, 32768, %s20, [#allocation3], 512, 512, 32
    $region9: #{verify_llama_attention_forward.5} parent=1 // pred_fallthru
      _
    // Predicated region
    $region10: #{verify_llama_attention_forward.5} parent=1 // pred_check
      _
    $region11: #{verify_llama_attention_forward.5} parent=1 // pred_check_branch
      %27 = sbr.rel (0) target = $region13
    $region12: #{verify_llama_attention_forward.5} parent=1 // pred_region
      %29 = vsyncadd [#allocation6], 0
      %s31 = sshll.u32 %s2, 4
      %s32 = int_to_ptr.hbm [resolvable:$true] %s31
      %s33 = sshll.u32 [#allocation5], 4
      %s34 = int_to_ptr.vmem [resolvable:$true] %s33
      %36 = dma.hbm_to_vmem [thread:$0]  %s32, 64, %s34, [#allocation6]
    $region13: #{verify_llama_attention_forward.5} parent=1 // pred_fallthru
      _
    // Predicated region
    $region14: #{verify_llama_attention_forward.5} parent=1 // pred_check
      _
    $region15: #{verify_llama_attention_forward.5} parent=1 // pred_check_branch
      %38 = sbr.rel (0) target = $region17
    $region16: #{verify_llama_attention_forward.5} parent=1 // pred_region
      %40 = dma.done [#allocation3], 32768
    $region17: #{verify_llama_attention_forward.5} parent=1 // pred_fallthru
      _
    // Predicated region
    $region18: #{verify_llama_attention_forward.5} parent=1 // pred_check
      _
    $region19: #{verify_llama_attention_forward.5} parent=1 // pred_check_branch
      %42 = sbr.rel (0) target = $region21
    $region20: #{verify_llama_attention_forward.5} parent=1 // pred_region
      %44 = dma.done [#allocation6], 64
    $region21: #{verify_llama_attention_forward.5} parent=1 // pred_fallthru
      _
    %p45 = scmp.eq.s32.totalorder 0, 0
    // Predicated region
    $region22: #{verify_llama_attention_forward.5} parent=1 // pred_check
      %p46 = pneg %p45
    $region23: #{verify_llama_attention_forward.5} parent=1 // pred_check_branch
      %48 = sbr.rel (%p46) target = $region25
    $region24: #{verify_llama_attention_forward.5} parent=1 // pred_region
      %v49 = vld [vmem:[#allocation5] sm:$0xf]
      %v51 = vperm.slane %v49, 0
      %v52 = vperm.slane %v49, 1
      %v53 = vperm.slane %v49, 2
      %v54 = vperm.slane %v49, 3
      %59 = vst [vmem:[#allocation7] sm:$0xff] %v51
      %60 = vst [vmem:[#allocation7 + $0x8] sm:$0xff] %v52
      %61 = vst [vmem:[#allocation7 + $0x10] sm:$0xff] %v53
      %62 = vst [vmem:[#allocation7 + $0x18] sm:$0xff] %v54
      %63 = vst [vmem:[#allocation7 + $0x20] sm:$0xff] %v51
      %64 = vst [vmem:[#allocation7 + $0x28] sm:$0xff] %v52
      %65 = vst [vmem:[#allocation7 + $0x30] sm:$0xff] %v53
      %66 = vst [vmem:[#allocation7 + $0x38] sm:$0xff] %v54
    $region25: #{verify_llama_attention_forward.5} parent=1 // pred_fallthru
      _
    %v67 = vld [vmem:[#allocation7] sm:$0xff]
    %v68 = vld [vmem:[#allocation7 + $0x8] sm:$0xff]
    %v69 = vld [vmem:[#allocation7 + $0x10] sm:$0xff]
    %v70 = vld [vmem:[#allocation7 + $0x18] sm:$0xff]
    %v71 = vld [vmem:[#allocation7 + $0x20] sm:$0xff]
    %v72 = vld [vmem:[#allocation7 + $0x28] sm:$0xff]
    %v73 = vld [vmem:[#allocation7 + $0x30] sm:$0xff]
    %v74 = vld [vmem:[#allocation7 + $0x38] sm:$0xff]
    %v75 = vld [vmem:[%s0] sm:$0xff]
    %v76 = vld [vmem:[%s0 + $0x8] sm:$0xff]
    %v77 = vld [vmem:[%s0 + $0x10] sm:$0xff]
    %v78 = vld [vmem:[%s0 + $0x18] sm:$0xff]
    %v79 = vld [vmem:[%s0 + $0x20] sm:$0xff]
    %v80 = vld [vmem:[%s0 + $0x28] sm:$0xff]
    %v81 = vld [vmem:[%s0 + $0x30] sm:$0xff]
    %v82 = vld [vmem:[%s0 + $0x38] sm:$0xff]
    %v83 = vld [vmem:[#allocation2] sm:$0xff]
    %v84 = vld [vmem:[#allocation2 + $0x8] sm:$0xff]
    %v85 = vld [vmem:[#allocation2 + $0x10] sm:$0xff]
    %v86 = vld [vmem:[#allocation2 + $0x18] sm:$0xff]
    %v87 = vld [vmem:[#allocation2 + $0x20] sm:$0xff]
    %v88 = vld [vmem:[#allocation2 + $0x28] sm:$0xff]
    %v89 = vld [vmem:[#allocation2 + $0x30] sm:$0xff]
    %v90 = vld [vmem:[#allocation2 + $0x38] sm:$0xff]
    %v91 = vld [vmem:[#allocation2 + $0x40] sm:$0xff]
    %v92 = vld [vmem:[#allocation2 + $0x48] sm:$0xff]
    %v93 = vld [vmem:[#allocation2 + $0x50] sm:$0xff]
    %v94 = vld [vmem:[#allocation2 + $0x58] sm:$0xff]
    %v95 = vld [vmem:[#allocation2 + $0x60] sm:$0xff]
    %v96 = vld [vmem:[#allocation2 + $0x68] sm:$0xff]
    %v97 = vld [vmem:[#allocation2 + $0x70] sm:$0xff]
    %v98 = vld [vmem:[#allocation2 + $0x78] sm:$0xff]
    %v99 = vld [vmem:[#allocation2 + $0x80] sm:$0xff]
    %v100 = vld [vmem:[#allocation2 + $0x88] sm:$0xff]
    %v101 = vld [vmem:[#allocation2 + $0x90] sm:$0xff]
    %v102 = vld [vmem:[#allocation2 + $0x98] sm:$0xff]
    %v103 = vld [vmem:[#allocation2 + $0xa0] sm:$0xff]
    %v104 = vld [vmem:[#allocation2 + $0xa8] sm:$0xff]
    %v105 = vld [vmem:[#allocation2 + $0xb0] sm:$0xff]
    %v106 = vld [vmem:[#allocation2 + $0xb8] sm:$0xff]
    %v107 = vld [vmem:[#allocation2 + $0xc0] sm:$0xff]
    %v108 = vld [vmem:[#allocation2 + $0xc8] sm:$0xff]
    %v109 = vld [vmem:[#allocation2 + $0xd0] sm:$0xff]
    %v110 = vld [vmem:[#allocation2 + $0xd8] sm:$0xff]
    %v111 = vld [vmem:[#allocation2 + $0xe0] sm:$0xff]
    %v112 = vld [vmem:[#allocation2 + $0xe8] sm:$0xff]
    %v113 = vld [vmem:[#allocation2 + $0xf0] sm:$0xff]
    %v114 = vld [vmem:[#allocation2 + $0xf8] sm:$0xff]
    %v115 = vld [vmem:[#allocation2 + $0x100] sm:$0xff]
    %v116 = vld [vmem:[#allocation2 + $0x108] sm:$0xff]
    %v117 = vld [vmem:[#allocation2 + $0x110] sm:$0xff]
    %v118 = vld [vmem:[#allocation2 + $0x118] sm:$0xff]
    %v119 = vld [vmem:[#allocation2 + $0x120] sm:$0xff]
    %v120 = vld [vmem:[#allocation2 + $0x128] sm:$0xff]
    %v121 = vld [vmem:[#allocation2 + $0x130] sm:$0xff]
    %v122 = vld [vmem:[#allocation2 + $0x138] sm:$0xff]
    %v123 = vld [vmem:[#allocation2 + $0x140] sm:$0xff]
    %v124 = vld [vmem:[#allocation2 + $0x148] sm:$0xff]
    %v125 = vld [vmem:[#allocation2 + $0x150] sm:$0xff]
    %v126 = vld [vmem:[#allocation2 + $0x158] sm:$0xff]
    %v127 = vld [vmem:[#allocation2 + $0x160] sm:$0xff]
    %v128 = vld [vmem:[#allocation2 + $0x168] sm:$0xff]
    %v129 = vld [vmem:[#allocation2 + $0x170] sm:$0xff]
    %v130 = vld [vmem:[#allocation2 + $0x178] sm:$0xff]
    %v131 = vld [vmem:[#allocation2 + $0x180] sm:$0xff]
    %v132 = vld [vmem:[#allocation2 + $0x188] sm:$0xff]
    %v133 = vld [vmem:[#allocation2 + $0x190] sm:$0xff]
    %v134 = vld [vmem:[#allocation2 + $0x198] sm:$0xff]
    %v135 = vld [vmem:[#allocation2 + $0x1a0] sm:$0xff]
    %v136 = vld [vmem:[#allocation2 + $0x1a8] sm:$0xff]
    %v137 = vld [vmem:[#allocation2 + $0x1b0] sm:$0xff]
    %v138 = vld [vmem:[#allocation2 + $0x1b8] sm:$0xff]
    %v139 = vld [vmem:[#allocation2 + $0x1c0] sm:$0xff]
    %v140 = vld [vmem:[#allocation2 + $0x1c8] sm:$0xff]
    %v141 = vld [vmem:[#allocation2 + $0x1d0] sm:$0xff]
    %v142 = vld [vmem:[#allocation2 + $0x1d8] sm:$0xff]
    %v143 = vld [vmem:[#allocation2 + $0x1e0] sm:$0xff]
    %v144 = vld [vmem:[#allocation2 + $0x1e8] sm:$0xff]
    %v145 = vld [vmem:[#allocation2 + $0x1f0] sm:$0xff]
    %v146 = vld [vmem:[#allocation2 + $0x1f8] sm:$0xff]
    %v147 = vld [vmem:[#allocation2 + $0x200] sm:$0xff]
    %v148 = vld [vmem:[#allocation2 + $0x208] sm:$0xff]
    %v149 = vld [vmem:[#allocation2 + $0x210] sm:$0xff]
    %v150 = vld [vmem:[#allocation2 + $0x218] sm:$0xff]
    %v151 = vld [vmem:[#allocation2 + $0x220] sm:$0xff]
    %v152 = vld [vmem:[#allocation2 + $0x228] sm:$0xff]
    %v153 = vld [vmem:[#allocation2 + $0x230] sm:$0xff]
    %v154 = vld [vmem:[#allocation2 + $0x238] sm:$0xff]
    %v155 = vld [vmem:[#allocation2 + $0x240] sm:$0xff]
    %v156 = vld [vmem:[#allocation2 + $0x248] sm:$0xff]
    %v157 = vld [vmem:[#allocation2 + $0x250] sm:$0xff]
    %v158 = vld [vmem:[#allocation2 + $0x258] sm:$0xff]
    %v159 = vld [vmem:[#allocation2 + $0x260] sm:$0xff]
    %v160 = vld [vmem:[#allocation2 + $0x268] sm:$0xff]
    %v161 = vld [vmem:[#allocation2 + $0x270] sm:$0xff]
    %v162 = vld [vmem:[#allocation2 + $0x278] sm:$0xff]
    %v163 = vld [vmem:[#allocation2 + $0x280] sm:$0xff]
    %v164 = vld [vmem:[#allocation2 + $0x288] sm:$0xff]
    %v165 = vld [vmem:[#allocation2 + $0x290] sm:$0xff]
    %v166 = vld [vmem:[#allocation2 + $0x298] sm:$0xff]
    %v167 = vld [vmem:[#allocation2 + $0x2a0] sm:$0xff]
    %v168 = vld [vmem:[#allocation2 + $0x2a8] sm:$0xff]
    %v169 = vld [vmem:[#allocation2 + $0x2b0] sm:$0xff]
    %v170 = vld [vmem:[#allocation2 + $0x2b8] sm:$0xff]
    %v171 = vld [vmem:[#allocation2 + $0x2c0] sm:$0xff]
    %v172 = vld [vmem:[#allocation2 + $0x2c8] sm:$0xff]
    %v173 = vld [vmem:[#allocation2 + $0x2d0] sm:$0xff]
    %v174 = vld [vmem:[#allocation2 + $0x2d8] sm:$0xff]
    %v175 = vld [vmem:[#allocation2 + $0x2e0] sm:$0xff]
    %v176 = vld [vmem:[#allocation2 + $0x2e8] sm:$0xff]
    %v177 = vld [vmem:[#allocation2 + $0x2f0] sm:$0xff]
    %v178 = vld [vmem:[#allocation2 + $0x2f8] sm:$0xff]
    %v179 = vld [vmem:[#allocation2 + $0x300] sm:$0xff]
    %v180 = vld [vmem:[#allocation2 + $0x308] sm:$0xff]
    %v181 = vld [vmem:[#allocation2 + $0x310] sm:$0xff]
    %v182 = vld [vmem:[#allocation2 + $0x318] sm:$0xff]
    %v183 = vld [vmem:[#allocation2 + $0x320] sm:$0xff]
    %v184 = vld [vmem:[#allocation2 + $0x328] sm:$0xff]
    %v185 = vld [vmem:[#allocation2 + $0x330] sm:$0xff]
    %v186 = vld [vmem:[#allocation2 + $0x338] sm:$0xff]
    %v187 = vld [vmem:[#allocation2 + $0x340] sm:$0xff]
    %v188 = vld [vmem:[#allocation2 + $0x348] sm:$0xff]
    %v189 = vld [vmem:[#allocation2 + $0x350] sm:$0xff]
    %v190 = vld [vmem:[#allocation2 + $0x358] sm:$0xff]
    %v191 = vld [vmem:[#allocation2 + $0x360] sm:$0xff]
    %v192 = vld [vmem:[#allocation2 + $0x368] sm:$0xff]
    %v193 = vld [vmem:[#allocation2 + $0x370] sm:$0xff]
    %v194 = vld [vmem:[#allocation2 + $0x378] sm:$0xff]
    %v195 = vld [vmem:[#allocation2 + $0x380] sm:$0xff]
    %v196 = vld [vmem:[#allocation2 + $0x388] sm:$0xff]
    %v197 = vld [vmem:[#allocation2 + $0x390] sm:$0xff]
    %v198 = vld [vmem:[#allocation2 + $0x398] sm:$0xff]
    %v199 = vld [vmem:[#allocation2 + $0x3a0] sm:$0xff]
    %v200 = vld [vmem:[#allocation2 + $0x3a8] sm:$0xff]
    %v201 = vld [vmem:[#allocation2 + $0x3b0] sm:$0xff]
    %v202 = vld [vmem:[#allocation2 + $0x3b8] sm:$0xff]
    %v203 = vld [vmem:[#allocation2 + $0x3c0] sm:$0xff]
    %v204 = vld [vmem:[#allocation2 + $0x3c8] sm:$0xff]
    %v205 = vld [vmem:[#allocation2 + $0x3d0] sm:$0xff]
    %v206 = vld [vmem:[#allocation2 + $0x3d8] sm:$0xff]
    %v207 = vld [vmem:[#allocation2 + $0x3e0] sm:$0xff]
    %v208 = vld [vmem:[#allocation2 + $0x3e8] sm:$0xff]
    %v209 = vld [vmem:[#allocation2 + $0x3f0] sm:$0xff]
    %v210 = vld [vmem:[#allocation2 + $0x3f8] sm:$0xff]
    %v211 = vld [vmem:[#allocation2 + $0x400] sm:$0xff]
    %v212 = vld [vmem:[#allocation2 + $0x408] sm:$0xff]
    %v213 = vld [vmem:[#allocation2 + $0x410] sm:$0xff]
    %v214 = vld [vmem:[#allocation2 + $0x418] sm:$0xff]
    %v215 = vld [vmem:[#allocation2 + $0x420] sm:$0xff]
    %v216 = vld [vmem:[#allocation2 + $0x428] sm:$0xff]
    %v217 = vld [vmem:[#allocation2 + $0x430] sm:$0xff]
    %v218 = vld [vmem:[#allocation2 + $0x438] sm:$0xff]
    %v219 = vld [vmem:[#allocation2 + $0x440] sm:$0xff]
    %v220 = vld [vmem:[#allocation2 + $0x448] sm:$0xff]
    %v221 = vld [vmem:[#allocation2 + $0x450] sm:$0xff]
    %v222 = vld [vmem:[#allocation2 + $0x458] sm:$0xff]
    %v223 = vld [vmem:[#allocation2 + $0x460] sm:$0xff]
    %v224 = vld [vmem:[#allocation2 + $0x468] sm:$0xff]
    %v225 = vld [vmem:[#allocation2 + $0x470] sm:$0xff]
    %v226 = vld [vmem:[#allocation2 + $0x478] sm:$0xff]
    %v227 = vld [vmem:[#allocation2 + $0x480] sm:$0xff]
    %v228 = vld [vmem:[#allocation2 + $0x488] sm:$0xff]
    %v229 = vld [vmem:[#allocation2 + $0x490] sm:$0xff]
    %v230 = vld [vmem:[#allocation2 + $0x498] sm:$0xff]
    %v231 = vld [vmem:[#allocation2 + $0x4a0] sm:$0xff]
    %v232 = vld [vmem:[#allocation2 + $0x4a8] sm:$0xff]
    %v233 = vld [vmem:[#allocation2 + $0x4b0] sm:$0xff]
    %v234 = vld [vmem:[#allocation2 + $0x4b8] sm:$0xff]
    %v235 = vld [vmem:[#allocation2 + $0x4c0] sm:$0xff]
    %v236 = vld [vmem:[#allocation2 + $0x4c8] sm:$0xff]
    %v237 = vld [vmem:[#allocation2 + $0x4d0] sm:$0xff]
    %v238 = vld [vmem:[#allocation2 + $0x4d8] sm:$0xff]
    %v239 = vld [vmem:[#allocation2 + $0x4e0] sm:$0xff]
    %v240 = vld [vmem:[#allocation2 + $0x4e8] sm:$0xff]
    %v241 = vld [vmem:[#allocation2 + $0x4f0] sm:$0xff]
    %v242 = vld [vmem:[#allocation2 + $0x4f8] sm:$0xff]
    %v243 = vld [vmem:[#allocation2 + $0x500] sm:$0xff]
    %v244 = vld [vmem:[#allocation2 + $0x508] sm:$0xff]
    %v245 = vld [vmem:[#allocation2 + $0x510] sm:$0xff]
    %v246 = vld [vmem:[#allocation2 + $0x518] sm:$0xff]
    %v247 = vld [vmem:[#allocation2 + $0x520] sm:$0xff]
    %v248 = vld [vmem:[#allocation2 + $0x528] sm:$0xff]
    %v249 = vld [vmem:[#allocation2 + $0x530] sm:$0xff]
    %v250 = vld [vmem:[#allocation2 + $0x538] sm:$0xff]
    %v251 = vld [vmem:[#allocation2 + $0x540] sm:$0xff]
    %v252 = vld [vmem:[#allocation2 + $0x548] sm:$0xff]
    %v253 = vld [vmem:[#allocation2 + $0x550] sm:$0xff]
    %v254 = vld [vmem:[#allocation2 + $0x558] sm:$0xff]
    %v255 = vld [vmem:[#allocation2 + $0x560] sm:$0xff]
    %v256 = vld [vmem:[#allocation2 + $0x568] sm:$0xff]
    %v257 = vld [vmem:[#allocation2 + $0x570] sm:$0xff]
    %v258 = vld [vmem:[#allocation2 + $0x578] sm:$0xff]
    %v259 = vld [vmem:[#allocation2 + $0x580] sm:$0xff]
    %v260 = vld [vmem:[#allocation2 + $0x588] sm:$0xff]
    %v261 = vld [vmem:[#allocation2 + $0x590] sm:$0xff]
    %v262 = vld [vmem:[#allocation2 + $0x598] sm:$0xff]
    %v263 = vld [vmem:[#allocation2 + $0x5a0] sm:$0xff]
    %v264 = vld [vmem:[#allocation2 + $0x5a8] sm:$0xff]
    %v265 = vld [vmem:[#allocation2 + $0x5b0] sm:$0xff]
    %v266 = vld [vmem:[#allocation2 + $0x5b8] sm:$0xff]
    %v267 = vld [vmem:[#allocation2 + $0x5c0] sm:$0xff]
    %v268 = vld [vmem:[#allocation2 + $0x5c8] sm:$0xff]
    %v269 = vld [vmem:[#allocation2 + $0x5d0] sm:$0xff]
    %v270 = vld [vmem:[#allocation2 + $0x5d8] sm:$0xff]
    %v271 = vld [vmem:[#allocation2 + $0x5e0] sm:$0xff]
    %v272 = vld [vmem:[#allocation2 + $0x5e8] sm:$0xff]
    %v273 = vld [vmem:[#allocation2 + $0x5f0] sm:$0xff]
    %v274 = vld [vmem:[#allocation2 + $0x5f8] sm:$0xff]
    %v275 = vld [vmem:[#allocation2 + $0x600] sm:$0xff]
    %v276 = vld [vmem:[#allocation2 + $0x608] sm:$0xff]
    %v277 = vld [vmem:[#allocation2 + $0x610] sm:$0xff]
    %v278 = vld [vmem:[#allocation2 + $0x618] sm:$0xff]
    %v279 = vld [vmem:[#allocation2 + $0x620] sm:$0xff]
    %v280 = vld [vmem:[#allocation2 + $0x628] sm:$0xff]
    %v281 = vld [vmem:[#allocation2 + $0x630] sm:$0xff]
    %v282 = vld [vmem:[#allocation2 + $0x638] sm:$0xff]
    %v283 = vld [vmem:[#allocation2 + $0x640] sm:$0xff]
    %v284 = vld [vmem:[#allocation2 + $0x648] sm:$0xff]
    %v285 = vld [vmem:[#allocation2 + $0x650] sm:$0xff]
    %v286 = vld [vmem:[#allocation2 + $0x658] sm:$0xff]
    %v287 = vld [vmem:[#allocation2 + $0x660] sm:$0xff]
    %v288 = vld [vmem:[#allocation2 + $0x668] sm:$0xff]
    %v289 = vld [vmem:[#allocation2 + $0x670] sm:$0xff]
    %v290 = vld [vmem:[#allocation2 + $0x678] sm:$0xff]
    %v291 = vld [vmem:[#allocation2 + $0x680] sm:$0xff]
    %v292 = vld [vmem:[#allocation2 + $0x688] sm:$0xff]
    %v293 = vld [vmem:[#allocation2 + $0x690] sm:$0xff]
    %v294 = vld [vmem:[#allocation2 + $0x698] sm:$0xff]
    %v295 = vld [vmem:[#allocation2 + $0x6a0] sm:$0xff]
    %v296 = vld [vmem:[#allocation2 + $0x6a8] sm:$0xff]
    %v297 = vld [vmem:[#allocation2 + $0x6b0] sm:$0xff]
    %v298 = vld [vmem:[#allocation2 + $0x6b8] sm:$0xff]
    %v299 = vld [vmem:[#allocation2 + $0x6c0] sm:$0xff]
    %v300 = vld [vmem:[#allocation2 + $0x6c8] sm:$0xff]
    %v301 = vld [vmem:[#allocation2 + $0x6d0] sm:$0xff]
    %v302 = vld [vmem:[#allocation2 + $0x6d8] sm:$0xff]
    %v303 = vld [vmem:[#allocation2 + $0x6e0] sm:$0xff]
    %v304 = vld [vmem:[#allocation2 + $0x6e8] sm:$0xff]
    %v305 = vld [vmem:[#allocation2 + $0x6f0] sm:$0xff]
    %v306 = vld [vmem:[#allocation2 + $0x6f8] sm:$0xff]
    %v307 = vld [vmem:[#allocation2 + $0x700] sm:$0xff]
    %v308 = vld [vmem:[#allocation2 + $0x708] sm:$0xff]
    %v309 = vld [vmem:[#allocation2 + $0x710] sm:$0xff]
    %v310 = vld [vmem:[#allocation2 + $0x718] sm:$0xff]
    %v311 = vld [vmem:[#allocation2 + $0x720] sm:$0xff]
    %v312 = vld [vmem:[#allocation2 + $0x728] sm:$0xff]
    %v313 = vld [vmem:[#allocation2 + $0x730] sm:$0xff]
    %v314 = vld [vmem:[#allocation2 + $0x738] sm:$0xff]
    %v315 = vld [vmem:[#allocation2 + $0x740] sm:$0xff]
    %v316 = vld [vmem:[#allocation2 + $0x748] sm:$0xff]
    %v317 = vld [vmem:[#allocation2 + $0x750] sm:$0xff]
    %v318 = vld [vmem:[#allocation2 + $0x758] sm:$0xff]
    %v319 = vld [vmem:[#allocation2 + $0x760] sm:$0xff]
    %v320 = vld [vmem:[#allocation2 + $0x768] sm:$0xff]
    %v321 = vld [vmem:[#allocation2 + $0x770] sm:$0xff]
    %v322 = vld [vmem:[#allocation2 + $0x778] sm:$0xff]
    %v323 = vld [vmem:[#allocation2 + $0x780] sm:$0xff]
    %v324 = vld [vmem:[#allocation2 + $0x788] sm:$0xff]
    %v325 = vld [vmem:[#allocation2 + $0x790] sm:$0xff]
    %v326 = vld [vmem:[#allocation2 + $0x798] sm:$0xff]
    %v327 = vld [vmem:[#allocation2 + $0x7a0] sm:$0xff]
    %v328 = vld [vmem:[#allocation2 + $0x7a8] sm:$0xff]
    %v329 = vld [vmem:[#allocation2 + $0x7b0] sm:$0xff]
    %v330 = vld [vmem:[#allocation2 + $0x7b8] sm:$0xff]
    %v331 = vld [vmem:[#allocation2 + $0x7c0] sm:$0xff]
    %v332 = vld [vmem:[#allocation2 + $0x7c8] sm:$0xff]
    %v333 = vld [vmem:[#allocation2 + $0x7d0] sm:$0xff]
    %v334 = vld [vmem:[#allocation2 + $0x7d8] sm:$0xff]
    %v335 = vld [vmem:[#allocation2 + $0x7e0] sm:$0xff]
    %v336 = vld [vmem:[#allocation2 + $0x7e8] sm:$0xff]
    %v337 = vld [vmem:[#allocation2 + $0x7f0] sm:$0xff]
    %v338 = vld [vmem:[#allocation2 + $0x7f8] sm:$0xff]
    %339 = vmatpush.msra.mxu0 %v143
    %340 = vmatpush.msra.mxu0 %v139
    %341 = vmatpush.msra.mxu0 %v135
    %342 = vmatpush.msra.mxu0 %v131
    %343 = vmatpush.msra.mxu0 %v127
    %344 = vmatpush.msra.mxu0 %v123
    %345 = vmatpush.msra.mxu0 %v119
    %346 = vmatpush.msra.mxu0 %v115
    %347 = vmatpush.msra.mxu0 %v111
    %348 = vmatpush.msra.mxu0 %v107
    %349 = vmatpush.msra.mxu0 %v103
    %350 = vmatpush.msra.mxu0 %v99
    %351 = vmatpush.msra.mxu0 %v95
    %352 = vmatpush.msra.mxu0 %v91
    %353 = vmatpush.msra.mxu0 %v87
    %354 = vmatpush.msra.mxu0 %v83
    %355 = vmatmul.f32.gmra.mxu0 %v75
    %v356 = vpop.f32.mrf.mxu0
    %v357 = vadd.f32 0.0, %v356
    %358 = vmatmul.f32.gmra.mxu0 %v79
    %v359 = vpop.f32.mrf.mxu0
    %v360 = vadd.f32 0.0, %v359
    %361 = vdwg.mxu0
    %362 = vmatpush.msra.mxu0 %v207
    %363 = vmatpush.msra.mxu0 %v203
    %364 = vmatpush.msra.mxu0 %v199
    %365 = vmatpush.msra.mxu0 %v195
    %366 = vmatpush.msra.mxu0 %v191
    %367 = vmatpush.msra.mxu0 %v187
    %368 = vmatpush.msra.mxu0 %v183
    %369 = vmatpush.msra.mxu0 %v179
    %370 = vmatpush.msra.mxu0 %v175
    %371 = vmatpush.msra.mxu0 %v171
    %372 = vmatpush.msra.mxu0 %v167
    %373 = vmatpush.msra.mxu0 %v163
    %374 = vmatpush.msra.mxu0 %v159
    %375 = vmatpush.msra.mxu0 %v155
    %376 = vmatpush.msra.mxu0 %v151
    %377 = vmatpush.msra.mxu0 %v147
    %378 = vmatmul.f32.gmra.mxu0 %v76
    %v379 = vpop.f32.mrf.mxu0
    %v380 = vadd.f32 %v357, %v379
    %381 = vmatmul.f32.gmra.mxu0 %v80
    %v382 = vpop.f32.mrf.mxu0
    %v383 = vadd.f32 %v360, %v382
    %384 = vdwg.mxu0
    %385 = vmatpush.msra.mxu0 %v271
    %386 = vmatpush.msra.mxu0 %v267
    %387 = vmatpush.msra.mxu0 %v263
    %388 = vmatpush.msra.mxu0 %v259
    %389 = vmatpush.msra.mxu0 %v255
    %390 = vmatpush.msra.mxu0 %v251
    %391 = vmatpush.msra.mxu0 %v247
    %392 = vmatpush.msra.mxu0 %v243
    %393 = vmatpush.msra.mxu0 %v239
    %394 = vmatpush.msra.mxu0 %v235
    %395 = vmatpush.msra.mxu0 %v231
    %396 = vmatpush.msra.mxu0 %v227
    %397 = vmatpush.msra.mxu0 %v223
    %398 = vmatpush.msra.mxu0 %v219
    %399 = vmatpush.msra.mxu0 %v215
    %400 = vmatpush.msra.mxu0 %v211
    %401 = vmatmul.f32.gmra.mxu0 %v77
    %v402 = vpop.f32.mrf.mxu0
    %v403 = vadd.f32 %v380, %v402
    %404 = vmatmul.f32.gmra.mxu0 %v81
    %v405 = vpop.f32.mrf.mxu0
    %v406 = vadd.f32 %v383, %v405
    %407 = vdwg.mxu0
    %408 = vmatpush.msra.mxu0 %v335
    %409 = vmatpush.msra.mxu0 %v331
    %410 = vmatpush.msra.mxu0 %v327
    %411 = vmatpush.msra.mxu0 %v323
    %412 = vmatpush.msra.mxu0 %v319
    %413 = vmatpush.msra.mxu0 %v315
    %414 = vmatpush.msra.mxu0 %v311
    %415 = vmatpush.msra.mxu0 %v307
    %416 = vmatpush.msra.mxu0 %v303
    %417 = vmatpush.msra.mxu0 %v299
    %418 = vmatpush.msra.mxu0 %v295
    %419 = vmatpush.msra.mxu0 %v291
    %420 = vmatpush.msra.mxu0 %v287
    %421 = vmatpush.msra.mxu0 %v283
    %422 = vmatpush.msra.mxu0 %v279
    %423 = vmatpush.msra.mxu0 %v275
    %424 = vmatmul.f32.gmra.mxu0 %v78
    %v425 = vpop.f32.mrf.mxu0
    %v426 = vadd.f32 %v403, %v425
    %427 = vmatmul.f32.gmra.mxu0 %v82
    %v428 = vpop.f32.mrf.mxu0
    %v429 = vadd.f32 %v406, %v428
    %430 = vdwg.mxu0
    %431 = vmatpush.msra.mxu0 %v144
    %432 = vmatpush.msra.mxu0 %v140
    %433 = vmatpush.msra.mxu0 %v136
    %434 = vmatpush.msra.mxu0 %v132
    %435 = vmatpush.msra.mxu0 %v128
    %436 = vmatpush.msra.mxu0 %v124
    %437 = vmatpush.msra.mxu0 %v120
    %438 = vmatpush.msra.mxu0 %v116
    %439 = vmatpush.msra.mxu0 %v112
    %440 = vmatpush.msra.mxu0 %v108
    %441 = vmatpush.msra.mxu0 %v104
    %442 = vmatpush.msra.mxu0 %v100
    %443 = vmatpush.msra.mxu0 %v96
    %444 = vmatpush.msra.mxu0 %v92
    %445 = vmatpush.msra.mxu0 %v88
    %446 = vmatpush.msra.mxu0 %v84
    %447 = vmatmul.f32.gmra.mxu0 %v75
    %v448 = vpop.f32.mrf.mxu0
    %v449 = vadd.f32 0.0, %v448
    %450 = vmatmul.f32.gmra.mxu0 %v79
    %v451 = vpop.f32.mrf.mxu0
    %v452 = vadd.f32 0.0, %v451
    %453 = vdwg.mxu0
    %454 = vmatpush.msra.mxu0 %v208
    %455 = vmatpush.msra.mxu0 %v204
    %456 = vmatpush.msra.mxu0 %v200
    %457 = vmatpush.msra.mxu0 %v196
    %458 = vmatpush.msra.mxu0 %v192
    %459 = vmatpush.msra.mxu0 %v188
    %460 = vmatpush.msra.mxu0 %v184
    %461 = vmatpush.msra.mxu0 %v180
    %462 = vmatpush.msra.mxu0 %v176
    %463 = vmatpush.msra.mxu0 %v172
    %464 = vmatpush.msra.mxu0 %v168
    %465 = vmatpush.msra.mxu0 %v164
    %466 = vmatpush.msra.mxu0 %v160
    %467 = vmatpush.msra.mxu0 %v156
    %468 = vmatpush.msra.mxu0 %v152
    %469 = vmatpush.msra.mxu0 %v148
    %470 = vmatmul.f32.gmra.mxu0 %v76
    %v471 = vpop.f32.mrf.mxu0
    %v472 = vadd.f32 %v449, %v471
    %473 = vmatmul.f32.gmra.mxu0 %v80
    %v474 = vpop.f32.mrf.mxu0
    %v475 = vadd.f32 %v452, %v474
    %476 = vdwg.mxu0
    %477 = vmatpush.msra.mxu0 %v272
    %478 = vmatpush.msra.mxu0 %v268
    %479 = vmatpush.msra.mxu0 %v264
    %480 = vmatpush.msra.mxu0 %v260
    %481 = vmatpush.msra.mxu0 %v256
    %482 = vmatpush.msra.mxu0 %v252
    %483 = vmatpush.msra.mxu0 %v248
    %484 = vmatpush.msra.mxu0 %v244
    %485 = vmatpush.msra.mxu0 %v240
    %486 = vmatpush.msra.mxu0 %v236
    %487 = vmatpush.msra.mxu0 %v232
    %488 = vmatpush.msra.mxu0 %v228
    %489 = vmatpush.msra.mxu0 %v224
    %490 = vmatpush.msra.mxu0 %v220
    %491 = vmatpush.msra.mxu0 %v216
    %492 = vmatpush.msra.mxu0 %v212
    %493 = vmatmul.f32.gmra.mxu0 %v77
    %v494 = vpop.f32.mrf.mxu0
    %v495 = vadd.f32 %v472, %v494
    %496 = vmatmul.f32.gmra.mxu0 %v81
    %v497 = vpop.f32.mrf.mxu0
    %v498 = vadd.f32 %v475, %v497
    %499 = vdwg.mxu0
    %500 = vmatpush.msra.mxu0 %v336
    %501 = vmatpush.msra.mxu0 %v332
    %502 = vmatpush.msra.mxu0 %v328
    %503 = vmatpush.msra.mxu0 %v324
    %504 = vmatpush.msra.mxu0 %v320
    %505 = vmatpush.msra.mxu0 %v316
    %506 = vmatpush.msra.mxu0 %v312
    %507 = vmatpush.msra.mxu0 %v308
    %508 = vmatpush.msra.mxu0 %v304
    %509 = vmatpush.msra.mxu0 %v300
    %510 = vmatpush.msra.mxu0 %v296
    %511 = vmatpush.msra.mxu0 %v292
    %512 = vmatpush.msra.mxu0 %v288
    %513 = vmatpush.msra.mxu0 %v284
    %514 = vmatpush.msra.mxu0 %v280
    %515 = vmatpush.msra.mxu0 %v276
    %516 = vmatmul.f32.gmra.mxu0 %v78
    %v517 = vpop.f32.mrf.mxu0
    %v518 = vadd.f32 %v495, %v517
    %519 = vmatmul.f32.gmra.mxu0 %v82
    %v520 = vpop.f32.mrf.mxu0
    %v521 = vadd.f32 %v498, %v520
    %522 = vdwg.mxu0
    %523 = vmatpush.msra.mxu0 %v145
    %524 = vmatpush.msra.mxu0 %v141
    %525 = vmatpush.msra.mxu0 %v137
    %526 = vmatpush.msra.mxu0 %v133
    %527 = vmatpush.msra.mxu0 %v129
    %528 = vmatpush.msra.mxu0 %v125
    %529 = vmatpush.msra.mxu0 %v121
    %530 = vmatpush.msra.mxu0 %v117
    %531 = vmatpush.msra.mxu0 %v113
    %532 = vmatpush.msra.mxu0 %v109
    %533 = vmatpush.msra.mxu0 %v105
    %534 = vmatpush.msra.mxu0 %v101
    %535 = vmatpush.msra.mxu0 %v97
    %536 = vmatpush.msra.mxu0 %v93
    %537 = vmatpush.msra.mxu0 %v89
    %538 = vmatpush.msra.mxu0 %v85
    %539 = vmatmul.f32.gmra.mxu0 %v75
    %v540 = vpop.f32.mrf.mxu0
    %v541 = vadd.f32 0.0, %v540
    %542 = vmatmul.f32.gmra.mxu0 %v79
    %v543 = vpop.f32.mrf.mxu0
    %v544 = vadd.f32 0.0, %v543
    %545 = vdwg.mxu0
    %546 = vmatpush.msra.mxu0 %v209
    %547 = vmatpush.msra.mxu0 %v205
    %548 = vmatpush.msra.mxu0 %v201
    %549 = vmatpush.msra.mxu0 %v197
    %550 = vmatpush.msra.mxu0 %v193
    %551 = vmatpush.msra.mxu0 %v189
    %552 = vmatpush.msra.mxu0 %v185
    %553 = vmatpush.msra.mxu0 %v181
    %554 = vmatpush.msra.mxu0 %v177
    %555 = vmatpush.msra.mxu0 %v173
    %556 = vmatpush.msra.mxu0 %v169
    %557 = vmatpush.msra.mxu0 %v165
    %558 = vmatpush.msra.mxu0 %v161
    %559 = vmatpush.msra.mxu0 %v157
    %560 = vmatpush.msra.mxu0 %v153
    %561 = vmatpush.msra.mxu0 %v149
    %562 = vmatmul.f32.gmra.mxu0 %v76
    %v563 = vpop.f32.mrf.mxu0
    %v564 = vadd.f32 %v541, %v563
    %565 = vmatmul.f32.gmra.mxu0 %v80
    %v566 = vpop.f32.mrf.mxu0
    %v567 = vadd.f32 %v544, %v566
    %568 = vdwg.mxu0
    %569 = vmatpush.msra.mxu0 %v273
    %570 = vmatpush.msra.mxu0 %v269
    %571 = vmatpush.msra.mxu0 %v265
    %572 = vmatpush.msra.mxu0 %v261
    %573 = vmatpush.msra.mxu0 %v257
    %574 = vmatpush.msra.mxu0 %v253
    %575 = vmatpush.msra.mxu0 %v249
    %576 = vmatpush.msra.mxu0 %v245
    %577 = vmatpush.msra.mxu0 %v241
    %578 = vmatpush.msra.mxu0 %v237
    %579 = vmatpush.msra.mxu0 %v233
    %580 = vmatpush.msra.mxu0 %v229
    %581 = vmatpush.msra.mxu0 %v225
    %582 = vmatpush.msra.mxu0 %v221
    %583 = vmatpush.msra.mxu0 %v217
    %584 = vmatpush.msra.mxu0 %v213
    %585 = vmatmul.f32.gmra.mxu0 %v77
    %v586 = vpop.f32.mrf.mxu0
    %v587 = vadd.f32 %v564, %v586
    %588 = vmatmul.f32.gmra.mxu0 %v81
    %v589 = vpop.f32.mrf.mxu0
    %v590 = vadd.f32 %v567, %v589
    %591 = vdwg.mxu0
    %592 = vmatpush.msra.mxu0 %v337
    %593 = vmatpush.msra.mxu0 %v333
    %594 = vmatpush.msra.mxu0 %v329
    %595 = vmatpush.msra.mxu0 %v325
    %596 = vmatpush.msra.mxu0 %v321
    %597 = vmatpush.msra.mxu0 %v317
    %598 = vmatpush.msra.mxu0 %v313
    %599 = vmatpush.msra.mxu0 %v309
    %600 = vmatpush.msra.mxu0 %v305
    %601 = vmatpush.msra.mxu0 %v301
    %602 = vmatpush.msra.mxu0 %v297
    %603 = vmatpush.msra.mxu0 %v293
    %604 = vmatpush.msra.mxu0 %v289
    %605 = vmatpush.msra.mxu0 %v285
    %606 = vmatpush.msra.mxu0 %v281
    %607 = vmatpush.msra.mxu0 %v277
    %608 = vmatmul.f32.gmra.mxu0 %v78
    %v609 = vpop.f32.mrf.mxu0
    %v610 = vadd.f32 %v587, %v609
    %611 = vmatmul.f32.gmra.mxu0 %v82
    %v612 = vpop.f32.mrf.mxu0
    %v613 = vadd.f32 %v590, %v612
    %614 = vdwg.mxu0
    %615 = vmatpush.msra.mxu0 %v146
    %616 = vmatpush.msra.mxu0 %v142
    %617 = vmatpush.msra.mxu0 %v138
    %618 = vmatpush.msra.mxu0 %v134
    %619 = vmatpush.msra.mxu0 %v130
    %620 = vmatpush.msra.mxu0 %v126
    %621 = vmatpush.msra.mxu0 %v122
    %622 = vmatpush.msra.mxu0 %v118
    %623 = vmatpush.msra.mxu0 %v114
    %624 = vmatpush.msra.mxu0 %v110
    %625 = vmatpush.msra.mxu0 %v106
    %626 = vmatpush.msra.mxu0 %v102
    %627 = vmatpush.msra.mxu0 %v98
    %628 = vmatpush.msra.mxu0 %v94
    %629 = vmatpush.msra.mxu0 %v90
    %630 = vmatpush.msra.mxu0 %v86
    %631 = vmatmul.f32.gmra.mxu0 %v75
    %v632 = vpop.f32.mrf.mxu0
    %v633 = vadd.f32 0.0, %v632
    %634 = vmatmul.f32.gmra.mxu0 %v79
    %v635 = vpop.f32.mrf.mxu0
    %v636 = vadd.f32 0.0, %v635
    %637 = vdwg.mxu0
    %638 = vmatpush.msra.mxu0 %v210
    %639 = vmatpush.msra.mxu0 %v206
    %640 = vmatpush.msra.mxu0 %v202
    %641 = vmatpush.msra.mxu0 %v198
    %642 = vmatpush.msra.mxu0 %v194
    %643 = vmatpush.msra.mxu0 %v190
    %644 = vmatpush.msra.mxu0 %v186
    %645 = vmatpush.msra.mxu0 %v182
    %646 = vmatpush.msra.mxu0 %v178
    %647 = vmatpush.msra.mxu0 %v174
    %648 = vmatpush.msra.mxu0 %v170
    %649 = vmatpush.msra.mxu0 %v166
    %650 = vmatpush.msra.mxu0 %v162
    %651 = vmatpush.msra.mxu0 %v158
    %652 = vmatpush.msra.mxu0 %v154
    %653 = vmatpush.msra.mxu0 %v150
    %654 = vmatmul.f32.gmra.mxu0 %v76
    %v655 = vpop.f32.mrf.mxu0
    %v656 = vadd.f32 %v633, %v655
    %657 = vmatmul.f32.gmra.mxu0 %v80
    %v658 = vpop.f32.mrf.mxu0
    %v659 = vadd.f32 %v636, %v658
    %660 = vdwg.mxu0
    %661 = vmatpush.msra.mxu0 %v274
    %662 = vmatpush.msra.mxu0 %v270
    %663 = vmatpush.msra.mxu0 %v266
    %664 = vmatpush.msra.mxu0 %v262
    %665 = vmatpush.msra.mxu0 %v258
    %666 = vmatpush.msra.mxu0 %v254
    %667 = vmatpush.msra.mxu0 %v250
    %668 = vmatpush.msra.mxu0 %v246
    %669 = vmatpush.msra.mxu0 %v242
    %670 = vmatpush.msra.mxu0 %v238
    %671 = vmatpush.msra.mxu0 %v234
    %672 = vmatpush.msra.mxu0 %v230
    %673 = vmatpush.msra.mxu0 %v226
    %674 = vmatpush.msra.mxu0 %v222
    %675 = vmatpush.msra.mxu0 %v218
    %676 = vmatpush.msra.mxu0 %v214
    %677 = vmatmul.f32.gmra.mxu0 %v77
    %v678 = vpop.f32.mrf.mxu0
    %v679 = vadd.f32 %v656, %v678
    %680 = vmatmul.f32.gmra.mxu0 %v81
    %v681 = vpop.f32.mrf.mxu0
    %v682 = vadd.f32 %v659, %v681
    %683 = vdwg.mxu0
    %684 = vmatpush.msra.mxu0 %v338
    %685 = vmatpush.msra.mxu0 %v334
    %686 = vmatpush.msra.mxu0 %v330
    %687 = vmatpush.msra.mxu0 %v326
    %688 = vmatpush.msra.mxu0 %v322
    %689 = vmatpush.msra.mxu0 %v318
    %690 = vmatpush.msra.mxu0 %v314
    %691 = vmatpush.msra.mxu0 %v310
    %692 = vmatpush.msra.mxu0 %v306
    %693 = vmatpush.msra.mxu0 %v302
    %694 = vmatpush.msra.mxu0 %v298
    %695 = vmatpush.msra.mxu0 %v294
    %696 = vmatpush.msra.mxu0 %v290
    %697 = vmatpush.msra.mxu0 %v286
    %698 = vmatpush.msra.mxu0 %v282
    %699 = vmatpush.msra.mxu0 %v278
    %700 = vmatmul.f32.gmra.mxu0 %v78
    %v701 = vpop.f32.mrf.mxu0
    %v702 = vadd.f32 %v679, %v701
    %703 = vmatmul.f32.gmra.mxu0 %v82
    %v704 = vpop.f32.mrf.mxu0
    %v705 = vadd.f32 %v682, %v704
    %706 = vdwg.mxu0
    %v707 = vadd.f32 %v67, %v426
    %v708 = vadd.f32 %v68, %v518
    %v709 = vadd.f32 %v69, %v610
    %v710 = vadd.f32 %v70, %v702
    %v711 = vadd.f32 %v71, %v429
    %v712 = vadd.f32 %v72, %v521
    %v713 = vadd.f32 %v73, %v613
    %v714 = vadd.f32 %v74, %v705
    %715 = vst [vmem:[#allocation7] sm:$0xff] %v707
    %716 = vst [vmem:[#allocation7 + $0x8] sm:$0xff] %v708
    %717 = vst [vmem:[#allocation7 + $0x10] sm:$0xff] %v709
    %718 = vst [vmem:[#allocation7 + $0x18] sm:$0xff] %v710
    %719 = vst [vmem:[#allocation7 + $0x20] sm:$0xff] %v711
    %720 = vst [vmem:[#allocation7 + $0x28] sm:$0xff] %v712
    %721 = vst [vmem:[#allocation7 + $0x30] sm:$0xff] %v713
    %722 = vst [vmem:[#allocation7 + $0x38] sm:$0xff] %v714
    // Predicated region
    $region26: #{verify_llama_attention_forward.5} parent=1 // pred_check
      _
    $region27: #{verify_llama_attention_forward.5} parent=1 // pred_check_branch
      %724 = sbr.rel (0) target = $region29
    $region28: #{verify_llama_attention_forward.5} parent=1 // pred_region
      %726 = vsyncadd [#allocation4], 0
      %s727 = sshll.u32 [#allocation7], 4
      %s728 = int_to_ptr.vmem [resolvable:$true] %s727
      %s729 = sshll.u32 %s3, 4
      %s730 = int_to_ptr.hbm [resolvable:$true] %s729
      %735 = dma.vmem_to_hbm [thread:$0]  %s728, 1024, %s730, [#allocation4], 512, 512, 32
    $region29: #{verify_llama_attention_forward.5} parent=1 // pred_fallthru
      _
    // Predicated region
    $region30: #{verify_llama_attention_forward.5} parent=1 // pred_check
      _
    $region31: #{verify_llama_attention_forward.5} parent=1 // pred_check_branch
      %737 = sbr.rel (0) target = $region33
    $region32: #{verify_llama_attention_forward.5} parent=1 // pred_region
      %739 = dma.done [#allocation4], 1024
    $region33: #{verify_llama_attention_forward.5} parent=1 // pred_fallthru
      _
    %740 = vsyncpa [#allocation3], 1
    %741 = vsyncpa [#allocation6], 1
    %742 = vsyncpa [#allocation4], 1

</llo_original>
